<compile_context>
chip_gen: v6e
topology: v6e:2x2x1
jax: 0.10.0
libtpu: 0.0.40
codegen_flags: <defaults>
</compile_context>

<pallas_src>
import functools

import jax
import jax.numpy as jnp
from jax.experimental import pallas as pl
from jax.experimental.pallas import tpu as pltpu


def _spatial_attention_kernel(x_ref, w_ref, o_ref,
                              sum_ref, max_ref, pad_avg_ref, pad_max_ref,
                              *, c_total, c_tile, height, width, needs_mask):
    # x_ref block: (bt, ct, H*W) lane-dense; w_ref: (98,) f32 in SMEM;
    # o_ref block: (bt, 1, H, W).
    k = pl.program_id(1)

    @pl.when(k == 0)
    def _init():
        sum_ref[...] = jnp.zeros(sum_ref.shape, jnp.float32)
        max_ref[...] = jnp.full(max_ref.shape, -jnp.inf, jnp.float32)

    x = x_ref[...]                                             # (bt, ct, HW)
    if needs_mask:
        # cdiv channel tiling: mask out-of-range channels of the last tile
        # (Pallas OOB block contents are unspecified).
        ch = k * c_tile + jax.lax.broadcasted_iota(jnp.int32, (1, x.shape[1], 1), 1)
        valid = ch < c_total
        xs = jnp.where(valid, x, jnp.zeros((), x.dtype))
        xm = jnp.where(valid, x, jnp.array(-jnp.inf, x.dtype))
    else:
        xs = x
        xm = x
    sum_ref[...] += jnp.sum(xs, axis=1, dtype=jnp.float32)     # f32 accumulation
    max_ref[...] = jnp.maximum(max_ref[...],
                               jnp.max(xm, axis=1).astype(jnp.float32))

    @pl.when(k == pl.num_programs(1) - 1)
    def _epilogue():
        bt = sum_ref.shape[0]
        inv_c = 1.0 / c_total

        # Un-flatten the reduced maps row by row into zero-padded (padding=3)
        # scratch maps.  Row copies are tiny and epilogue-only.
        pad_avg_ref[...] = jnp.zeros(pad_avg_ref.shape, jnp.float32)
        pad_max_ref[...] = jnp.zeros(pad_max_ref.shape, jnp.float32)
        for i in range(height):
            row = pl.ds(i * width, width)
            pad_avg_ref[:, 3 + i, 3:3 + width] = sum_ref[:, row] * inv_c
            pad_max_ref[:, 3 + i, 3:3 + width] = max_ref[:, row]

        # 7x7, 2-in / 1-out conv: the lane-direction (kj) shift is hoisted out
        # of the ki loop -> 14 lane-offset slices; the per-ki taps are cheap
        # sublane slices of the already-shifted column.
        acc = jnp.zeros((bt, height, width), jnp.float32)
        for ci, pref in enumerate((pad_avg_ref, pad_max_ref)):
            for kj in range(7):
                col = pref[:, :, kj:kj + width]                # (bt, H+6, W)
                for ki in range(7):
                    wv = w_ref[ci * 49 + ki * 7 + kj]
                    acc = acc + wv * col[:, ki:ki + height, :]

        o_ref[:, 0, :, :] = jax.nn.sigmoid(acc).astype(o_ref.dtype)


def _build_spatial_attention_call(B, C, H, W, dtype, b_tile, c_tile, num_k,
                                  needs_mask, extra_buffering):
    HW = H * W
    kernel = functools.partial(
        _spatial_attention_kernel,
        c_total=C, c_tile=c_tile, height=H, width=W, needs_mask=needs_mask)

    x_spec_kwargs = {}
    if extra_buffering:
        # Third input buffer hides the epilogue behind the next tile's DMA.
        x_spec_kwargs["pipeline_mode"] = pl.Buffered(3)

    return pl.pallas_call(
        kernel,
        out_shape=jax.ShapeDtypeStruct((B, 1, H, W), dtype),
        grid_spec=pltpu.PrefetchScalarGridSpec(
            num_scalar_prefetch=0,
            grid=(B // b_tile, num_k),
            in_specs=[
                pl.BlockSpec((b_tile, c_tile, HW), lambda b, k: (b, k, 0),
                             **x_spec_kwargs),
                pl.BlockSpec(memory_space=pltpu.MemorySpace.SMEM),
            ],
            out_specs=pl.BlockSpec((b_tile, 1, H, W), lambda b, k: (b, 0, 0, 0)),
            scratch_shapes=[
                pltpu.VMEM((b_tile, HW), jnp.float32),            # running sum
                pltpu.VMEM((b_tile, HW), jnp.float32),            # running max
                pltpu.VMEM((b_tile, H + 6, W + 6), jnp.float32),  # padded avg map
                pltpu.VMEM((b_tile, H + 6, W + 6), jnp.float32),  # padded max map
            ],
        ),
        compiler_params=pltpu.CompilerParams(
            dimension_semantics=("parallel", "arbitrary"),
            vmem_limit_bytes=48 * 1024 * 1024,
        ),
    )


def spatial_attention(x, w):
    """x: (B, C, H, W) NCHW. w: (1, 2, 7, 7) Conv2d(2,1,7,padding=3,bias=False) weight.
    Returns sigmoid(conv7x7(cat[mean_c(x), max_c(x)])) of shape (B, 1, H, W)."""
    B, C, H, W = x.shape
    assert w.shape == (1, 2, 7, 7)
    HW = H * W

    w_flat = w.reshape(-1).astype(jnp.float32)         # 98 scalars -> SMEM
    # Free relayout: (B,C,H,W) and (B,C,H*W) are the same contiguous HBM bytes.
    x_flat = x.reshape(B, C, HW)

    itemsize = jnp.dtype(x.dtype).itemsize
    sub = max(8, 32 // max(itemsize, 1))               # sublane packing (8 f32, 16 bf16)
    hw_pad = pl.cdiv(HW, 128) * 128                    # lane-rounded (padded) row length
    row_bytes = hw_pad * itemsize
    target = 4 * 1024 * 1024                           # padded bytes per pipeline buffer

    # Channel tile via cdiv (+ in-kernel masking of the last tile); keep it a
    # multiple of the sublane packing when it does not cover all of C.
    max_ct = max(1, target // row_bytes)
    if C <= max_ct:
        c_tile = C
    else:
        c_tile = max(sub, (max_ct // sub) * sub)
    num_k = pl.cdiv(C, c_tile)
    needs_mask = (C % c_tile) != 0

    # Batch blocking only when the whole channel reduction fits in one grid
    # step; prefer an even number of batch steps (>=2) so megacore parts shard
    # the leading "parallel" axis evenly across the two TensorCores.
    b_tile = 1
    if num_k == 1 and B > 1:
        per_b = (pl.cdiv(C, sub) * sub) * row_bytes    # padded bytes, one batch row
        best_key = (-1, -1, 0)
        for d in range(1, B + 1):
            if B % d != 0 or d * per_b > target:
                continue
            ext = B // d
            key = (int(ext >= 2 and ext % 2 == 0), int(ext >= 2), d)
            if key > best_key:
                best_key = key
                b_tile = d

    args = (B, C, H, W, x.dtype, b_tile, c_tile, num_k, needs_mask)
    try:
        return _build_spatial_attention_call(*args, extra_buffering=True)(x_flat, w_flat)
    except Exception:
        # Fallback for Pallas builds without BlockSpec.pipeline_mode / pl.Buffered:
        # plain double-buffered pipeline (identical semantics).
        return _build_spatial_attention_call(*args, extra_buffering=False)(x_flat, w_flat)


def _reference(x, w):
    # Pure-JAX reference of the PyTorch forward.
    avg = jnp.mean(x, axis=1, keepdims=True)
    mx = jnp.max(x, axis=1, keepdims=True)
    xin = jnp.concatenate([avg, mx], axis=1)           # (B, 2, H, W)
    y = jax.lax.conv_general_dilated(
        xin, w, window_strides=(1, 1), padding=((3, 3), (3, 3)),
        dimension_numbers=("NCHW", "OIHW", "NCHW"))
    return jax.nn.sigmoid(y)


if __name__ == "__main__":
    key = jax.random.PRNGKey(0)
    kx, kw = jax.random.split(key)

    B, C, H, W = 2, 4, 16, 16
    x = jax.random.normal(kx, (B, C, H, W), dtype=jnp.float32)
    w = jax.random.normal(kw, (1, 2, 7, 7), dtype=jnp.float32) * 0.1

    out = jax.block_until_ready(spatial_attention(x, w))
    ref = _reference(x, w)

    assert out.shape == (B, 1, H, W)
    assert jnp.allclose(out, ref, atol=1e-5, rtol=1e-5), "mismatch vs reference"

    print("KERNEL_OK")
</pallas_src>

<mosaic_0001>
module attributes {stable_mosaic.version = 11 : i64} {
  func.func @_spatial_attention_kernel(%arg0: i32, %arg1: i32, %arg2: memref<1x4x256xf32, #tpu.memory_space<vmem>>, %arg3: memref<98xf32, #tpu.memory_space<smem>>, %arg4: memref<1x1x16x16xf32, #tpu.memory_space<vmem>>, %arg5: memref<1x256xf32, #tpu.memory_space<vmem>>, %arg6: memref<1x256xf32, #tpu.memory_space<vmem>>, %arg7: memref<1x22x22xf32, #tpu.memory_space<vmem>>, %arg8: memref<1x22x22xf32, #tpu.memory_space<vmem>>) attributes {dimension_semantics = [#tpu.dimension_semantics<parallel>, #tpu.dimension_semantics<arbitrary>], iteration_bounds = array<i64: 2, 1>, scalar_prefetch = 0 : i64, scratch_operands = 4 : i64, tpu.core_type = #tpu.core_type<tc>, window_params = [{transform_indices = @transform_0, window_bounds = array<i64: 1, 4, 256>}, {transform_indices = @transform_1, window_bounds = array<i64: 98>}, {transform_indices = @transform_2, window_bounds = array<i64: 1, 1, 16, 16>}]} {
    %c0_i32 = arith.constant 0 : i32
    %0 = arith.cmpi eq, %arg1, %c0_i32 : i32
    %1 = arith.extui %0 : i1 to i32
    %c0_i32_0 = arith.constant 0 : i32
    %2 = arith.cmpi ne, %1, %c0_i32_0 : i32
    scf.if %2 {
      %cst_14 = arith.constant 0.000000e+00 : f32
      %15 = vector.broadcast %cst_14 : f32 to vector<1x256xf32>
      %c0_15 = arith.constant 0 : index
      %c0_16 = arith.constant 0 : index
      %16 = vector.load %arg5[%c0_15, %c0_16] : memref<1x256xf32, #tpu.memory_space<vmem>>, vector<1x256xf32>
      tpu.vector_store %arg5[%c0_15, %c0_16], %15 {strides = array<i32>} : memref<1x256xf32, #tpu.memory_space<vmem>>, vector<1x256xf32>,
      %cst_17 = arith.constant 0xFF800000 : f32
      %17 = vector.broadcast %cst_17 : f32 to vector<1x256xf32>
      %c0_18 = arith.constant 0 : index
      %c0_19 = arith.constant 0 : index
      %18 = vector.load %arg6[%c0_18, %c0_19] : memref<1x256xf32, #tpu.memory_space<vmem>>, vector<1x256xf32>
      tpu.vector_store %arg6[%c0_18, %c0_19], %17 {strides = array<i32>} : memref<1x256xf32, #tpu.memory_space<vmem>>, vector<1x256xf32>,
    } else {
    }
    %c0 = arith.constant 0 : index
    %c0_1 = arith.constant 0 : index
    %c0_2 = arith.constant 0 : index
    %3 = vector.load %arg2[%c0, %c0_1, %c0_2] : memref<1x4x256xf32, #tpu.memory_space<vmem>>, vector<1x4x256xf32>
    %c0_3 = arith.constant 0 : index
    %c0_4 = arith.constant 0 : index
    %4 = vector.load %arg5[%c0_3, %c0_4] : memref<1x256xf32, #tpu.memory_space<vmem>>, vector<1x256xf32>
    %cst = arith.constant dense<0.000000e+00> : vector<1x256xf32>
    %5 = vector.multi_reduction <add>, %3, %cst [1] : vector<1x4x256xf32> to vector<1x256xf32>
    %6 = arith.addf %4, %5 : vector<1x256xf32>
    %c0_5 = arith.constant 0 : index
    %c0_6 = arith.constant 0 : index
    %7 = vector.load %arg5[%c0_5, %c0_6] : memref<1x256xf32, #tpu.memory_space<vmem>>, vector<1x256xf32>
    tpu.vector_store %arg5[%c0_5, %c0_6], %6 {strides = array<i32>} : memref<1x256xf32, #tpu.memory_space<vmem>>, vector<1x256xf32>,
    %c0_7 = arith.constant 0 : index
    %c0_8 = arith.constant 0 : index
    %8 = vector.load %arg6[%c0_7, %c0_8] : memref<1x256xf32, #tpu.memory_space<vmem>>, vector<1x256xf32>
    %cst_9 = arith.constant dense<0xFF800000> : vector<1x256xf32>
    %9 = vector.multi_reduction <maximumf>, %3, %cst_9 [1] : vector<1x4x256xf32> to vector<1x256xf32>
    %10 = arith.maximumf %8, %9 : vector<1x256xf32>
    %c0_10 = arith.constant 0 : index
    %c0_11 = arith.constant 0 : index
    %11 = vector.load %arg6[%c0_10, %c0_11] : memref<1x256xf32, #tpu.memory_space<vmem>>, vector<1x256xf32>
    tpu.vector_store %arg6[%c0_10, %c0_11], %10 {strides = array<i32>} : memref<1x256xf32, #tpu.memory_space<vmem>>, vector<1x256xf32>,
    %c0_i32_12 = arith.constant 0 : i32
    %12 = arith.cmpi eq, %arg1, %c0_i32_12 : i32
    %13 = arith.extui %12 : i1 to i32
    %c0_i32_13 = arith.constant 0 : i32
    %14 = arith.cmpi ne, %13, %c0_i32_13 : i32
    scf.if %14 {
      %cst_14 = arith.constant 0.000000e+00 : f32
      %15 = vector.broadcast %cst_14 : f32 to vector<1x22x22xf32>
      %c0_15 = arith.constant 0 : index
      %c0_16 = arith.constant 0 : index
      %c0_17 = arith.constant 0 : index
      %16 = vector.load %arg7[%c0_15, %c0_16, %c0_17] : memref<1x22x22xf32, #tpu.memory_space<vmem>>, vector<1x22x22xf32>
      tpu.vector_store %arg7[%c0_15, %c0_16, %c0_17], %15 {strides = array<i32>} : memref<1x22x22xf32, #tpu.memory_space<vmem>>, vector<1x22x22xf32>,
      %cst_18 = arith.constant 0.000000e+00 : f32
      %17 = vector.broadcast %cst_18 : f32 to vector<1x22x22xf32>
      %c0_19 = arith.constant 0 : index
      %c0_20 = arith.constant 0 : index
      %c0_21 = arith.constant 0 : index
      %18 = vector.load %arg8[%c0_19, %c0_20, %c0_21] : memref<1x22x22xf32, #tpu.memory_space<vmem>>, vector<1x22x22xf32>
      tpu.vector_store %arg8[%c0_19, %c0_20, %c0_21], %17 {strides = array<i32>} : memref<1x22x22xf32, #tpu.memory_space<vmem>>, vector<1x22x22xf32>,
      %c0_22 = arith.constant 0 : index
      %c0_23 = arith.constant 0 : index
      %19 = vector.load %arg5[%c0_22, %c0_23] : memref<1x256xf32, #tpu.memory_space<vmem>>, vector<1x16xf32>
      %cst_24 = arith.constant 2.500000e-01 : f32
      %20 = vector.broadcast %cst_24 : f32 to vector<1x16xf32>
      %21 = arith.mulf %19, %20 : vector<1x16xf32>
      %c0_25 = arith.constant 0 : index
      %c3 = arith.constant 3 : index
      %c3_26 = arith.constant 3 : index
      %22 = vector.load %arg7[%c0_25, %c3, %c3_26] : memref<1x22x22xf32, #tpu.memory_space<vmem>>, vector<1x1x16xf32>
      %23 = vector.shape_cast %22 : vector<1x1x16xf32> to vector<1x16xf32>
      %24 = vector.shape_cast %21 : vector<1x16xf32> to vector<1x1x16xf32>
      tpu.vector_store %arg7[%c0_25, %c3, %c3_26], %24 {strides = array<i32>} : memref<1x22x22xf32, #tpu.memory_space<vmem>>, vector<1x1x16xf32>,
      %c0_27 = arith.constant 0 : index
      %c0_28 = arith.constant 0 : index
      %25 = vector.load %arg6[%c0_27, %c0_28] : memref<1x256xf32, #tpu.memory_space<vmem>>, vector<1x16xf32>
      %c0_29 = arith.constant 0 : index
      %c3_30 = arith.constant 3 : index
      %c3_31 = arith.constant 3 : index
      %26 = vector.load %arg8[%c0_29, %c3_30, %c3_31] : memref<1x22x22xf32, #tpu.memory_space<vmem>>, vector<1x1x16xf32>
      %27 = vector.shape_cast %26 : vector<1x1x16xf32> to vector<1x16xf32>
      %28 = vector.shape_cast %25 : vector<1x16xf32> to vector<1x1x16xf32>
      tpu.vector_store %arg8[%c0_29, %c3_30, %c3_31], %28 {strides = array<i32>} : memref<1x22x22xf32, #tpu.memory_space<vmem>>, vector<1x1x16xf32>,
      %c0_32 = arith.constant 0 : index
      %c16 = arith.constant 16 : index
      %29 = vector.load %arg5[%c0_32, %c16] : memref<1x256xf32, #tpu.memory_space<vmem>>, vector<1x16xf32>
      %cst_33 = arith.constant 2.500000e-01 : f32
      %30 = vector.broadcast %cst_33 : f32 to vector<1x16xf32>
      %31 = arith.mulf %29, %30 : vector<1x16xf32>
      %c0_34 = arith.constant 0 : index
      %c4 = arith.constant 4 : index
      %c3_35 = arith.constant 3 : index
      %32 = vector.load %arg7[%c0_34, %c4, %c3_35] : memref<1x22x22xf32, #tpu.memory_space<vmem>>, vector<1x1x16xf32>
      %33 = vector.shape_cast %32 : vector<1x1x16xf32> to vector<1x16xf32>
      %34 = vector.shape_cast %31 : vector<1x16xf32> to vector<1x1x16xf32>
      tpu.vector_store %arg7[%c0_34, %c4, %c3_35], %34 {strides = array<i32>} : memref<1x22x22xf32, #tpu.memory_space<vmem>>, vector<1x1x16xf32>,
      %c0_36 = arith.constant 0 : index
      %c16_37 = arith.constant 16 : index
      %35 = vector.load %arg6[%c0_36, %c16_37] : memref<1x256xf32, #tpu.memory_space<vmem>>, vector<1x16xf32>
      %c0_38 = arith.constant 0 : index
      %c4_39 = arith.constant 4 : index
      %c3_40 = arith.constant 3 : index
      %36 = vector.load %arg8[%c0_38, %c4_39, %c3_40] : memref<1x22x22xf32, #tpu.memory_space<vmem>>, vector<1x1x16xf32>
      %37 = vector.shape_cast %36 : vector<1x1x16xf32> to vector<1x16xf32>
      %38 = vector.shape_cast %35 : vector<1x16xf32> to vector<1x1x16xf32>
      tpu.vector_store %arg8[%c0_38, %c4_39, %c3_40], %38 {strides = array<i32>} : memref<1x22x22xf32, #tpu.memory_space<vmem>>, vector<1x1x16xf32>,
      %c0_41 = arith.constant 0 : index
      %c32 = arith.constant 32 : index
      %39 = vector.load %arg5[%c0_41, %c32] : memref<1x256xf32, #tpu.memory_space<vmem>>, vector<1x16xf32>
      %cst_42 = arith.constant 2.500000e-01 : f32
      %40 = vector.broadcast %cst_42 : f32 to vector<1x16xf32>
      %41 = arith.mulf %39, %40 : vector<1x16xf32>
      %c0_43 = arith.constant 0 : index
      %c5 = arith.constant 5 : index
      %c3_44 = arith.constant 3 : index
      %42 = vector.load %arg7[%c0_43, %c5, %c3_44] : memref<1x22x22xf32, #tpu.memory_space<vmem>>, vector<1x1x16xf32>
      %43 = vector.shape_cast %42 : vector<1x1x16xf32> to vector<1x16xf32>
      %44 = vector.shape_cast %41 : vector<1x16xf32> to vector<1x1x16xf32>
      tpu.vector_store %arg7[%c0_43, %c5, %c3_44], %44 {strides = array<i32>} : memref<1x22x22xf32, #tpu.memory_space<vmem>>, vector<1x1x16xf32>,
      %c0_45 = arith.constant 0 : index
      %c32_46 = arith.constant 32 : index
      %45 = vector.load %arg6[%c0_45, %c32_46] : memref<1x256xf32, #tpu.memory_space<vmem>>, vector<1x16xf32>
      %c0_47 = arith.constant 0 : index
      %c5_48 = arith.constant 5 : index
      %c3_49 = arith.constant 3 : index
      %46 = vector.load %arg8[%c0_47, %c5_48, %c3_49] : memref<1x22x22xf32, #tpu.memory_space<vmem>>, vector<1x1x16xf32>
      %47 = vector.shape_cast %46 : vector<1x1x16xf32> to vector<1x16xf32>
      %48 = vector.shape_cast %45 : vector<1x16xf32> to vector<1x1x16xf32>
      tpu.vector_store %arg8[%c0_47, %c5_48, %c3_49], %48 {strides = array<i32>} : memref<1x22x22xf32, #tpu.memory_space<vmem>>, vector<1x1x16xf32>,
      %c0_50 = arith.constant 0 : index
      %c48 = arith.constant 48 : index
      %49 = vector.load %arg5[%c0_50, %c48] : memref<1x256xf32, #tpu.memory_space<vmem>>, vector<1x16xf32>
      %cst_51 = arith.constant 2.500000e-01 : f32
      %50 = vector.broadcast %cst_51 : f32 to vector<1x16xf32>
      %51 = arith.mulf %49, %50 : vector<1x16xf32>
      %c0_52 = arith.constant 0 : index
      %c6 = arith.constant 6 : index
      %c3_53 = arith.constant 3 : index
      %52 = vector.load %arg7[%c0_52, %c6, %c3_53] : memref<1x22x22xf32, #tpu.memory_space<vmem>>, vector<1x1x16xf32>
      %53 = vector.shape_cast %52 : vector<1x1x16xf32> to vector<1x16xf32>
      %54 = vector.shape_cast %51 : vector<1x16xf32> to vector<1x1x16xf32>
      tpu.vector_store %arg7[%c0_52, %c6, %c3_53], %54 {strides = array<i32>} : memref<1x22x22xf32, #tpu.memory_space<vmem>>, vector<1x1x16xf32>,
      %c0_54 = arith.constant 0 : index
      %c48_55 = arith.constant 48 : index
      %55 = vector.load %arg6[%c0_54, %c48_55] : memref<1x256xf32, #tpu.memory_space<vmem>>, vector<1x16xf32>
      %c0_56 = arith.constant 0 : index
      %c6_57 = arith.constant 6 : index
      %c3_58 = arith.constant 3 : index
      %56 = vector.load %arg8[%c0_56, %c6_57, %c3_58] : memref<1x22x22xf32, #tpu.memory_space<vmem>>, vector<1x1x16xf32>
      %57 = vector.shape_cast %56 : vector<1x1x16xf32> to vector<1x16xf32>
      %58 = vector.shape_cast %55 : vector<1x16xf32> to vector<1x1x16xf32>
      tpu.vector_store %arg8[%c0_56, %c6_57, %c3_58], %58 {strides = array<i32>} : memref<1x22x22xf32, #tpu.memory_space<vmem>>, vector<1x1x16xf32>,
      %c0_59 = arith.constant 0 : index
      %c64 = arith.constant 64 : index
      %59 = vector.load %arg5[%c0_59, %c64] : memref<1x256xf32, #tpu.memory_space<vmem>>, vector<1x16xf32>
      %cst_60 = arith.constant 2.500000e-01 : f32
      %60 = vector.broadcast %cst_60 : f32 to vector<1x16xf32>
      %61 = arith.mulf %59, %60 : vector<1x16xf32>
      %c0_61 = arith.constant 0 : index
      %c7 = arith.constant 7 : index
      %c3_62 = arith.constant 3 : index
      %62 = vector.load %arg7[%c0_61, %c7, %c3_62] : memref<1x22x22xf32, #tpu.memory_space<vmem>>, vector<1x1x16xf32>
      %63 = vector.shape_cast %62 : vector<1x1x16xf32> to vector<1x16xf32>
      %64 = vector.shape_cast %61 : vector<1x16xf32> to vector<1x1x16xf32>
      tpu.vector_store %arg7[%c0_61, %c7, %c3_62], %64 {strides = array<i32>} : memref<1x22x22xf32, #tpu.memory_space<vmem>>, vector<1x1x16xf32>,
      %c0_63 = arith.constant 0 : index
      %c64_64 = arith.constant 64 : index
      %65 = vector.load %arg6[%c0_63, %c64_64] : memref<1x256xf32, #tpu.memory_space<vmem>>, vector<1x16xf32>
      %c0_65 = arith.constant 0 : index
      %c7_66 = arith.constant 7 : index
      %c3_67 = arith.constant 3 : index
      %66 = vector.load %arg8[%c0_65, %c7_66, %c3_67] : memref<1x22x22xf32, #tpu.memory_space<vmem>>, vector<1x1x16xf32>
      %67 = vector.shape_cast %66 : vector<1x1x16xf32> to vector<1x16xf32>
      %68 = vector.shape_cast %65 : vector<1x16xf32> to vector<1x1x16xf32>
      tpu.vector_store %arg8[%c0_65, %c7_66, %c3_67], %68 {strides = array<i32>} : memref<1x22x22xf32, #tpu.memory_space<vmem>>, vector<1x1x16xf32>,
      %c0_68 = arith.constant 0 : index
      %c80 = arith.constant 80 : index
      %69 = vector.load %arg5[%c0_68, %c80] : memref<1x256xf32, #tpu.memory_space<vmem>>, vector<1x16xf32>
      %cst_69 = arith.constant 2.500000e-01 : f32
      %70 = vector.broadcast %cst_69 : f32 to vector<1x16xf32>
      %71 = arith.mulf %69, %70 : vector<1x16xf32>
      %c0_70 = arith.constant 0 : index
      %c8 = arith.constant 8 : index
      %c3_71 = arith.constant 3 : index
      %72 = vector.load %arg7[%c0_70, %c8, %c3_71] : memref<1x22x22xf32, #tpu.memory_space<vmem>>, vector<1x1x16xf32>
      %73 = vector.shape_cast %72 : vector<1x1x16xf32> to vector<1x16xf32>
      %74 = vector.shape_cast %71 : vector<1x16xf32> to vector<1x1x16xf32>
      tpu.vector_store %arg7[%c0_70, %c8, %c3_71], %74 {strides = array<i32>} : memref<1x22x22xf32, #tpu.memory_space<vmem>>, vector<1x1x16xf32>,
      %c0_72 = arith.constant 0 : index
      %c80_73 = arith.constant 80 : index
      %75 = vector.load %arg6[%c0_72, %c80_73] : memref<1x256xf32, #tpu.memory_space<vmem>>, vector<1x16xf32>
      %c0_74 = arith.constant 0 : index
      %c8_75 = arith.constant 8 : index
      %c3_76 = arith.constant 3 : index
      %76 = vector.load %arg8[%c0_74, %c8_75, %c3_76] : memref<1x22x22xf32, #tpu.memory_space<vmem>>, vector<1x1x16xf32>
      %77 = vector.shape_cast %76 : vector<1x1x16xf32> to vector<1x16xf32>
      %78 = vector.shape_cast %75 : vector<1x16xf32> to vector<1x1x16xf32>
      tpu.vector_store %arg8[%c0_74, %c8_75, %c3_76], %78 {strides = array<i32>} : memref<1x22x22xf32, #tpu.memory_space<vmem>>, vector<1x1x16xf32>,
      %c0_77 = arith.constant 0 : index
      %c96 = arith.constant 96 : index
      %79 = vector.load %arg5[%c0_77, %c96] : memref<1x256xf32, #tpu.memory_space<vmem>>, vector<1x16xf32>
      %cst_78 = arith.constant 2.500000e-01 : f32
      %80 = vector.broadcast %cst_78 : f32 to vector<1x16xf32>
      %81 = arith.mulf %79, %80 : vector<1x16xf32>
      %c0_79 = arith.constant 0 : index
      %c9 = arith.constant 9 : index
      %c3_80 = arith.constant 3 : index
      %82 = vector.load %arg7[%c0_79, %c9, %c3_80] : memref<1x22x22xf32, #tpu.memory_space<vmem>>, vector<1x1x16xf32>
      %83 = vector.shape_cast %82 : vector<1x1x16xf32> to vector<1x16xf32>
      %84 = vector.shape_cast %81 : vector<1x16xf32> to vector<1x1x16xf32>
      tpu.vector_store %arg7[%c0_79, %c9, %c3_80], %84 {strides = array<i32>} : memref<1x22x22xf32, #tpu.memory_space<vmem>>, vector<1x1x16xf32>,
      %c0_81 = arith.constant 0 : index
      %c96_82 = arith.constant 96 : index
      %85 = vector.load %arg6[%c0_81, %c96_82] : memref<1x256xf32, #tpu.memory_space<vmem>>, vector<1x16xf32>
      %c0_83 = arith.constant 0 : index
      %c9_84 = arith.constant 9 : index
      %c3_85 = arith.constant 3 : index
      %86 = vector.load %arg8[%c0_83, %c9_84, %c3_85] : memref<1x22x22xf32, #tpu.memory_space<vmem>>, vector<1x1x16xf32>
      %87 = vector.shape_cast %86 : vector<1x1x16xf32> to vector<1x16xf32>
      %88 = vector.shape_cast %85 : vector<1x16xf32> to vector<1x1x16xf32>
      tpu.vector_store %arg8[%c0_83, %c9_84, %c3_85], %88 {strides = array<i32>} : memref<1x22x22xf32, #tpu.memory_space<vmem>>, vector<1x1x16xf32>,
      %c0_86 = arith.constant 0 : index
      %c112 = arith.constant 112 : index
      %89 = vector.load %arg5[%c0_86, %c112] : memref<1x256xf32, #tpu.memory_space<vmem>>, vector<1x16xf32>
      %cst_87 = arith.constant 2.500000e-01 : f32
      %90 = vector.broadcast %cst_87 : f32 to vector<1x16xf32>
      %91 = arith.mulf %89, %90 : vector<1x16xf32>
      %c0_88 = arith.constant 0 : index
      %c10 = arith.constant 10 : index
      %c3_89 = arith.constant 3 : index
      %92 = vector.load %arg7[%c0_88, %c10, %c3_89] : memref<1x22x22xf32, #tpu.memory_space<vmem>>, vector<1x1x16xf32>
      %93 = vector.shape_cast %92 : vector<1x1x16xf32> to vector<1x16xf32>
      %94 = vector.shape_cast %91 : vector<1x16xf32> to vector<1x1x16xf32>
      tpu.vector_store %arg7[%c0_88, %c10, %c3_89], %94 {strides = array<i32>} : memref<1x22x22xf32, #tpu.memory_space<vmem>>, vector<1x1x16xf32>,
      %c0_90 = arith.constant 0 : index
      %c112_91 = arith.constant 112 : index
      %95 = vector.load %arg6[%c0_90, %c112_91] : memref<1x256xf32, #tpu.memory_space<vmem>>, vector<1x16xf32>
      %c0_92 = arith.constant 0 : index
      %c10_93 = arith.constant 10 : index
      %c3_94 = arith.constant 3 : index
      %96 = vector.load %arg8[%c0_92, %c10_93, %c3_94] : memref<1x22x22xf32, #tpu.memory_space<vmem>>, vector<1x1x16xf32>
      %97 = vector.shape_cast %96 : vector<1x1x16xf32> to vector<1x16xf32>
      %98 = vector.shape_cast %95 : vector<1x16xf32> to vector<1x1x16xf32>
      tpu.vector_store %arg8[%c0_92, %c10_93, %c3_94], %98 {strides = array<i32>} : memref<1x22x22xf32, #tpu.memory_space<vmem>>, vector<1x1x16xf32>,
      %c0_95 = arith.constant 0 : index
      %c128 = arith.constant 128 : index
      %99 = vector.load %arg5[%c0_95, %c128] : memref<1x256xf32, #tpu.memory_space<vmem>>, vector<1x16xf32>
      %cst_96 = arith.constant 2.500000e-01 : f32
      %100 = vector.broadcast %cst_96 : f32 to vector<1x16xf32>
      %101 = arith.mulf %99, %100 : vector<1x16xf32>
      %c0_97 = arith.constant 0 : index
      %c11 = arith.constant 11 : index
      %c3_98 = arith.constant 3 : index
      %102 = vector.load %arg7[%c0_97, %c11, %c3_98] : memref<1x22x22xf32, #tpu.memory_space<vmem>>, vector<1x1x16xf32>
      %103 = vector.shape_cast %102 : vector<1x1x16xf32> to vector<1x16xf32>
      %104 = vector.shape_cast %101 : vector<1x16xf32> to vector<1x1x16xf32>
      tpu.vector_store %arg7[%c0_97, %c11, %c3_98], %104 {strides = array<i32>} : memref<1x22x22xf32, #tpu.memory_space<vmem>>, vector<1x1x16xf32>,
      %c0_99 = arith.constant 0 : index
      %c128_100 = arith.constant 128 : index
      %105 = vector.load %arg6[%c0_99, %c128_100] : memref<1x256xf32, #tpu.memory_space<vmem>>, vector<1x16xf32>
      %c0_101 = arith.constant 0 : index
      %c11_102 = arith.constant 11 : index
      %c3_103 = arith.constant 3 : index
      %106 = vector.load %arg8[%c0_101, %c11_102, %c3_103] : memref<1x22x22xf32, #tpu.memory_space<vmem>>, vector<1x1x16xf32>
      %107 = vector.shape_cast %106 : vector<1x1x16xf32> to vector<1x16xf32>
      %108 = vector.shape_cast %105 : vector<1x16xf32> to vector<1x1x16xf32>
      tpu.vector_store %arg8[%c0_101, %c11_102, %c3_103], %108 {strides = array<i32>} : memref<1x22x22xf32, #tpu.memory_space<vmem>>, vector<1x1x16xf32>,
      %c0_104 = arith.constant 0 : index
      %c144 = arith.constant 144 : index
      %109 = vector.load %arg5[%c0_104, %c144] : memref<1x256xf32, #tpu.memory_space<vmem>>, vector<1x16xf32>
      %cst_105 = arith.constant 2.500000e-01 : f32
      %110 = vector.broadcast %cst_105 : f32 to vector<1x16xf32>
      %111 = arith.mulf %109, %110 : vector<1x16xf32>
      %c0_106 = arith.constant 0 : index
      %c12 = arith.constant 12 : index
      %c3_107 = arith.constant 3 : index
      %112 = vector.load %arg7[%c0_106, %c12, %c3_107] : memref<1x22x22xf32, #tpu.memory_space<vmem>>, vector<1x1x16xf32>
      %113 = vector.shape_cast %112 : vector<1x1x16xf32> to vector<1x16xf32>
      %114 = vector.shape_cast %111 : vector<1x16xf32> to vector<1x1x16xf32>
      tpu.vector_store %arg7[%c0_106, %c12, %c3_107], %114 {strides = array<i32>} : memref<1x22x22xf32, #tpu.memory_space<vmem>>, vector<1x1x16xf32>,
      %c0_108 = arith.constant 0 : index
      %c144_109 = arith.constant 144 : index
      %115 = vector.load %arg6[%c0_108, %c144_109] : memref<1x256xf32, #tpu.memory_space<vmem>>, vector<1x16xf32>
      %c0_110 = arith.constant 0 : index
      %c12_111 = arith.constant 12 : index
      %c3_112 = arith.constant 3 : index
      %116 = vector.load %arg8[%c0_110, %c12_111, %c3_112] : memref<1x22x22xf32, #tpu.memory_space<vmem>>, vector<1x1x16xf32>
      %117 = vector.shape_cast %116 : vector<1x1x16xf32> to vector<1x16xf32>
      %118 = vector.shape_cast %115 : vector<1x16xf32> to vector<1x1x16xf32>
      tpu.vector_store %arg8[%c0_110, %c12_111, %c3_112], %118 {strides = array<i32>} : memref<1x22x22xf32, #tpu.memory_space<vmem>>, vector<1x1x16xf32>,
      %c0_113 = arith.constant 0 : index
      %c160 = arith.constant 160 : index
      %119 = vector.load %arg5[%c0_113, %c160] : memref<1x256xf32, #tpu.memory_space<vmem>>, vector<1x16xf32>
      %cst_114 = arith.constant 2.500000e-01 : f32
      %120 = vector.broadcast %cst_114 : f32 to vector<1x16xf32>
      %121 = arith.mulf %119, %120 : vector<1x16xf32>
      %c0_115 = arith.constant 0 : index
      %c13 = arith.constant 13 : index
      %c3_116 = arith.constant 3 : index
      %122 = vector.load %arg7[%c0_115, %c13, %c3_116] : memref<1x22x22xf32, #tpu.memory_space<vmem>>, vector<1x1x16xf32>
      %123 = vector.shape_cast %122 : vector<1x1x16xf32> to vector<1x16xf32>
      %124 = vector.shape_cast %121 : vector<1x16xf32> to vector<1x1x16xf32>
      tpu.vector_store %arg7[%c0_115, %c13, %c3_116], %124 {strides = array<i32>} : memref<1x22x22xf32, #tpu.memory_space<vmem>>, vector<1x1x16xf32>,
      %c0_117 = arith.constant 0 : index
      %c160_118 = arith.constant 160 : index
      %125 = vector.load %arg6[%c0_117, %c160_118] : memref<1x256xf32, #tpu.memory_space<vmem>>, vector<1x16xf32>
      %c0_119 = arith.constant 0 : index
      %c13_120 = arith.constant 13 : index
      %c3_121 = arith.constant 3 : index
      %126 = vector.load %arg8[%c0_119, %c13_120, %c3_121] : memref<1x22x22xf32, #tpu.memory_space<vmem>>, vector<1x1x16xf32>
      %127 = vector.shape_cast %126 : vector<1x1x16xf32> to vector<1x16xf32>
      %128 = vector.shape_cast %125 : vector<1x16xf32> to vector<1x1x16xf32>
      tpu.vector_store %arg8[%c0_119, %c13_120, %c3_121], %128 {strides = array<i32>} : memref<1x22x22xf32, #tpu.memory_space<vmem>>, vector<1x1x16xf32>,
      %c0_122 = arith.constant 0 : index
      %c176 = arith.constant 176 : index
      %129 = vector.load %arg5[%c0_122, %c176] : memref<1x256xf32, #tpu.memory_space<vmem>>, vector<1x16xf32>
      %cst_123 = arith.constant 2.500000e-01 : f32
      %130 = vector.broadcast %cst_123 : f32 to vector<1x16xf32>
      %131 = arith.mulf %129, %130 : vector<1x16xf32>
      %c0_124 = arith.constant 0 : index
      %c14 = arith.constant 14 : index
      %c3_125 = arith.constant 3 : index
      %132 = vector.load %arg7[%c0_124, %c14, %c3_125] : memref<1x22x22xf32, #tpu.memory_space<vmem>>, vector<1x1x16xf32>
      %133 = vector.shape_cast %132 : vector<1x1x16xf32> to vector<1x16xf32>
      %134 = vector.shape_cast %131 : vector<1x16xf32> to vector<1x1x16xf32>
      tpu.vector_store %arg7[%c0_124, %c14, %c3_125], %134 {strides = array<i32>} : memref<1x22x22xf32, #tpu.memory_space<vmem>>, vector<1x1x16xf32>,
      %c0_126 = arith.constant 0 : index
      %c176_127 = arith.constant 176 : index
      %135 = vector.load %arg6[%c0_126, %c176_127] : memref<1x256xf32, #tpu.memory_space<vmem>>, vector<1x16xf32>
      %c0_128 = arith.constant 0 : index
      %c14_129 = arith.constant 14 : index
      %c3_130 = arith.constant 3 : index
      %136 = vector.load %arg8[%c0_128, %c14_129, %c3_130] : memref<1x22x22xf32, #tpu.memory_space<vmem>>, vector<1x1x16xf32>
      %137 = vector.shape_cast %136 : vector<1x1x16xf32> to vector<1x16xf32>
      %138 = vector.shape_cast %135 : vector<1x16xf32> to vector<1x1x16xf32>
      tpu.vector_store %arg8[%c0_128, %c14_129, %c3_130], %138 {strides = array<i32>} : memref<1x22x22xf32, #tpu.memory_space<vmem>>, vector<1x1x16xf32>,
      %c0_131 = arith.constant 0 : index
      %c192 = arith.constant 192 : index
      %139 = vector.load %arg5[%c0_131, %c192] : memref<1x256xf32, #tpu.memory_space<vmem>>, vector<1x16xf32>
      %cst_132 = arith.constant 2.500000e-01 : f32
      %140 = vector.broadcast %cst_132 : f32 to vector<1x16xf32>
      %141 = arith.mulf %139, %140 : vector<1x16xf32>
      %c0_133 = arith.constant 0 : index
      %c15 = arith.constant 15 : index
      %c3_134 = arith.constant 3 : index
      %142 = vector.load %arg7[%c0_133, %c15, %c3_134] : memref<1x22x22xf32, #tpu.memory_space<vmem>>, vector<1x1x16xf32>
      %143 = vector.shape_cast %142 : vector<1x1x16xf32> to vector<1x16xf32>
      %144 = vector.shape_cast %141 : vector<1x16xf32> to vector<1x1x16xf32>
      tpu.vector_store %arg7[%c0_133, %c15, %c3_134], %144 {strides = array<i32>} : memref<1x22x22xf32, #tpu.memory_space<vmem>>, vector<1x1x16xf32>,
      %c0_135 = arith.constant 0 : index
      %c192_136 = arith.constant 192 : index
      %145 = vector.load %arg6[%c0_135, %c192_136] : memref<1x256xf32, #tpu.memory_space<vmem>>, vector<1x16xf32>
      %c0_137 = arith.constant 0 : index
      %c15_138 = arith.constant 15 : index
      %c3_139 = arith.constant 3 : index
      %146 = vector.load %arg8[%c0_137, %c15_138, %c3_139] : memref<1x22x22xf32, #tpu.memory_space<vmem>>, vector<1x1x16xf32>
      %147 = vector.shape_cast %146 : vector<1x1x16xf32> to vector<1x16xf32>
      %148 = vector.shape_cast %145 : vector<1x16xf32> to vector<1x1x16xf32>
      tpu.vector_store %arg8[%c0_137, %c15_138, %c3_139], %148 {strides = array<i32>} : memref<1x22x22xf32, #tpu.memory_space<vmem>>, vector<1x1x16xf32>,
      %c0_140 = arith.constant 0 : index
      %c208 = arith.constant 208 : index
      %149 = vector.load %arg5[%c0_140, %c208] : memref<1x256xf32, #tpu.memory_space<vmem>>, vector<1x16xf32>
      %cst_141 = arith.constant 2.500000e-01 : f32
      %150 = vector.broadcast %cst_141 : f32 to vector<1x16xf32>
      %151 = arith.mulf %149, %150 : vector<1x16xf32>
      %c0_142 = arith.constant 0 : index
      %c16_143 = arith.constant 16 : index
      %c3_144 = arith.constant 3 : index
      %152 = vector.load %arg7[%c0_142, %c16_143, %c3_144] : memref<1x22x22xf32, #tpu.memory_space<vmem>>, vector<1x1x16xf32>
      %153 = vector.shape_cast %152 : vector<1x1x16xf32> to vector<1x16xf32>
      %154 = vector.shape_cast %151 : vector<1x16xf32> to vector<1x1x16xf32>
      tpu.vector_store %arg7[%c0_142, %c16_143, %c3_144], %154 {strides = array<i32>} : memref<1x22x22xf32, #tpu.memory_space<vmem>>, vector<1x1x16xf32>,
      %c0_145 = arith.constant 0 : index
      %c208_146 = arith.constant 208 : index
      %155 = vector.load %arg6[%c0_145, %c208_146] : memref<1x256xf32, #tpu.memory_space<vmem>>, vector<1x16xf32>
      %c0_147 = arith.constant 0 : index
      %c16_148 = arith.constant 16 : index
      %c3_149 = arith.constant 3 : index
      %156 = vector.load %arg8[%c0_147, %c16_148, %c3_149] : memref<1x22x22xf32, #tpu.memory_space<vmem>>, vector<1x1x16xf32>
      %157 = vector.shape_cast %156 : vector<1x1x16xf32> to vector<1x16xf32>
      %158 = vector.shape_cast %155 : vector<1x16xf32> to vector<1x1x16xf32>
      tpu.vector_store %arg8[%c0_147, %c16_148, %c3_149], %158 {strides = array<i32>} : memref<1x22x22xf32, #tpu.memory_space<vmem>>, vector<1x1x16xf32>,
      %c0_150 = arith.constant 0 : index
      %c224 = arith.constant 224 : index
      %159 = vector.load %arg5[%c0_150, %c224] : memref<1x256xf32, #tpu.memory_space<vmem>>, vector<1x16xf32>
      %cst_151 = arith.constant 2.500000e-01 : f32
      %160 = vector.broadcast %cst_151 : f32 to vector<1x16xf32>
      %161 = arith.mulf %159, %160 : vector<1x16xf32>
      %c0_152 = arith.constant 0 : index
      %c17 = arith.constant 17 : index
      %c3_153 = arith.constant 3 : index
      %162 = vector.load %arg7[%c0_152, %c17, %c3_153] : memref<1x22x22xf32, #tpu.memory_space<vmem>>, vector<1x1x16xf32>
      %163 = vector.shape_cast %162 : vector<1x1x16xf32> to vector<1x16xf32>
      %164 = vector.shape_cast %161 : vector<1x16xf32> to vector<1x1x16xf32>
      tpu.vector_store %arg7[%c0_152, %c17, %c3_153], %164 {strides = array<i32>} : memref<1x22x22xf32, #tpu.memory_space<vmem>>, vector<1x1x16xf32>,
      %c0_154 = arith.constant 0 : index
      %c224_155 = arith.constant 224 : index
      %165 = vector.load %arg6[%c0_154, %c224_155] : memref<1x256xf32, #tpu.memory_space<vmem>>, vector<1x16xf32>
      %c0_156 = arith.constant 0 : index
      %c17_157 = arith.constant 17 : index
      %c3_158 = arith.constant 3 : index
      %166 = vector.load %arg8[%c0_156, %c17_157, %c3_158] : memref<1x22x22xf32, #tpu.memory_space<vmem>>, vector<1x1x16xf32>
      %167 = vector.shape_cast %166 : vector<1x1x16xf32> to vector<1x16xf32>
      %168 = vector.shape_cast %165 : vector<1x16xf32> to vector<1x1x16xf32>
      tpu.vector_store %arg8[%c0_156, %c17_157, %c3_158], %168 {strides = array<i32>} : memref<1x22x22xf32, #tpu.memory_space<vmem>>, vector<1x1x16xf32>,
      %c0_159 = arith.constant 0 : index
      %c240 = arith.constant 240 : index
      %169 = vector.load %arg5[%c0_159, %c240] : memref<1x256xf32, #tpu.memory_space<vmem>>, vector<1x16xf32>
      %cst_160 = arith.constant 2.500000e-01 : f32
      %170 = vector.broadcast %cst_160 : f32 to vector<1x16xf32>
      %171 = arith.mulf %169, %170 : vector<1x16xf32>
      %c0_161 = arith.constant 0 : index
      %c18 = arith.constant 18 : index
      %c3_162 = arith.constant 3 : index
      %172 = vector.load %arg7[%c0_161, %c18, %c3_162] : memref<1x22x22xf32, #tpu.memory_space<vmem>>, vector<1x1x16xf32>
      %173 = vector.shape_cast %172 : vector<1x1x16xf32> to vector<1x16xf32>
      %174 = vector.shape_cast %171 : vector<1x16xf32> to vector<1x1x16xf32>
      tpu.vector_store %arg7[%c0_161, %c18, %c3_162], %174 {strides = array<i32>} : memref<1x22x22xf32, #tpu.memory_space<vmem>>, vector<1x1x16xf32>,
      %c0_163 = arith.constant 0 : index
      %c240_164 = arith.constant 240 : index
      %175 = vector.load %arg6[%c0_163, %c240_164] : memref<1x256xf32, #tpu.memory_space<vmem>>, vector<1x16xf32>
      %c0_165 = arith.constant 0 : index
      %c18_166 = arith.constant 18 : index
      %c3_167 = arith.constant 3 : index
      %176 = vector.load %arg8[%c0_165, %c18_166, %c3_167] : memref<1x22x22xf32, #tpu.memory_space<vmem>>, vector<1x1x16xf32>
      %177 = vector.shape_cast %176 : vector<1x1x16xf32> to vector<1x16xf32>
      %178 = vector.shape_cast %175 : vector<1x16xf32> to vector<1x1x16xf32>
      tpu.vector_store %arg8[%c0_165, %c18_166, %c3_167], %178 {strides = array<i32>} : memref<1x22x22xf32, #tpu.memory_space<vmem>>, vector<1x1x16xf32>,
      %cst_168 = arith.constant 0.000000e+00 : f32
      %179 = vector.broadcast %cst_168 : f32 to vector<1x16x16xf32>
      %c0_169 = arith.constant 0 : index
      %c0_170 = arith.constant 0 : index
      %c0_171 = arith.constant 0 : index
      %180 = vector.load %arg7[%c0_169, %c0_170, %c0_171] : memref<1x22x22xf32, #tpu.memory_space<vmem>>, vector<1x22x16xf32>
      %c0_172 = arith.constant 0 : index
      %181 = memref.load %arg3[%c0_172] : memref<98xf32, #tpu.memory_space<smem>>
      %182 = vector.extract_strided_slice %180 {offsets = [0, 0, 0], sizes = [1, 16, 16], strides = [1, 1, 1]} : vector<1x22x16xf32> to vector<1x16x16xf32>
      %183 = vector.broadcast %181 : f32 to vector<1x16x16xf32>
      %184 = arith.mulf %183, %182 : vector<1x16x16xf32>
      %185 = arith.addf %179, %184 : vector<1x16x16xf32>
      %c7_173 = arith.constant 7 : index
      %186 = memref.load %arg3[%c7_173] : memref<98xf32, #tpu.memory_space<smem>>
      %187 = vector.extract_strided_slice %180 {offsets = [0, 1, 0], sizes = [1, 16, 16], strides = [1, 1, 1]} : vector<1x22x16xf32> to vector<1x16x16xf32>
      %188 = vector.broadcast %186 : f32 to vector<1x16x16xf32>
      %189 = arith.mulf %188, %187 : vector<1x16x16xf32>
      %190 = arith.addf %185, %189 : vector<1x16x16xf32>
      %c14_174 = arith.constant 14 : index
      %191 = memref.load %arg3[%c14_174] : memref<98xf32, #tpu.memory_space<smem>>
      %192 = vector.extract_strided_slice %180 {offsets = [0, 2, 0], sizes = [1, 16, 16], strides = [1, 1, 1]} : vector<1x22x16xf32> to vector<1x16x16xf32>
      %193 = vector.broadcast %191 : f32 to vector<1x16x16xf32>
      %194 = arith.mulf %193, %192 : vector<1x16x16xf32>
      %195 = arith.addf %190, %194 : vector<1x16x16xf32>
      %c21 = arith.constant 21 : index
      %196 = memref.load %arg3[%c21] : memref<98xf32, #tpu.memory_space<smem>>
      %197 = vector.extract_strided_slice %180 {offsets = [0, 3, 0], sizes = [1, 16, 16], strides = [1, 1, 1]} : vector<1x22x16xf32> to vector<1x16x16xf32>
      %198 = vector.broadcast %196 : f32 to vector<1x16x16xf32>
      %199 = arith.mulf %198, %197 : vector<1x16x16xf32>
      %200 = arith.addf %195, %199 : vector<1x16x16xf32>
      %c28 = arith.constant 28 : index
      %201 = memref.load %arg3[%c28] : memref<98xf32, #tpu.memory_space<smem>>
      %202 = vector.extract_strided_slice %180 {offsets = [0, 4, 0], sizes = [1, 16, 16], strides = [1, 1, 1]} : vector<1x22x16xf32> to vector<1x16x16xf32>
      %203 = vector.broadcast %201 : f32 to vector<1x16x16xf32>
      %204 = arith.mulf %203, %202 : vector<1x16x16xf32>
      %205 = arith.addf %200, %204 : vector<1x16x16xf32>
      %c35 = arith.constant 35 : index
      %206 = memref.load %arg3[%c35] : memref<98xf32, #tpu.memory_space<smem>>
      %207 = vector.extract_strided_slice %180 {offsets = [0, 5, 0], sizes = [1, 16, 16], strides = [1, 1, 1]} : vector<1x22x16xf32> to vector<1x16x16xf32>
      %208 = vector.broadcast %206 : f32 to vector<1x16x16xf32>
      %209 = arith.mulf %208, %207 : vector<1x16x16xf32>
      %210 = arith.addf %205, %209 : vector<1x16x16xf32>
      %c42 = arith.constant 42 : index
      %211 = memref.load %arg3[%c42] : memref<98xf32, #tpu.memory_space<smem>>
      %212 = vector.extract_strided_slice %180 {offsets = [0, 6, 0], sizes = [1, 16, 16], strides = [1, 1, 1]} : vector<1x22x16xf32> to vector<1x16x16xf32>
      %213 = vector.broadcast %211 : f32 to vector<1x16x16xf32>
      %214 = arith.mulf %213, %212 : vector<1x16x16xf32>
      %215 = arith.addf %210, %214 : vector<1x16x16xf32>
      %c0_175 = arith.constant 0 : index
      %c0_176 = arith.constant 0 : index
      %c1 = arith.constant 1 : index
      %216 = vector.load %arg7[%c0_175, %c0_176, %c1] : memref<1x22x22xf32, #tpu.memory_space<vmem>>, vector<1x22x16xf32>
      %c1_177 = arith.constant 1 : index
      %217 = memref.load %arg3[%c1_177] : memref<98xf32, #tpu.memory_space<smem>>
      %218 = vector.extract_strided_slice %216 {offsets = [0, 0, 0], sizes = [1, 16, 16], strides = [1, 1, 1]} : vector<1x22x16xf32> to vector<1x16x16xf32>
      %219 = vector.broadcast %217 : f32 to vector<1x16x16xf32>
      %220 = arith.mulf %219, %218 : vector<1x16x16xf32>
      %221 = arith.addf %215, %220 : vector<1x16x16xf32>
      %c8_178 = arith.constant 8 : index
      %222 = memref.load %arg3[%c8_178] : memref<98xf32, #tpu.memory_space<smem>>
      %223 = vector.extract_strided_slice %216 {offsets = [0, 1, 0], sizes = [1, 16, 16], strides = [1, 1, 1]} : vector<1x22x16xf32> to vector<1x16x16xf32>
      %224 = vector.broadcast %222 : f32 to vector<1x16x16xf32>
      %225 = arith.mulf %224, %223 : vector<1x16x16xf32>
      %226 = arith.addf %221, %225 : vector<1x16x16xf32>
      %c15_179 = arith.constant 15 : index
      %227 = memref.load %arg3[%c15_179] : memref<98xf32, #tpu.memory_space<smem>>
      %228 = vector.extract_strided_slice %216 {offsets = [0, 2, 0], sizes = [1, 16, 16], strides = [1, 1, 1]} : vector<1x22x16xf32> to vector<1x16x16xf32>
      %229 = vector.broadcast %227 : f32 to vector<1x16x16xf32>
      %230 = arith.mulf %229, %228 : vector<1x16x16xf32>
      %231 = arith.addf %226, %230 : vector<1x16x16xf32>
      %c22 = arith.constant 22 : index
      %232 = memref.load %arg3[%c22] : memref<98xf32, #tpu.memory_space<smem>>
      %233 = vector.extract_strided_slice %216 {offsets = [0, 3, 0], sizes = [1, 16, 16], strides = [1, 1, 1]} : vector<1x22x16xf32> to vector<1x16x16xf32>
      %234 = vector.broadcast %232 : f32 to vector<1x16x16xf32>
      %235 = arith.mulf %234, %233 : vector<1x16x16xf32>
      %236 = arith.addf %231, %235 : vector<1x16x16xf32>
      %c29 = arith.constant 29 : index
      %237 = memref.load %arg3[%c29] : memref<98xf32, #tpu.memory_space<smem>>
      %238 = vector.extract_strided_slice %216 {offsets = [0, 4, 0], sizes = [1, 16, 16], strides = [1, 1, 1]} : vector<1x22x16xf32> to vector<1x16x16xf32>
      %239 = vector.broadcast %237 : f32 to vector<1x16x16xf32>
      %240 = arith.mulf %239, %238 : vector<1x16x16xf32>
      %241 = arith.addf %236, %240 : vector<1x16x16xf32>
      %c36 = arith.constant 36 : index
      %242 = memref.load %arg3[%c36] : memref<98xf32, #tpu.memory_space<smem>>
      %243 = vector.extract_strided_slice %216 {offsets = [0, 5, 0], sizes = [1, 16, 16], strides = [1, 1, 1]} : vector<1x22x16xf32> to vector<1x16x16xf32>
      %244 = vector.broadcast %242 : f32 to vector<1x16x16xf32>
      %245 = arith.mulf %244, %243 : vector<1x16x16xf32>
      %246 = arith.addf %241, %245 : vector<1x16x16xf32>
      %c43 = arith.constant 43 : index
      %247 = memref.load %arg3[%c43] : memref<98xf32, #tpu.memory_space<smem>>
      %248 = vector.extract_strided_slice %216 {offsets = [0, 6, 0], sizes = [1, 16, 16], strides = [1, 1, 1]} : vector<1x22x16xf32> to vector<1x16x16xf32>
      %249 = vector.broadcast %247 : f32 to vector<1x16x16xf32>
      %250 = arith.mulf %249, %248 : vector<1x16x16xf32>
      %251 = arith.addf %246, %250 : vector<1x16x16xf32>
      %c0_180 = arith.constant 0 : index
      %c0_181 = arith.constant 0 : index
      %c2 = arith.constant 2 : index
      %252 = vector.load %arg7[%c0_180, %c0_181, %c2] : memref<1x22x22xf32, #tpu.memory_space<vmem>>, vector<1x22x16xf32>
      %c2_182 = arith.constant 2 : index
      %253 = memref.load %arg3[%c2_182] : memref<98xf32, #tpu.memory_space<smem>>
      %254 = vector.extract_strided_slice %252 {offsets = [0, 0, 0], sizes = [1, 16, 16], strides = [1, 1, 1]} : vector<1x22x16xf32> to vector<1x16x16xf32>
      %255 = vector.broadcast %253 : f32 to vector<1x16x16xf32>
      %256 = arith.mulf %255, %254 : vector<1x16x16xf32>
      %257 = arith.addf %251, %256 : vector<1x16x16xf32>
      %c9_183 = arith.constant 9 : index
      %258 = memref.load %arg3[%c9_183] : memref<98xf32, #tpu.memory_space<smem>>
      %259 = vector.extract_strided_slice %252 {offsets = [0, 1, 0], sizes = [1, 16, 16], strides = [1, 1, 1]} : vector<1x22x16xf32> to vector<1x16x16xf32>
      %260 = vector.broadcast %258 : f32 to vector<1x16x16xf32>
      %261 = arith.mulf %260, %259 : vector<1x16x16xf32>
      %262 = arith.addf %257, %261 : vector<1x16x16xf32>
      %c16_184 = arith.constant 16 : index
      %263 = memref.load %arg3[%c16_184] : memref<98xf32, #tpu.memory_space<smem>>
      %264 = vector.extract_strided_slice %252 {offsets = [0, 2, 0], sizes = [1, 16, 16], strides = [1, 1, 1]} : vector<1x22x16xf32> to vector<1x16x16xf32>
      %265 = vector.broadcast %263 : f32 to vector<1x16x16xf32>
      %266 = arith.mulf %265, %264 : vector<1x16x16xf32>
      %267 = arith.addf %262, %266 : vector<1x16x16xf32>
      %c23 = arith.constant 23 : index
      %268 = memref.load %arg3[%c23] : memref<98xf32, #tpu.memory_space<smem>>
      %269 = vector.extract_strided_slice %252 {offsets = [0, 3, 0], sizes = [1, 16, 16], strides = [1, 1, 1]} : vector<1x22x16xf32> to vector<1x16x16xf32>
      %270 = vector.broadcast %268 : f32 to vector<1x16x16xf32>
      %271 = arith.mulf %270, %269 : vector<1x16x16xf32>
      %272 = arith.addf %267, %271 : vector<1x16x16xf32>
      %c30 = arith.constant 30 : index
      %273 = memref.load %arg3[%c30] : memref<98xf32, #tpu.memory_space<smem>>
      %274 = vector.extract_strided_slice %252 {offsets = [0, 4, 0], sizes = [1, 16, 16], strides = [1, 1, 1]} : vector<1x22x16xf32> to vector<1x16x16xf32>
      %275 = vector.broadcast %273 : f32 to vector<1x16x16xf32>
      %276 = arith.mulf %275, %274 : vector<1x16x16xf32>
      %277 = arith.addf %272, %276 : vector<1x16x16xf32>
      %c37 = arith.constant 37 : index
      %278 = memref.load %arg3[%c37] : memref<98xf32, #tpu.memory_space<smem>>
      %279 = vector.extract_strided_slice %252 {offsets = [0, 5, 0], sizes = [1, 16, 16], strides = [1, 1, 1]} : vector<1x22x16xf32> to vector<1x16x16xf32>
      %280 = vector.broadcast %278 : f32 to vector<1x16x16xf32>
      %281 = arith.mulf %280, %279 : vector<1x16x16xf32>
      %282 = arith.addf %277, %281 : vector<1x16x16xf32>
      %c44 = arith.constant 44 : index
      %283 = memref.load %arg3[%c44] : memref<98xf32, #tpu.memory_space<smem>>
      %284 = vector.extract_strided_slice %252 {offsets = [0, 6, 0], sizes = [1, 16, 16], strides = [1, 1, 1]} : vector<1x22x16xf32> to vector<1x16x16xf32>
      %285 = vector.broadcast %283 : f32 to vector<1x16x16xf32>
      %286 = arith.mulf %285, %284 : vector<1x16x16xf32>
      %287 = arith.addf %282, %286 : vector<1x16x16xf32>
      %c0_185 = arith.constant 0 : index
      %c0_186 = arith.constant 0 : index
      %c3_187 = arith.constant 3 : index
      %288 = vector.load %arg7[%c0_185, %c0_186, %c3_187] : memref<1x22x22xf32, #tpu.memory_space<vmem>>, vector<1x22x16xf32>
      %c3_188 = arith.constant 3 : index
      %289 = memref.load %arg3[%c3_188] : memref<98xf32, #tpu.memory_space<smem>>
      %290 = vector.extract_strided_slice %288 {offsets = [0, 0, 0], sizes = [1, 16, 16], strides = [1, 1, 1]} : vector<1x22x16xf32> to vector<1x16x16xf32>
      %291 = vector.broadcast %289 : f32 to vector<1x16x16xf32>
      %292 = arith.mulf %291, %290 : vector<1x16x16xf32>
      %293 = arith.addf %287, %292 : vector<1x16x16xf32>
      %c10_189 = arith.constant 10 : index
      %294 = memref.load %arg3[%c10_189] : memref<98xf32, #tpu.memory_space<smem>>
      %295 = vector.extract_strided_slice %288 {offsets = [0, 1, 0], sizes = [1, 16, 16], strides = [1, 1, 1]} : vector<1x22x16xf32> to vector<1x16x16xf32>
      %296 = vector.broadcast %294 : f32 to vector<1x16x16xf32>
      %297 = arith.mulf %296, %295 : vector<1x16x16xf32>
      %298 = arith.addf %293, %297 : vector<1x16x16xf32>
      %c17_190 = arith.constant 17 : index
      %299 = memref.load %arg3[%c17_190] : memref<98xf32, #tpu.memory_space<smem>>
      %300 = vector.extract_strided_slice %288 {offsets = [0, 2, 0], sizes = [1, 16, 16], strides = [1, 1, 1]} : vector<1x22x16xf32> to vector<1x16x16xf32>
      %301 = vector.broadcast %299 : f32 to vector<1x16x16xf32>
      %302 = arith.mulf %301, %300 : vector<1x16x16xf32>
      %303 = arith.addf %298, %302 : vector<1x16x16xf32>
      %c24 = arith.constant 24 : index
      %304 = memref.load %arg3[%c24] : memref<98xf32, #tpu.memory_space<smem>>
      %305 = vector.extract_strided_slice %288 {offsets = [0, 3, 0], sizes = [1, 16, 16], strides = [1, 1, 1]} : vector<1x22x16xf32> to vector<1x16x16xf32>
      %306 = vector.broadcast %304 : f32 to vector<1x16x16xf32>
      %307 = arith.mulf %306, %305 : vector<1x16x16xf32>
      %308 = arith.addf %303, %307 : vector<1x16x16xf32>
      %c31 = arith.constant 31 : index
      %309 = memref.load %arg3[%c31] : memref<98xf32, #tpu.memory_space<smem>>
      %310 = vector.extract_strided_slice %288 {offsets = [0, 4, 0], sizes = [1, 16, 16], strides = [1, 1, 1]} : vector<1x22x16xf32> to vector<1x16x16xf32>
      %311 = vector.broadcast %309 : f32 to vector<1x16x16xf32>
      %312 = arith.mulf %311, %310 : vector<1x16x16xf32>
      %313 = arith.addf %308, %312 : vector<1x16x16xf32>
      %c38 = arith.constant 38 : index
      %314 = memref.load %arg3[%c38] : memref<98xf32, #tpu.memory_space<smem>>
      %315 = vector.extract_strided_slice %288 {offsets = [0, 5, 0], sizes = [1, 16, 16], strides = [1, 1, 1]} : vector<1x22x16xf32> to vector<1x16x16xf32>
      %316 = vector.broadcast %314 : f32 to vector<1x16x16xf32>
      %317 = arith.mulf %316, %315 : vector<1x16x16xf32>
      %318 = arith.addf %313, %317 : vector<1x16x16xf32>
      %c45 = arith.constant 45 : index
      %319 = memref.load %arg3[%c45] : memref<98xf32, #tpu.memory_space<smem>>
      %320 = vector.extract_strided_slice %288 {offsets = [0, 6, 0], sizes = [1, 16, 16], strides = [1, 1, 1]} : vector<1x22x16xf32> to vector<1x16x16xf32>
      %321 = vector.broadcast %319 : f32 to vector<1x16x16xf32>
      %322 = arith.mulf %321, %320 : vector<1x16x16xf32>
      %323 = arith.addf %318, %322 : vector<1x16x16xf32>
      %c0_191 = arith.constant 0 : index
      %c0_192 = arith.constant 0 : index
      %c4_193 = arith.constant 4 : index
      %324 = vector.load %arg7[%c0_191, %c0_192, %c4_193] : memref<1x22x22xf32, #tpu.memory_space<vmem>>, vector<1x22x16xf32>
      %c4_194 = arith.constant 4 : index
      %325 = memref.load %arg3[%c4_194] : memref<98xf32, #tpu.memory_space<smem>>
      %326 = vector.extract_strided_slice %324 {offsets = [0, 0, 0], sizes = [1, 16, 16], strides = [1, 1, 1]} : vector<1x22x16xf32> to vector<1x16x16xf32>
      %327 = vector.broadcast %325 : f32 to vector<1x16x16xf32>
      %328 = arith.mulf %327, %326 : vector<1x16x16xf32>
      %329 = arith.addf %323, %328 : vector<1x16x16xf32>
      %c11_195 = arith.constant 11 : index
      %330 = memref.load %arg3[%c11_195] : memref<98xf32, #tpu.memory_space<smem>>
      %331 = vector.extract_strided_slice %324 {offsets = [0, 1, 0], sizes = [1, 16, 16], strides = [1, 1, 1]} : vector<1x22x16xf32> to vector<1x16x16xf32>
      %332 = vector.broadcast %330 : f32 to vector<1x16x16xf32>
      %333 = arith.mulf %332, %331 : vector<1x16x16xf32>
      %334 = arith.addf %329, %333 : vector<1x16x16xf32>
      %c18_196 = arith.constant 18 : index
      %335 = memref.load %arg3[%c18_196] : memref<98xf32, #tpu.memory_space<smem>>
      %336 = vector.extract_strided_slice %324 {offsets = [0, 2, 0], sizes = [1, 16, 16], strides = [1, 1, 1]} : vector<1x22x16xf32> to vector<1x16x16xf32>
      %337 = vector.broadcast %335 : f32 to vector<1x16x16xf32>
      %338 = arith.mulf %337, %336 : vector<1x16x16xf32>
      %339 = arith.addf %334, %338 : vector<1x16x16xf32>
      %c25 = arith.constant 25 : index
      %340 = memref.load %arg3[%c25] : memref<98xf32, #tpu.memory_space<smem>>
      %341 = vector.extract_strided_slice %324 {offsets = [0, 3, 0], sizes = [1, 16, 16], strides = [1, 1, 1]} : vector<1x22x16xf32> to vector<1x16x16xf32>
      %342 = vector.broadcast %340 : f32 to vector<1x16x16xf32>
      %343 = arith.mulf %342, %341 : vector<1x16x16xf32>
      %344 = arith.addf %339, %343 : vector<1x16x16xf32>
      %c32_197 = arith.constant 32 : index
      %345 = memref.load %arg3[%c32_197] : memref<98xf32, #tpu.memory_space<smem>>
      %346 = vector.extract_strided_slice %324 {offsets = [0, 4, 0], sizes = [1, 16, 16], strides = [1, 1, 1]} : vector<1x22x16xf32> to vector<1x16x16xf32>
      %347 = vector.broadcast %345 : f32 to vector<1x16x16xf32>
      %348 = arith.mulf %347, %346 : vector<1x16x16xf32>
      %349 = arith.addf %344, %348 : vector<1x16x16xf32>
      %c39 = arith.constant 39 : index
      %350 = memref.load %arg3[%c39] : memref<98xf32, #tpu.memory_space<smem>>
      %351 = vector.extract_strided_slice %324 {offsets = [0, 5, 0], sizes = [1, 16, 16], strides = [1, 1, 1]} : vector<1x22x16xf32> to vector<1x16x16xf32>
      %352 = vector.broadcast %350 : f32 to vector<1x16x16xf32>
      %353 = arith.mulf %352, %351 : vector<1x16x16xf32>
      %354 = arith.addf %349, %353 : vector<1x16x16xf32>
      %c46 = arith.constant 46 : index
      %355 = memref.load %arg3[%c46] : memref<98xf32, #tpu.memory_space<smem>>
      %356 = vector.extract_strided_slice %324 {offsets = [0, 6, 0], sizes = [1, 16, 16], strides = [1, 1, 1]} : vector<1x22x16xf32> to vector<1x16x16xf32>
      %357 = vector.broadcast %355 : f32 to vector<1x16x16xf32>
      %358 = arith.mulf %357, %356 : vector<1x16x16xf32>
      %359 = arith.addf %354, %358 : vector<1x16x16xf32>
      %c0_198 = arith.constant 0 : index
      %c0_199 = arith.constant 0 : index
      %c5_200 = arith.constant 5 : index
      %360 = vector.load %arg7[%c0_198, %c0_199, %c5_200] : memref<1x22x22xf32, #tpu.memory_space<vmem>>, vector<1x22x16xf32>
      %c5_201 = arith.constant 5 : index
      %361 = memref.load %arg3[%c5_201] : memref<98xf32, #tpu.memory_space<smem>>
      %362 = vector.extract_strided_slice %360 {offsets = [0, 0, 0], sizes = [1, 16, 16], strides = [1, 1, 1]} : vector<1x22x16xf32> to vector<1x16x16xf32>
      %363 = vector.broadcast %361 : f32 to vector<1x16x16xf32>
      %364 = arith.mulf %363, %362 : vector<1x16x16xf32>
      %365 = arith.addf %359, %364 : vector<1x16x16xf32>
      %c12_202 = arith.constant 12 : index
      %366 = memref.load %arg3[%c12_202] : memref<98xf32, #tpu.memory_space<smem>>
      %367 = vector.extract_strided_slice %360 {offsets = [0, 1, 0], sizes = [1, 16, 16], strides = [1, 1, 1]} : vector<1x22x16xf32> to vector<1x16x16xf32>
      %368 = vector.broadcast %366 : f32 to vector<1x16x16xf32>
      %369 = arith.mulf %368, %367 : vector<1x16x16xf32>
      %370 = arith.addf %365, %369 : vector<1x16x16xf32>
      %c19 = arith.constant 19 : index
      %371 = memref.load %arg3[%c19] : memref<98xf32, #tpu.memory_space<smem>>
      %372 = vector.extract_strided_slice %360 {offsets = [0, 2, 0], sizes = [1, 16, 16], strides = [1, 1, 1]} : vector<1x22x16xf32> to vector<1x16x16xf32>
      %373 = vector.broadcast %371 : f32 to vector<1x16x16xf32>
      %374 = arith.mulf %373, %372 : vector<1x16x16xf32>
      %375 = arith.addf %370, %374 : vector<1x16x16xf32>
      %c26 = arith.constant 26 : index
      %376 = memref.load %arg3[%c26] : memref<98xf32, #tpu.memory_space<smem>>
      %377 = vector.extract_strided_slice %360 {offsets = [0, 3, 0], sizes = [1, 16, 16], strides = [1, 1, 1]} : vector<1x22x16xf32> to vector<1x16x16xf32>
      %378 = vector.broadcast %376 : f32 to vector<1x16x16xf32>
      %379 = arith.mulf %378, %377 : vector<1x16x16xf32>
      %380 = arith.addf %375, %379 : vector<1x16x16xf32>
      %c33 = arith.constant 33 : index
      %381 = memref.load %arg3[%c33] : memref<98xf32, #tpu.memory_space<smem>>
      %382 = vector.extract_strided_slice %360 {offsets = [0, 4, 0], sizes = [1, 16, 16], strides = [1, 1, 1]} : vector<1x22x16xf32> to vector<1x16x16xf32>
      %383 = vector.broadcast %381 : f32 to vector<1x16x16xf32>
      %384 = arith.mulf %383, %382 : vector<1x16x16xf32>
      %385 = arith.addf %380, %384 : vector<1x16x16xf32>
      %c40 = arith.constant 40 : index
      %386 = memref.load %arg3[%c40] : memref<98xf32, #tpu.memory_space<smem>>
      %387 = vector.extract_strided_slice %360 {offsets = [0, 5, 0], sizes = [1, 16, 16], strides = [1, 1, 1]} : vector<1x22x16xf32> to vector<1x16x16xf32>
      %388 = vector.broadcast %386 : f32 to vector<1x16x16xf32>
      %389 = arith.mulf %388, %387 : vector<1x16x16xf32>
      %390 = arith.addf %385, %389 : vector<1x16x16xf32>
      %c47 = arith.constant 47 : index
      %391 = memref.load %arg3[%c47] : memref<98xf32, #tpu.memory_space<smem>>
      %392 = vector.extract_strided_slice %360 {offsets = [0, 6, 0], sizes = [1, 16, 16], strides = [1, 1, 1]} : vector<1x22x16xf32> to vector<1x16x16xf32>
      %393 = vector.broadcast %391 : f32 to vector<1x16x16xf32>
      %394 = arith.mulf %393, %392 : vector<1x16x16xf32>
      %395 = arith.addf %390, %394 : vector<1x16x16xf32>
      %c0_203 = arith.constant 0 : index
      %c0_204 = arith.constant 0 : index
      %c6_205 = arith.constant 6 : index
      %396 = vector.load %arg7[%c0_203, %c0_204, %c6_205] : memref<1x22x22xf32, #tpu.memory_space<vmem>>, vector<1x22x16xf32>
      %c6_206 = arith.constant 6 : index
      %397 = memref.load %arg3[%c6_206] : memref<98xf32, #tpu.memory_space<smem>>
      %398 = vector.extract_strided_slice %396 {offsets = [0, 0, 0], sizes = [1, 16, 16], strides = [1, 1, 1]} : vector<1x22x16xf32> to vector<1x16x16xf32>
      %399 = vector.broadcast %397 : f32 to vector<1x16x16xf32>
      %400 = arith.mulf %399, %398 : vector<1x16x16xf32>
      %401 = arith.addf %395, %400 : vector<1x16x16xf32>
      %c13_207 = arith.constant 13 : index
      %402 = memref.load %arg3[%c13_207] : memref<98xf32, #tpu.memory_space<smem>>
      %403 = vector.extract_strided_slice %396 {offsets = [0, 1, 0], sizes = [1, 16, 16], strides = [1, 1, 1]} : vector<1x22x16xf32> to vector<1x16x16xf32>
      %404 = vector.broadcast %402 : f32 to vector<1x16x16xf32>
      %405 = arith.mulf %404, %403 : vector<1x16x16xf32>
      %406 = arith.addf %401, %405 : vector<1x16x16xf32>
      %c20 = arith.constant 20 : index
      %407 = memref.load %arg3[%c20] : memref<98xf32, #tpu.memory_space<smem>>
      %408 = vector.extract_strided_slice %396 {offsets = [0, 2, 0], sizes = [1, 16, 16], strides = [1, 1, 1]} : vector<1x22x16xf32> to vector<1x16x16xf32>
      %409 = vector.broadcast %407 : f32 to vector<1x16x16xf32>
      %410 = arith.mulf %409, %408 : vector<1x16x16xf32>
      %411 = arith.addf %406, %410 : vector<1x16x16xf32>
      %c27 = arith.constant 27 : index
      %412 = memref.load %arg3[%c27] : memref<98xf32, #tpu.memory_space<smem>>
      %413 = vector.extract_strided_slice %396 {offsets = [0, 3, 0], sizes = [1, 16, 16], strides = [1, 1, 1]} : vector<1x22x16xf32> to vector<1x16x16xf32>
      %414 = vector.broadcast %412 : f32 to vector<1x16x16xf32>
      %415 = arith.mulf %414, %413 : vector<1x16x16xf32>
      %416 = arith.addf %411, %415 : vector<1x16x16xf32>
      %c34 = arith.constant 34 : index
      %417 = memref.load %arg3[%c34] : memref<98xf32, #tpu.memory_space<smem>>
      %418 = vector.extract_strided_slice %396 {offsets = [0, 4, 0], sizes = [1, 16, 16], strides = [1, 1, 1]} : vector<1x22x16xf32> to vector<1x16x16xf32>
      %419 = vector.broadcast %417 : f32 to vector<1x16x16xf32>
      %420 = arith.mulf %419, %418 : vector<1x16x16xf32>
      %421 = arith.addf %416, %420 : vector<1x16x16xf32>
      %c41 = arith.constant 41 : index
      %422 = memref.load %arg3[%c41] : memref<98xf32, #tpu.memory_space<smem>>
      %423 = vector.extract_strided_slice %396 {offsets = [0, 5, 0], sizes = [1, 16, 16], strides = [1, 1, 1]} : vector<1x22x16xf32> to vector<1x16x16xf32>
      %424 = vector.broadcast %422 : f32 to vector<1x16x16xf32>
      %425 = arith.mulf %424, %423 : vector<1x16x16xf32>
      %426 = arith.addf %421, %425 : vector<1x16x16xf32>
      %c48_208 = arith.constant 48 : index
      %427 = memref.load %arg3[%c48_208] : memref<98xf32, #tpu.memory_space<smem>>
      %428 = vector.extract_strided_slice %396 {offsets = [0, 6, 0], sizes = [1, 16, 16], strides = [1, 1, 1]} : vector<1x22x16xf32> to vector<1x16x16xf32>
      %429 = vector.broadcast %427 : f32 to vector<1x16x16xf32>
      %430 = arith.mulf %429, %428 : vector<1x16x16xf32>
      %431 = arith.addf %426, %430 : vector<1x16x16xf32>
      %c0_209 = arith.constant 0 : index
      %c0_210 = arith.constant 0 : index
      %c0_211 = arith.constant 0 : index
      %432 = vector.load %arg8[%c0_209, %c0_210, %c0_211] : memref<1x22x22xf32, #tpu.memory_space<vmem>>, vector<1x22x16xf32>
      %c49 = arith.constant 49 : index
      %433 = memref.load %arg3[%c49] : memref<98xf32, #tpu.memory_space<smem>>
      %434 = vector.extract_strided_slice %432 {offsets = [0, 0, 0], sizes = [1, 16, 16], strides = [1, 1, 1]} : vector<1x22x16xf32> to vector<1x16x16xf32>
      %435 = vector.broadcast %433 : f32 to vector<1x16x16xf32>
      %436 = arith.mulf %435, %434 : vector<1x16x16xf32>
      %437 = arith.addf %431, %436 : vector<1x16x16xf32>
      %c56 = arith.constant 56 : index
      %438 = memref.load %arg3[%c56] : memref<98xf32, #tpu.memory_space<smem>>
      %439 = vector.extract_strided_slice %432 {offsets = [0, 1, 0], sizes = [1, 16, 16], strides = [1, 1, 1]} : vector<1x22x16xf32> to vector<1x16x16xf32>
      %440 = vector.broadcast %438 : f32 to vector<1x16x16xf32>
      %441 = arith.mulf %440, %439 : vector<1x16x16xf32>
      %442 = arith.addf %437, %441 : vector<1x16x16xf32>
      %c63 = arith.constant 63 : index
      %443 = memref.load %arg3[%c63] : memref<98xf32, #tpu.memory_space<smem>>
      %444 = vector.extract_strided_slice %432 {offsets = [0, 2, 0], sizes = [1, 16, 16], strides = [1, 1, 1]} : vector<1x22x16xf32> to vector<1x16x16xf32>
      %445 = vector.broadcast %443 : f32 to vector<1x16x16xf32>
      %446 = arith.mulf %445, %444 : vector<1x16x16xf32>
      %447 = arith.addf %442, %446 : vector<1x16x16xf32>
      %c70 = arith.constant 70 : index
      %448 = memref.load %arg3[%c70] : memref<98xf32, #tpu.memory_space<smem>>
      %449 = vector.extract_strided_slice %432 {offsets = [0, 3, 0], sizes = [1, 16, 16], strides = [1, 1, 1]} : vector<1x22x16xf32> to vector<1x16x16xf32>
      %450 = vector.broadcast %448 : f32 to vector<1x16x16xf32>
      %451 = arith.mulf %450, %449 : vector<1x16x16xf32>
      %452 = arith.addf %447, %451 : vector<1x16x16xf32>
      %c77 = arith.constant 77 : index
      %453 = memref.load %arg3[%c77] : memref<98xf32, #tpu.memory_space<smem>>
      %454 = vector.extract_strided_slice %432 {offsets = [0, 4, 0], sizes = [1, 16, 16], strides = [1, 1, 1]} : vector<1x22x16xf32> to vector<1x16x16xf32>
      %455 = vector.broadcast %453 : f32 to vector<1x16x16xf32>
      %456 = arith.mulf %455, %454 : vector<1x16x16xf32>
      %457 = arith.addf %452, %456 : vector<1x16x16xf32>
      %c84 = arith.constant 84 : index
      %458 = memref.load %arg3[%c84] : memref<98xf32, #tpu.memory_space<smem>>
      %459 = vector.extract_strided_slice %432 {offsets = [0, 5, 0], sizes = [1, 16, 16], strides = [1, 1, 1]} : vector<1x22x16xf32> to vector<1x16x16xf32>
      %460 = vector.broadcast %458 : f32 to vector<1x16x16xf32>
      %461 = arith.mulf %460, %459 : vector<1x16x16xf32>
      %462 = arith.addf %457, %461 : vector<1x16x16xf32>
      %c91 = arith.constant 91 : index
      %463 = memref.load %arg3[%c91] : memref<98xf32, #tpu.memory_space<smem>>
      %464 = vector.extract_strided_slice %432 {offsets = [0, 6, 0], sizes = [1, 16, 16], strides = [1, 1, 1]} : vector<1x22x16xf32> to vector<1x16x16xf32>
      %465 = vector.broadcast %463 : f32 to vector<1x16x16xf32>
      %466 = arith.mulf %465, %464 : vector<1x16x16xf32>
      %467 = arith.addf %462, %466 : vector<1x16x16xf32>
      %c0_212 = arith.constant 0 : index
      %c0_213 = arith.constant 0 : index
      %c1_214 = arith.constant 1 : index
      %468 = vector.load %arg8[%c0_212, %c0_213, %c1_214] : memref<1x22x22xf32, #tpu.memory_space<vmem>>, vector<1x22x16xf32>
      %c50 = arith.constant 50 : index
      %469 = memref.load %arg3[%c50] : memref<98xf32, #tpu.memory_space<smem>>
      %470 = vector.extract_strided_slice %468 {offsets = [0, 0, 0], sizes = [1, 16, 16], strides = [1, 1, 1]} : vector<1x22x16xf32> to vector<1x16x16xf32>
      %471 = vector.broadcast %469 : f32 to vector<1x16x16xf32>
      %472 = arith.mulf %471, %470 : vector<1x16x16xf32>
      %473 = arith.addf %467, %472 : vector<1x16x16xf32>
      %c57 = arith.constant 57 : index
      %474 = memref.load %arg3[%c57] : memref<98xf32, #tpu.memory_space<smem>>
      %475 = vector.extract_strided_slice %468 {offsets = [0, 1, 0], sizes = [1, 16, 16], strides = [1, 1, 1]} : vector<1x22x16xf32> to vector<1x16x16xf32>
      %476 = vector.broadcast %474 : f32 to vector<1x16x16xf32>
      %477 = arith.mulf %476, %475 : vector<1x16x16xf32>
      %478 = arith.addf %473, %477 : vector<1x16x16xf32>
      %c64_215 = arith.constant 64 : index
      %479 = memref.load %arg3[%c64_215] : memref<98xf32, #tpu.memory_space<smem>>
      %480 = vector.extract_strided_slice %468 {offsets = [0, 2, 0], sizes = [1, 16, 16], strides = [1, 1, 1]} : vector<1x22x16xf32> to vector<1x16x16xf32>
      %481 = vector.broadcast %479 : f32 to vector<1x16x16xf32>
      %482 = arith.mulf %481, %480 : vector<1x16x16xf32>
      %483 = arith.addf %478, %482 : vector<1x16x16xf32>
      %c71 = arith.constant 71 : index
      %484 = memref.load %arg3[%c71] : memref<98xf32, #tpu.memory_space<smem>>
      %485 = vector.extract_strided_slice %468 {offsets = [0, 3, 0], sizes = [1, 16, 16], strides = [1, 1, 1]} : vector<1x22x16xf32> to vector<1x16x16xf32>
      %486 = vector.broadcast %484 : f32 to vector<1x16x16xf32>
      %487 = arith.mulf %486, %485 : vector<1x16x16xf32>
      %488 = arith.addf %483, %487 : vector<1x16x16xf32>
      %c78 = arith.constant 78 : index
      %489 = memref.load %arg3[%c78] : memref<98xf32, #tpu.memory_space<smem>>
      %490 = vector.extract_strided_slice %468 {offsets = [0, 4, 0], sizes = [1, 16, 16], strides = [1, 1, 1]} : vector<1x22x16xf32> to vector<1x16x16xf32>
      %491 = vector.broadcast %489 : f32 to vector<1x16x16xf32>
      %492 = arith.mulf %491, %490 : vector<1x16x16xf32>
      %493 = arith.addf %488, %492 : vector<1x16x16xf32>
      %c85 = arith.constant 85 : index
      %494 = memref.load %arg3[%c85] : memref<98xf32, #tpu.memory_space<smem>>
      %495 = vector.extract_strided_slice %468 {offsets = [0, 5, 0], sizes = [1, 16, 16], strides = [1, 1, 1]} : vector<1x22x16xf32> to vector<1x16x16xf32>
      %496 = vector.broadcast %494 : f32 to vector<1x16x16xf32>
      %497 = arith.mulf %496, %495 : vector<1x16x16xf32>
      %498 = arith.addf %493, %497 : vector<1x16x16xf32>
      %c92 = arith.constant 92 : index
      %499 = memref.load %arg3[%c92] : memref<98xf32, #tpu.memory_space<smem>>
      %500 = vector.extract_strided_slice %468 {offsets = [0, 6, 0], sizes = [1, 16, 16], strides = [1, 1, 1]} : vector<1x22x16xf32> to vector<1x16x16xf32>
      %501 = vector.broadcast %499 : f32 to vector<1x16x16xf32>
      %502 = arith.mulf %501, %500 : vector<1x16x16xf32>
      %503 = arith.addf %498, %502 : vector<1x16x16xf32>
      %c0_216 = arith.constant 0 : index
      %c0_217 = arith.constant 0 : index
      %c2_218 = arith.constant 2 : index
      %504 = vector.load %arg8[%c0_216, %c0_217, %c2_218] : memref<1x22x22xf32, #tpu.memory_space<vmem>>, vector<1x22x16xf32>
      %c51 = arith.constant 51 : index
      %505 = memref.load %arg3[%c51] : memref<98xf32, #tpu.memory_space<smem>>
      %506 = vector.extract_strided_slice %504 {offsets = [0, 0, 0], sizes = [1, 16, 16], strides = [1, 1, 1]} : vector<1x22x16xf32> to vector<1x16x16xf32>
      %507 = vector.broadcast %505 : f32 to vector<1x16x16xf32>
      %508 = arith.mulf %507, %506 : vector<1x16x16xf32>
      %509 = arith.addf %503, %508 : vector<1x16x16xf32>
      %c58 = arith.constant 58 : index
      %510 = memref.load %arg3[%c58] : memref<98xf32, #tpu.memory_space<smem>>
      %511 = vector.extract_strided_slice %504 {offsets = [0, 1, 0], sizes = [1, 16, 16], strides = [1, 1, 1]} : vector<1x22x16xf32> to vector<1x16x16xf32>
      %512 = vector.broadcast %510 : f32 to vector<1x16x16xf32>
      %513 = arith.mulf %512, %511 : vector<1x16x16xf32>
      %514 = arith.addf %509, %513 : vector<1x16x16xf32>
      %c65 = arith.constant 65 : index
      %515 = memref.load %arg3[%c65] : memref<98xf32, #tpu.memory_space<smem>>
      %516 = vector.extract_strided_slice %504 {offsets = [0, 2, 0], sizes = [1, 16, 16], strides = [1, 1, 1]} : vector<1x22x16xf32> to vector<1x16x16xf32>
      %517 = vector.broadcast %515 : f32 to vector<1x16x16xf32>
      %518 = arith.mulf %517, %516 : vector<1x16x16xf32>
      %519 = arith.addf %514, %518 : vector<1x16x16xf32>
      %c72 = arith.constant 72 : index
      %520 = memref.load %arg3[%c72] : memref<98xf32, #tpu.memory_space<smem>>
      %521 = vector.extract_strided_slice %504 {offsets = [0, 3, 0], sizes = [1, 16, 16], strides = [1, 1, 1]} : vector<1x22x16xf32> to vector<1x16x16xf32>
      %522 = vector.broadcast %520 : f32 to vector<1x16x16xf32>
      %523 = arith.mulf %522, %521 : vector<1x16x16xf32>
      %524 = arith.addf %519, %523 : vector<1x16x16xf32>
      %c79 = arith.constant 79 : index
      %525 = memref.load %arg3[%c79] : memref<98xf32, #tpu.memory_space<smem>>
      %526 = vector.extract_strided_slice %504 {offsets = [0, 4, 0], sizes = [1, 16, 16], strides = [1, 1, 1]} : vector<1x22x16xf32> to vector<1x16x16xf32>
      %527 = vector.broadcast %525 : f32 to vector<1x16x16xf32>
      %528 = arith.mulf %527, %526 : vector<1x16x16xf32>
      %529 = arith.addf %524, %528 : vector<1x16x16xf32>
      %c86 = arith.constant 86 : index
      %530 = memref.load %arg3[%c86] : memref<98xf32, #tpu.memory_space<smem>>
      %531 = vector.extract_strided_slice %504 {offsets = [0, 5, 0], sizes = [1, 16, 16], strides = [1, 1, 1]} : vector<1x22x16xf32> to vector<1x16x16xf32>
      %532 = vector.broadcast %530 : f32 to vector<1x16x16xf32>
      %533 = arith.mulf %532, %531 : vector<1x16x16xf32>
      %534 = arith.addf %529, %533 : vector<1x16x16xf32>
      %c93 = arith.constant 93 : index
      %535 = memref.load %arg3[%c93] : memref<98xf32, #tpu.memory_space<smem>>
      %536 = vector.extract_strided_slice %504 {offsets = [0, 6, 0], sizes = [1, 16, 16], strides = [1, 1, 1]} : vector<1x22x16xf32> to vector<1x16x16xf32>
      %537 = vector.broadcast %535 : f32 to vector<1x16x16xf32>
      %538 = arith.mulf %537, %536 : vector<1x16x16xf32>
      %539 = arith.addf %534, %538 : vector<1x16x16xf32>
      %c0_219 = arith.constant 0 : index
      %c0_220 = arith.constant 0 : index
      %c3_221 = arith.constant 3 : index
      %540 = vector.load %arg8[%c0_219, %c0_220, %c3_221] : memref<1x22x22xf32, #tpu.memory_space<vmem>>, vector<1x22x16xf32>
      %c52 = arith.constant 52 : index
      %541 = memref.load %arg3[%c52] : memref<98xf32, #tpu.memory_space<smem>>
      %542 = vector.extract_strided_slice %540 {offsets = [0, 0, 0], sizes = [1, 16, 16], strides = [1, 1, 1]} : vector<1x22x16xf32> to vector<1x16x16xf32>
      %543 = vector.broadcast %541 : f32 to vector<1x16x16xf32>
      %544 = arith.mulf %543, %542 : vector<1x16x16xf32>
      %545 = arith.addf %539, %544 : vector<1x16x16xf32>
      %c59 = arith.constant 59 : index
      %546 = memref.load %arg3[%c59] : memref<98xf32, #tpu.memory_space<smem>>
      %547 = vector.extract_strided_slice %540 {offsets = [0, 1, 0], sizes = [1, 16, 16], strides = [1, 1, 1]} : vector<1x22x16xf32> to vector<1x16x16xf32>
      %548 = vector.broadcast %546 : f32 to vector<1x16x16xf32>
      %549 = arith.mulf %548, %547 : vector<1x16x16xf32>
      %550 = arith.addf %545, %549 : vector<1x16x16xf32>
      %c66 = arith.constant 66 : index
      %551 = memref.load %arg3[%c66] : memref<98xf32, #tpu.memory_space<smem>>
      %552 = vector.extract_strided_slice %540 {offsets = [0, 2, 0], sizes = [1, 16, 16], strides = [1, 1, 1]} : vector<1x22x16xf32> to vector<1x16x16xf32>
      %553 = vector.broadcast %551 : f32 to vector<1x16x16xf32>
      %554 = arith.mulf %553, %552 : vector<1x16x16xf32>
      %555 = arith.addf %550, %554 : vector<1x16x16xf32>
      %c73 = arith.constant 73 : index
      %556 = memref.load %arg3[%c73] : memref<98xf32, #tpu.memory_space<smem>>
      %557 = vector.extract_strided_slice %540 {offsets = [0, 3, 0], sizes = [1, 16, 16], strides = [1, 1, 1]} : vector<1x22x16xf32> to vector<1x16x16xf32>
      %558 = vector.broadcast %556 : f32 to vector<1x16x16xf32>
      %559 = arith.mulf %558, %557 : vector<1x16x16xf32>
      %560 = arith.addf %555, %559 : vector<1x16x16xf32>
      %c80_222 = arith.constant 80 : index
      %561 = memref.load %arg3[%c80_222] : memref<98xf32, #tpu.memory_space<smem>>
      %562 = vector.extract_strided_slice %540 {offsets = [0, 4, 0], sizes = [1, 16, 16], strides = [1, 1, 1]} : vector<1x22x16xf32> to vector<1x16x16xf32>
      %563 = vector.broadcast %561 : f32 to vector<1x16x16xf32>
      %564 = arith.mulf %563, %562 : vector<1x16x16xf32>
      %565 = arith.addf %560, %564 : vector<1x16x16xf32>
      %c87 = arith.constant 87 : index
      %566 = memref.load %arg3[%c87] : memref<98xf32, #tpu.memory_space<smem>>
      %567 = vector.extract_strided_slice %540 {offsets = [0, 5, 0], sizes = [1, 16, 16], strides = [1, 1, 1]} : vector<1x22x16xf32> to vector<1x16x16xf32>
      %568 = vector.broadcast %566 : f32 to vector<1x16x16xf32>
      %569 = arith.mulf %568, %567 : vector<1x16x16xf32>
      %570 = arith.addf %565, %569 : vector<1x16x16xf32>
      %c94 = arith.constant 94 : index
      %571 = memref.load %arg3[%c94] : memref<98xf32, #tpu.memory_space<smem>>
      %572 = vector.extract_strided_slice %540 {offsets = [0, 6, 0], sizes = [1, 16, 16], strides = [1, 1, 1]} : vector<1x22x16xf32> to vector<1x16x16xf32>
      %573 = vector.broadcast %571 : f32 to vector<1x16x16xf32>
      %574 = arith.mulf %573, %572 : vector<1x16x16xf32>
      %575 = arith.addf %570, %574 : vector<1x16x16xf32>
      %c0_223 = arith.constant 0 : index
      %c0_224 = arith.constant 0 : index
      %c4_225 = arith.constant 4 : index
      %576 = vector.load %arg8[%c0_223, %c0_224, %c4_225] : memref<1x22x22xf32, #tpu.memory_space<vmem>>, vector<1x22x16xf32>
      %c53 = arith.constant 53 : index
      %577 = memref.load %arg3[%c53] : memref<98xf32, #tpu.memory_space<smem>>
      %578 = vector.extract_strided_slice %576 {offsets = [0, 0, 0], sizes = [1, 16, 16], strides = [1, 1, 1]} : vector<1x22x16xf32> to vector<1x16x16xf32>
      %579 = vector.broadcast %577 : f32 to vector<1x16x16xf32>
      %580 = arith.mulf %579, %578 : vector<1x16x16xf32>
      %581 = arith.addf %575, %580 : vector<1x16x16xf32>
      %c60 = arith.constant 60 : index
      %582 = memref.load %arg3[%c60] : memref<98xf32, #tpu.memory_space<smem>>
      %583 = vector.extract_strided_slice %576 {offsets = [0, 1, 0], sizes = [1, 16, 16], strides = [1, 1, 1]} : vector<1x22x16xf32> to vector<1x16x16xf32>
      %584 = vector.broadcast %582 : f32 to vector<1x16x16xf32>
      %585 = arith.mulf %584, %583 : vector<1x16x16xf32>
      %586 = arith.addf %581, %585 : vector<1x16x16xf32>
      %c67 = arith.constant 67 : index
      %587 = memref.load %arg3[%c67] : memref<98xf32, #tpu.memory_space<smem>>
      %588 = vector.extract_strided_slice %576 {offsets = [0, 2, 0], sizes = [1, 16, 16], strides = [1, 1, 1]} : vector<1x22x16xf32> to vector<1x16x16xf32>
      %589 = vector.broadcast %587 : f32 to vector<1x16x16xf32>
      %590 = arith.mulf %589, %588 : vector<1x16x16xf32>
      %591 = arith.addf %586, %590 : vector<1x16x16xf32>
      %c74 = arith.constant 74 : index
      %592 = memref.load %arg3[%c74] : memref<98xf32, #tpu.memory_space<smem>>
      %593 = vector.extract_strided_slice %576 {offsets = [0, 3, 0], sizes = [1, 16, 16], strides = [1, 1, 1]} : vector<1x22x16xf32> to vector<1x16x16xf32>
      %594 = vector.broadcast %592 : f32 to vector<1x16x16xf32>
      %595 = arith.mulf %594, %593 : vector<1x16x16xf32>
      %596 = arith.addf %591, %595 : vector<1x16x16xf32>
      %c81 = arith.constant 81 : index
      %597 = memref.load %arg3[%c81] : memref<98xf32, #tpu.memory_space<smem>>
      %598 = vector.extract_strided_slice %576 {offsets = [0, 4, 0], sizes = [1, 16, 16], strides = [1, 1, 1]} : vector<1x22x16xf32> to vector<1x16x16xf32>
      %599 = vector.broadcast %597 : f32 to vector<1x16x16xf32>
      %600 = arith.mulf %599, %598 : vector<1x16x16xf32>
      %601 = arith.addf %596, %600 : vector<1x16x16xf32>
      %c88 = arith.constant 88 : index
      %602 = memref.load %arg3[%c88] : memref<98xf32, #tpu.memory_space<smem>>
      %603 = vector.extract_strided_slice %576 {offsets = [0, 5, 0], sizes = [1, 16, 16], strides = [1, 1, 1]} : vector<1x22x16xf32> to vector<1x16x16xf32>
      %604 = vector.broadcast %602 : f32 to vector<1x16x16xf32>
      %605 = arith.mulf %604, %603 : vector<1x16x16xf32>
      %606 = arith.addf %601, %605 : vector<1x16x16xf32>
      %c95 = arith.constant 95 : index
      %607 = memref.load %arg3[%c95] : memref<98xf32, #tpu.memory_space<smem>>
      %608 = vector.extract_strided_slice %576 {offsets = [0, 6, 0], sizes = [1, 16, 16], strides = [1, 1, 1]} : vector<1x22x16xf32> to vector<1x16x16xf32>
      %609 = vector.broadcast %607 : f32 to vector<1x16x16xf32>
      %610 = arith.mulf %609, %608 : vector<1x16x16xf32>
      %611 = arith.addf %606, %610 : vector<1x16x16xf32>
      %c0_226 = arith.constant 0 : index
      %c0_227 = arith.constant 0 : index
      %c5_228 = arith.constant 5 : index
      %612 = vector.load %arg8[%c0_226, %c0_227, %c5_228] : memref<1x22x22xf32, #tpu.memory_space<vmem>>, vector<1x22x16xf32>
      %c54 = arith.constant 54 : index
      %613 = memref.load %arg3[%c54] : memref<98xf32, #tpu.memory_space<smem>>
      %614 = vector.extract_strided_slice %612 {offsets = [0, 0, 0], sizes = [1, 16, 16], strides = [1, 1, 1]} : vector<1x22x16xf32> to vector<1x16x16xf32>
      %615 = vector.broadcast %613 : f32 to vector<1x16x16xf32>
      %616 = arith.mulf %615, %614 : vector<1x16x16xf32>
      %617 = arith.addf %611, %616 : vector<1x16x16xf32>
      %c61 = arith.constant 61 : index
      %618 = memref.load %arg3[%c61] : memref<98xf32, #tpu.memory_space<smem>>
      %619 = vector.extract_strided_slice %612 {offsets = [0, 1, 0], sizes = [1, 16, 16], strides = [1, 1, 1]} : vector<1x22x16xf32> to vector<1x16x16xf32>
      %620 = vector.broadcast %618 : f32 to vector<1x16x16xf32>
      %621 = arith.mulf %620, %619 : vector<1x16x16xf32>
      %622 = arith.addf %617, %621 : vector<1x16x16xf32>
      %c68 = arith.constant 68 : index
      %623 = memref.load %arg3[%c68] : memref<98xf32, #tpu.memory_space<smem>>
      %624 = vector.extract_strided_slice %612 {offsets = [0, 2, 0], sizes = [1, 16, 16], strides = [1, 1, 1]} : vector<1x22x16xf32> to vector<1x16x16xf32>
      %625 = vector.broadcast %623 : f32 to vector<1x16x16xf32>
      %626 = arith.mulf %625, %624 : vector<1x16x16xf32>
      %627 = arith.addf %622, %626 : vector<1x16x16xf32>
      %c75 = arith.constant 75 : index
      %628 = memref.load %arg3[%c75] : memref<98xf32, #tpu.memory_space<smem>>
      %629 = vector.extract_strided_slice %612 {offsets = [0, 3, 0], sizes = [1, 16, 16], strides = [1, 1, 1]} : vector<1x22x16xf32> to vector<1x16x16xf32>
      %630 = vector.broadcast %628 : f32 to vector<1x16x16xf32>
      %631 = arith.mulf %630, %629 : vector<1x16x16xf32>
      %632 = arith.addf %627, %631 : vector<1x16x16xf32>
      %c82 = arith.constant 82 : index
      %633 = memref.load %arg3[%c82] : memref<98xf32, #tpu.memory_space<smem>>
      %634 = vector.extract_strided_slice %612 {offsets = [0, 4, 0], sizes = [1, 16, 16], strides = [1, 1, 1]} : vector<1x22x16xf32> to vector<1x16x16xf32>
      %635 = vector.broadcast %633 : f32 to vector<1x16x16xf32>
      %636 = arith.mulf %635, %634 : vector<1x16x16xf32>
      %637 = arith.addf %632, %636 : vector<1x16x16xf32>
      %c89 = arith.constant 89 : index
      %638 = memref.load %arg3[%c89] : memref<98xf32, #tpu.memory_space<smem>>
      %639 = vector.extract_strided_slice %612 {offsets = [0, 5, 0], sizes = [1, 16, 16], strides = [1, 1, 1]} : vector<1x22x16xf32> to vector<1x16x16xf32>
      %640 = vector.broadcast %638 : f32 to vector<1x16x16xf32>
      %641 = arith.mulf %640, %639 : vector<1x16x16xf32>
      %642 = arith.addf %637, %641 : vector<1x16x16xf32>
      %c96_229 = arith.constant 96 : index
      %643 = memref.load %arg3[%c96_229] : memref<98xf32, #tpu.memory_space<smem>>
      %644 = vector.extract_strided_slice %612 {offsets = [0, 6, 0], sizes = [1, 16, 16], strides = [1, 1, 1]} : vector<1x22x16xf32> to vector<1x16x16xf32>
      %645 = vector.broadcast %643 : f32 to vector<1x16x16xf32>
      %646 = arith.mulf %645, %644 : vector<1x16x16xf32>
      %647 = arith.addf %642, %646 : vector<1x16x16xf32>
      %c0_230 = arith.constant 0 : index
      %c0_231 = arith.constant 0 : index
      %c6_232 = arith.constant 6 : index
      %648 = vector.load %arg8[%c0_230, %c0_231, %c6_232] : memref<1x22x22xf32, #tpu.memory_space<vmem>>, vector<1x22x16xf32>
      %c55 = arith.constant 55 : index
      %649 = memref.load %arg3[%c55] : memref<98xf32, #tpu.memory_space<smem>>
      %650 = vector.extract_strided_slice %648 {offsets = [0, 0, 0], sizes = [1, 16, 16], strides = [1, 1, 1]} : vector<1x22x16xf32> to vector<1x16x16xf32>
      %651 = vector.broadcast %649 : f32 to vector<1x16x16xf32>
      %652 = arith.mulf %651, %650 : vector<1x16x16xf32>
      %653 = arith.addf %647, %652 : vector<1x16x16xf32>
      %c62 = arith.constant 62 : index
      %654 = memref.load %arg3[%c62] : memref<98xf32, #tpu.memory_space<smem>>
      %655 = vector.extract_strided_slice %648 {offsets = [0, 1, 0], sizes = [1, 16, 16], strides = [1, 1, 1]} : vector<1x22x16xf32> to vector<1x16x16xf32>
      %656 = vector.broadcast %654 : f32 to vector<1x16x16xf32>
      %657 = arith.mulf %656, %655 : vector<1x16x16xf32>
      %658 = arith.addf %653, %657 : vector<1x16x16xf32>
      %c69 = arith.constant 69 : index
      %659 = memref.load %arg3[%c69] : memref<98xf32, #tpu.memory_space<smem>>
      %660 = vector.extract_strided_slice %648 {offsets = [0, 2, 0], sizes = [1, 16, 16], strides = [1, 1, 1]} : vector<1x22x16xf32> to vector<1x16x16xf32>
      %661 = vector.broadcast %659 : f32 to vector<1x16x16xf32>
      %662 = arith.mulf %661, %660 : vector<1x16x16xf32>
      %663 = arith.addf %658, %662 : vector<1x16x16xf32>
      %c76 = arith.constant 76 : index
      %664 = memref.load %arg3[%c76] : memref<98xf32, #tpu.memory_space<smem>>
      %665 = vector.extract_strided_slice %648 {offsets = [0, 3, 0], sizes = [1, 16, 16], strides = [1, 1, 1]} : vector<1x22x16xf32> to vector<1x16x16xf32>
      %666 = vector.broadcast %664 : f32 to vector<1x16x16xf32>
      %667 = arith.mulf %666, %665 : vector<1x16x16xf32>
      %668 = arith.addf %663, %667 : vector<1x16x16xf32>
      %c83 = arith.constant 83 : index
      %669 = memref.load %arg3[%c83] : memref<98xf32, #tpu.memory_space<smem>>
      %670 = vector.extract_strided_slice %648 {offsets = [0, 4, 0], sizes = [1, 16, 16], strides = [1, 1, 1]} : vector<1x22x16xf32> to vector<1x16x16xf32>
      %671 = vector.broadcast %669 : f32 to vector<1x16x16xf32>
      %672 = arith.mulf %671, %670 : vector<1x16x16xf32>
      %673 = arith.addf %668, %672 : vector<1x16x16xf32>
      %c90 = arith.constant 90 : index
      %674 = memref.load %arg3[%c90] : memref<98xf32, #tpu.memory_space<smem>>
      %675 = vector.extract_strided_slice %648 {offsets = [0, 5, 0], sizes = [1, 16, 16], strides = [1, 1, 1]} : vector<1x22x16xf32> to vector<1x16x16xf32>
      %676 = vector.broadcast %674 : f32 to vector<1x16x16xf32>
      %677 = arith.mulf %676, %675 : vector<1x16x16xf32>
      %678 = arith.addf %673, %677 : vector<1x16x16xf32>
      %c97 = arith.constant 97 : index
      %679 = memref.load %arg3[%c97] : memref<98xf32, #tpu.memory_space<smem>>
      %680 = vector.extract_strided_slice %648 {offsets = [0, 6, 0], sizes = [1, 16, 16], strides = [1, 1, 1]} : vector<1x22x16xf32> to vector<1x16x16xf32>
      %681 = vector.broadcast %679 : f32 to vector<1x16x16xf32>
      %682 = arith.mulf %681, %680 : vector<1x16x16xf32>
      %683 = arith.addf %678, %682 : vector<1x16x16xf32>
      %684 = arith.negf %683 : vector<1x16x16xf32>
      %685 = math.exp %684 : vector<1x16x16xf32>
      %cst_233 = arith.constant 1.000000e+00 : f32
      %686 = vector.broadcast %cst_233 : f32 to vector<1x16x16xf32>
      %687 = arith.addf %686, %685 : vector<1x16x16xf32>
      %688 = arith.divf %686, %687 : vector<1x16x16xf32>
      %c0_234 = arith.constant 0 : index
      %c0_235 = arith.constant 0 : index
      %c0_236 = arith.constant 0 : index
      %c0_237 = arith.constant 0 : index
      %689 = vector.load %arg4[%c0_234, %c0_235, %c0_236, %c0_237] : memref<1x1x16x16xf32, #tpu.memory_space<vmem>>, vector<1x1x16x16xf32>
      %690 = vector.shape_cast %689 : vector<1x1x16x16xf32> to vector<1x16x16xf32>
      %691 = vector.shape_cast %688 : vector<1x16x16xf32> to vector<1x1x16x16xf32>
      tpu.vector_store %arg4[%c0_234, %c0_235, %c0_236, %c0_237], %691 {strides = array<i32>} : memref<1x1x16x16xf32, #tpu.memory_space<vmem>>, vector<1x1x16x16xf32>,
    } else {
    }
    return
  }
  func.func @transform_0(%arg0: i32, %arg1: i32) -> (i32, i32, i32) {
    %c0_i32 = arith.constant 0 : i32
    %c0_i32_0 = arith.constant 0 : i32
    return %arg0, %arg1, %c0_i32 : i32, i32, i32
  }
  func.func @transform_1(%arg0: i32, %arg1: i32) -> i32 {
    %c0_i32 = arith.constant 0 : i32
    %c0_i32_0 = arith.constant 0 : i32
    return %c0_i32 : i32
  }
  func.func @transform_2(%arg0: i32, %arg1: i32) -> (i32, i32, i32, i32) {
    %c0_i32 = arith.constant 0 : i32
    %c0_i32_0 = arith.constant 0 : i32
    %c0_i32_1 = arith.constant 0 : i32
    %c0_i32_2 = arith.constant 0 : i32
    return %arg0, %c0_i32, %c0_i32_0, %c0_i32_1 : i32, i32, i32, i32
  }
}

</mosaic_0001>

<llo_original>
// kernel: tpu_custom_call.1
$region0: #{tpu_custom_call.1}
  #allocation0 [shape = 'u32[]', space=smem, size = 0x4, offset = 0x4, fixed_abs, tag = 'smem constant byte address 0x4 - core index']
  #allocation1 [shape = 'u32[144,128]{1,0:T(1,128)}', space=vmem, size = 0x12000, scoped, tag = 'internal scratch']
  #allocation2 [shape = 'f32[1,256]{1,0:T(1,128)}', space=vmem, size = 0x400, scoped, tag = 'scratch operand']
  #allocation3 [shape = 'f32[1,256]{1,0:T(1,128)}', space=vmem, size = 0x400, scoped, tag = 'scratch operand']
  #allocation4 [shape = 'f32[1,22,22]{2,1,0:T(8,128)}', space=vmem, size = 0x3000, scoped, tag = 'scratch operand']
  #allocation5 [shape = 'f32[1,22,22]{2,1,0:T(8,128)}', space=vmem, size = 0x3000, scoped, tag = 'scratch operand']
  %s0 = inlined_call_operand.hbm [shape: f32[2,4,256], index: 0, kind: input, shape index: {}]
  %s1 = inlined_call_operand.vmem [shape: f32[98], index: 1, kind: input, shape index: {}]
  %s2 = inlined_call_operand.hbm [shape: f32[2,1,16,16], index: 2, kind: output, shape index: {}]
  %s3 = sld [smem:[#allocation0]]
  $region57: #{tpu_custom_call.1} parent=0
    _
  %s5 = ssub.s32 1, %s3
  %s6 = scalar_select 0, %s5, %s3
  $region1: #{tpu_custom_call.1} parent=0
    #allocation6 [shape = 'u8[8192]{0}', space=vmem, size = 0x2000, scoped, tag = 'input window, operand 0']
    #allocation7 [shape = 's32[2]{0}', space=sflag, size = 0x8, scoped, tag = 'scoped memory for tpu_custom_call.1']
    #allocation8 [shape = 's32[2]{0}', space=sflag, size = 0x8, scoped, tag = 'scoped memory for tpu_custom_call.1']
    #allocation9 [shape = 's32[2]{0}', space=sflag, size = 0x8, scoped, tag = 'scoped memory for tpu_custom_call.1']
    #allocation10 [shape = 'u8[512]{0}', space=smem, size = 0x200, scoped, tag = 'input window, operand 1, single buffered']
    #allocation11 [shape = 'u8[16384]{0}', space=vmem, size = 0x4000, scoped, tag = 'output window, operand 0']
    %7 = vsyncpa [#allocation7], 0
    %s8 = scalar_lea.sflag [#allocation7], 1
    %9 = vsyncpa %s8, 0
    %10 = vsyncpa [#allocation9], 0
    %11 = vsyncpa [#allocation8], 0
    %s12 = scalar_lea.sflag [#allocation8], 1
    %13 = vsyncpa %s12, 0
    loop: start=0, step=1, limit=4
    $region2: #{tpu_custom_call.1} parent=1 // loop_pre_header
      _
    $region3: #{tpu_custom_call.1} parent=1 // loop_header
      %s15 = sphi 0, %s19
      %p16 = scmp.ge.s32.totalorder %s15, 4
      %s22 = sphi 0, %s34
      %s23 = sphi 0, %s30
      %s24 = sphi 0, %s22
      %s25 = sphi 0, %s23
      %s26 = sphi 0, %s24
      %s27 = sphi 0, %s25
      %s39 = sphi 0, %s41
      %s42 = sphi 0, %s39
      %s43 = sphi 0, %s42
      %s59 = sphi 0, %s43
      %s63 = sphi 0, %s63
      %s65 = sphi 0, %s63
      %s66 = sphi 0, %s65
      %s80 = sphi 0, %s66
      %s86 = sphi 0, %s88
      %s89 = sphi 0, %s86
      %s90 = sphi 0, %s89
      %s106 = sphi 0, %s90
    $region4: #{tpu_custom_call.1} parent=1 // loop_header_branch
      %18 = sbr.rel (%p16) target = $region8
    $region5: #{tpu_custom_call.1} parent=1 // loop_body
      %s20 = ssub.s32 %s15, 1
      %s21 = ssub.s32 %s15, 2
      %s28 = sadd.s32 1, %s23
      %p29 = scmp.ge.s32.totalorder %s28, 1
      %s30 = scalar_select %p29, 0, %s28
      %s31 = sadd.s32 1, %s22
      %s32 = scalar_select %p29, %s31, %s22
      %p33 = scmp.ge.s32.totalorder %s32, 2
      %s34 = scalar_select %p33, 0, %s32
      %s35 = ssub.s32 %s22, %s34
      %s36 = ssub.s32 %s23, %s30
      %s37 = sor.u32 %s35, %s36
      %p38 = scmp.eq.s32.totalorder %s37, 0
      %s40 = sadd.s32 %s39, 1
      %s41 = scalar_select %p38, %s39, %s40
      %p44 = pneg %p38
      %p45 = scmp.eq.s32.totalorder %s15, 1
      %p46 = por %p44, %p45
      %p47 = scmp.ne.s32.totalorder %s39, %s42
      %p48 = scmp.eq.s32.totalorder %s15, 0
      %p49 = por %p47, %p48
      %p50 = scmp.ne.s32.totalorder %s39, %s42
      %p51 = scmp.eq.s32.totalorder %s20, 1
      %p52 = por %p50, %p51
      %p53 = scmp.ne.s32.totalorder %s42, %s43
      %p54 = scmp.eq.s32.totalorder %s20, 0
      %p55 = por %p53, %p54
      %p56 = scmp.ne.s32.totalorder %s42, %s43
      %p57 = scmp.eq.s32.totalorder %s21, 1
      %p58 = por %p56, %p57
      %p60 = scmp.ne.s32.totalorder %s43, %s59
      %p61 = scmp.eq.s32.totalorder %s21, 0
      %p62 = por %p60, %p61
      %s64 = sadd.s32 %s63, 1
      %p67 = scmp.eq.s32.totalorder %s15, 1
      %p68 = scmp.ne.s32.totalorder %s63, %s65
      %p69 = scmp.eq.s32.totalorder %s15, 0
      %p70 = por %p68, %p69
      %p71 = scmp.ne.s32.totalorder %s63, %s65
      %p72 = scmp.eq.s32.totalorder %s20, 1
      %p73 = por %p71, %p72
      %p74 = scmp.ne.s32.totalorder %s65, %s66
      %p75 = scmp.eq.s32.totalorder %s20, 0
      %p76 = por %p74, %p75
      %p77 = scmp.ne.s32.totalorder %s65, %s66
      %p78 = scmp.eq.s32.totalorder %s21, 1
      %p79 = por %p77, %p78
      %p81 = scmp.ne.s32.totalorder %s66, %s80
      %p82 = scmp.eq.s32.totalorder %s21, 0
      %p83 = por %p81, %p82
      %s84 = ssub.s32 %s22, %s34
      %p85 = scmp.eq.s32.totalorder %s84, 0
      %s87 = sadd.s32 %s86, 1
      %s88 = scalar_select %p85, %s86, %s87
      %p91 = pneg %p85
      %p92 = scmp.eq.s32.totalorder %s15, 1
      %p93 = por %p91, %p92
      %p94 = scmp.ne.s32.totalorder %s86, %s89
      %p95 = scmp.eq.s32.totalorder %s15, 0
      %p96 = por %p94, %p95
      %p97 = scmp.ne.s32.totalorder %s86, %s89
      %p98 = scmp.eq.s32.totalorder %s20, 1
      %p99 = por %p97, %p98
      %p100 = scmp.ne.s32.totalorder %s89, %s90
      %p101 = scmp.eq.s32.totalorder %s20, 0
      %p102 = por %p100, %p101
      %p103 = scmp.ne.s32.totalorder %s89, %s90
      %p104 = scmp.eq.s32.totalorder %s21, 1
      %p105 = por %p103, %p104
      %p107 = scmp.ne.s32.totalorder %s90, %s106
      %p108 = scmp.eq.s32.totalorder %s21, 0
      %p109 = por %p107, %p108
      %p110 = scmp.le.s32.totalorder 1, %s15
      %p111 = scmp.lt.s32.totalorder %s15, 3
      %p112 = pnand %p110, %p111
      %p113 = pneg %p112
      // Predicated region
      $region9: #{tpu_custom_call.1} parent=5 // pred_check
        _
      $region10: #{tpu_custom_call.1} parent=5 // pred_check_branch
        %115 = sbr.rel (%p112) target = $region12
      $region11: #{tpu_custom_call.1} parent=5 // pred_region
        %s116 = ssub.s32 %s15, 1
        // Predicated region
        $region13: #{tpu_custom_call.1} parent=11 // pred_check
          %p117 = pneg %p76
        $region14: #{tpu_custom_call.1} parent=11 // pred_check_branch
          %119 = sbr.rel (%p117) target = $region16
        $region15: #{tpu_custom_call.1} parent=11 // pred_region
          %s121 = ssub.s32 16, 16
          %122 = vsyncadd [#allocation9], %s121
          %s124 = sshll.u32 %s1, 4
          %s125 = int_to_ptr.vmem [resolvable:$true] %s124
          %127 = dma.vmem_to_smem %s125, 16, [#allocation10], [#allocation9]
        $region16: #{tpu_custom_call.1} parent=11 // pred_fallthru
          _
      $region12: #{tpu_custom_call.1} parent=5 // pred_fallthru
        _
      %p128 = scmp.lt.s32.totalorder %s15, 2
      // Predicated region
      $region17: #{tpu_custom_call.1} parent=5 // pred_check
        %p129 = pneg %p128
      $region18: #{tpu_custom_call.1} parent=5 // pred_check_branch
        %131 = sbr.rel (%p129) target = $region20
      $region19: #{tpu_custom_call.1} parent=5 // pred_region
        // Predicated region
        $region21: #{tpu_custom_call.1} parent=19 // pred_check
          %p132 = pneg %p49
        $region22: #{tpu_custom_call.1} parent=19 // pred_check_branch
          %134 = sbr.rel (%p132) target = $region24
        $region23: #{tpu_custom_call.1} parent=19 // pred_region
          %s135 = sand.u32 %s39, 1
          %s136 = scalar_lea.sflag [#allocation7], %s135
          %s137 = sand.u32 %s39, 1
          %s138 = smul.addr %s137, 8
          %s139 = scalar_lea.vmem [#allocation6], %s138
          %s141 = ssub.s32 128, 128
          %142 = vsyncadd %s136, %s141
          %s143 = smul.addr %s23, 2
          %s144 = smul.addr %s22, 2
          %s145 = sadd.s32 %s143, %s144
          %s146 = smul.addr %s145, 64
          %s147 = scalar_lea.hbm %s0, %s146
          %s149 = sshll.u32 %s139, 4
          %s150 = int_to_ptr.vmem [resolvable:$true] %s149
          %152 = dma.hbm_to_vmem [thread:$0]  %s147, 128, %s150, %s136
        $region24: #{tpu_custom_call.1} parent=19 // pred_fallthru
          _
      $region20: #{tpu_custom_call.1} parent=5 // pred_fallthru
        _
      %p153 = scmp.le.s32.totalorder 1, %s15
      %p154 = scmp.lt.s32.totalorder %s15, 3
      %p155 = pnand %p153, %p154
      %p156 = pneg %p155
      // Predicated region
      $region25: #{tpu_custom_call.1} parent=5 // pred_check
        _
      $region26: #{tpu_custom_call.1} parent=5 // pred_check_branch
        %158 = sbr.rel (%p155) target = $region28
      $region27: #{tpu_custom_call.1} parent=5 // pred_region
        %s159 = ssub.s32 %s15, 1
        %s160 = sand.u32 %s42, 1
        %s161 = scalar_lea.sflag [#allocation7], %s160
        %s162 = sand.u32 %s42, 1
        %s163 = smul.addr %s162, 8
        %s164 = scalar_lea.vmem [#allocation6], %s163
        // Predicated region
        $region29: #{tpu_custom_call.1} parent=27 // pred_check
          %p165 = pneg %p55
        $region30: #{tpu_custom_call.1} parent=27 // pred_check_branch
          %167 = sbr.rel (%p165) target = $region32
        $region31: #{tpu_custom_call.1} parent=27 // pred_region
          %168 = dma.done %s161, 128
        $region32: #{tpu_custom_call.1} parent=27 // pred_fallthru
          _
        // Predicated region
        $region33: #{tpu_custom_call.1} parent=27 // pred_check
          %p169 = pneg %p76
        $region34: #{tpu_custom_call.1} parent=27 // pred_check_branch
          %171 = sbr.rel (%p169) target = $region36
        $region35: #{tpu_custom_call.1} parent=27 // pred_region
          %172 = dma.done [#allocation9], 16
        $region36: #{tpu_custom_call.1} parent=27 // pred_fallthru
          _
        %173 = sfence
        %s174 = sand.u32 %s42, 1
        %s175 = scalar_lea.sflag [#allocation7], %s174
        %s176 = sand.u32 %s42, 1
        %s177 = smul.addr %s176, 8
        %s178 = scalar_lea.vmem [#allocation6], %s177
        %p179 = pneg %p55
        %p180 = pneg %p52
        %p181 = pneg %p76
        %p182 = pneg %p73
        %p183 = pneg %p102
        %p184 = pneg %p99
        %s185 = sand.u32 %s89, 1
        %s186 = scalar_lea.sflag [#allocation8], %s185
        %s187 = sand.u32 %s89, 1
        %s188 = smul.addr %s187, 16
        %s189 = scalar_lea.vmem [#allocation11], %s188
        %p190 = scmp.eq.s32.totalorder %s25, 0
        // Predicated region
        $region37: #{tpu_custom_call.1} parent=27 // pred_check
          %p191 = pneg %p190
        $region38: #{tpu_custom_call.1} parent=27 // pred_check_branch
          %193 = sbr.rel (%p191) target = $region40
        $region39: #{tpu_custom_call.1} parent=27 // pred_region
          %v194 = vlaneseq
          %vm195 = vcmp.ge.s32.totalorder %v194, 0
          %vm196 = vcmp.lt.s32.totalorder %v194, 256
          %vm197 = vmand %vm195, %vm196
          %198 = vst.msk [vmem:[#allocation2] sm:$0x3] %vm197, 0.0
          %199 = vst.msk [vmem:[#allocation3] sm:$0x3] %vm197, -inf
        $region40: #{tpu_custom_call.1} parent=27 // pred_fallthru
          _
        %v200 = vld [vmem:[%s164] sm:$0xff]
        %v201 = vld [vmem:[#allocation2] sm:$0x3]
        %v203 = vcombine.high %v200, %v200
        %vm205 = vcmask 1043456
        %v206 = vsel %vm205, %v200, 0.0
        %v207 = vrot.slane %v206, 4
        %v208 = vadd.f32 %v206, %v207
        %v209 = vrot.slane %v208, 2
        %v210 = vadd.f32 %v208, %v209
        %v211 = vrot.slane %v210, 1
        %v212 = vadd.f32 %v210, %v211
        %v213 = vsel %vm205, %v203, 0.0
        %v214 = vrot.slane %v213, 4
        %v215 = vadd.f32 %v213, %v214
        %v216 = vrot.slane %v215, 2
        %v217 = vadd.f32 %v215, %v216
        %v218 = vrot.slane %v217, 1
        %v219 = vadd.f32 %v217, %v218
        %v222 = vcombine.low %v212, %v219
        %v224 = vunpack.c.l.s4 1966171168
        %v225 = vunpack.c.0.s8 %v224
        %v226 = vlaneseq
        %v227 = vshrl.u32 %v226, 7
        %v228 = vsub.s32 %v225, %v227
        %v229 = vrot.slane %v222, %v228
        %v231 = vunpack.c.l.s4 1966171168
        %v232 = vunpack.c.0.s8 %v231
        %v233 = vlaneseq
        %v234 = vshrl.u32 %v233, 7
        %v235 = vsub.s32 %v232, %v234
        %v236 = vrot.slane %v229, %v235
        %v238 = vadd.f32 %v201, %v236
        %v239 = vlaneseq
        %vm240 = vcmp.ge.s32.totalorder %v239, 0
        %vm241 = vcmp.lt.s32.totalorder %v239, 256
        %vm242 = vmand %vm240, %vm241
        %243 = vst.msk [vmem:[#allocation2] sm:$0x3] %vm242, %v238
        %v244 = vld [vmem:[#allocation3] sm:$0x3]
        %v245 = vsel %vm205, %v200, -inf
        %v246 = vrot.slane %v245, 4
        %v247 = vmax.f32 %v245, %v246
        %v248 = vrot.slane %v247, 2
        %v249 = vmax.f32 %v247, %v248
        %v250 = vrot.slane %v249, 1
        %v251 = vmax.f32 %v249, %v250
        %v252 = vsel %vm205, %v203, -inf
        %v253 = vrot.slane %v252, 4
        %v254 = vmax.f32 %v252, %v253
        %v255 = vrot.slane %v254, 2
        %v256 = vmax.f32 %v254, %v255
        %v257 = vrot.slane %v256, 1
        %v258 = vmax.f32 %v256, %v257
        %v261 = vcombine.low %v251, %v258
        %v263 = vunpack.c.l.s4 1966171168
        %v264 = vunpack.c.0.s8 %v263
        %v265 = vlaneseq
        %v266 = vshrl.u32 %v265, 7
        %v267 = vsub.s32 %v264, %v266
        %v268 = vrot.slane %v261, %v267
        %v270 = vunpack.c.l.s4 1966171168
        %v271 = vunpack.c.0.s8 %v270
        %v272 = vlaneseq
        %v273 = vshrl.u32 %v272, 7
        %v274 = vsub.s32 %v271, %v273
        %v275 = vrot.slane %v268, %v274
        %v277 = vmax.f32 %v244, %v275
        %278 = vst.msk [vmem:[#allocation3] sm:$0x3] %vm242, %v277
        // Predicated region
        $region41: #{tpu_custom_call.1} parent=27 // pred_check
          %p279 = pneg %p190
        $region42: #{tpu_custom_call.1} parent=27 // pred_check_branch
          %281 = sbr.rel (%p279) target = $region44
        $region43: #{tpu_custom_call.1} parent=27 // pred_region
          %vm282 = vcmask 179200
          %283 = vst.msk [vmem:[#allocation4] sm:$0xff] %vm282, 0.0
          %284 = vst.msk [vmem:[#allocation4 + $0x8] sm:$0xff] %vm282, 0.0
          %vm285 = vcmask 177152
          %286 = vst.msk [vmem:[#allocation4 + $0x10] sm:$0x3f] %vm285, 0.0
          %287 = vst.msk [vmem:[#allocation5] sm:$0xff] %vm282, 0.0
          %288 = vst.msk [vmem:[#allocation5 + $0x8] sm:$0xff] %vm282, 0.0
          %289 = vst.msk [vmem:[#allocation5 + $0x10] sm:$0x3f] %vm285, 0.0
          %v290 = vld [vmem:[#allocation2] sm:$0x1]
          %v291 = vmul.f32 %v290, 0.25
          %v293 = vlaneseq
          %v294 = vshrl.u32 %v293, 7
          %v295 = vsub.s32 0, %v294
          %v296 = vrot.slane %v291, %v295
          %297 = vrot.lane.b32.xlu0 %v296, 3
          %v298 = vpop.permute.xlu0 %297
          %vm300 = vcmask 147480
          %301 = vst.msk [vmem:[#allocation4 + $0x3] sm:$0x1] %vm300, %v298
          %v302 = vld [vmem:[#allocation3] sm:$0x1]
          %v304 = vlaneseq
          %v305 = vshrl.u32 %v304, 7
          %v306 = vsub.s32 0, %v305
          %v307 = vrot.slane %v302, %v306
          %308 = vrot.lane.b32.xlu0 %v307, 3
          %v309 = vpop.permute.xlu0 %308
          %311 = vst.msk [vmem:[#allocation5 + $0x3] sm:$0x1] %vm300, %v309
          %v312 = vld [vmem:[#allocation2] sm:$0x1]
          %v313 = vmul.f32 %v312, 0.25
          %v315 = vlaneseq
          %v316 = vshrl.u32 %v315, 7
          %v317 = vsub.s32 0, %v316
          %v318 = vrot.slane %v313, %v317
          %319 = vrot.lane.b32.xlu0 %v318, 115
          %v320 = vpop.permute.xlu0 %319
          %322 = vst.msk [vmem:[#allocation4 + $0x4] sm:$0x1] %vm300, %v320
          %v323 = vld [vmem:[#allocation3] sm:$0x1]
          %v325 = vlaneseq
          %v326 = vshrl.u32 %v325, 7
          %v327 = vsub.s32 0, %v326
          %v328 = vrot.slane %v323, %v327
          %329 = vrot.lane.b32.xlu0 %v328, 115
          %v330 = vpop.permute.xlu0 %329
          %332 = vst.msk [vmem:[#allocation5 + $0x4] sm:$0x1] %vm300, %v330
          %v333 = vld [vmem:[#allocation2] sm:$0x1]
          %v334 = vmul.f32 %v333, 0.25
          %v336 = vlaneseq
          %v337 = vshrl.u32 %v336, 7
          %v338 = vsub.s32 0, %v337
          %v339 = vrot.slane %v334, %v338
          %340 = vrot.lane.b32.xlu0 %v339, 99
          %v341 = vpop.permute.xlu0 %340
          %343 = vst.msk [vmem:[#allocation4 + $0x5] sm:$0x1] %vm300, %v341
          %v344 = vld [vmem:[#allocation3] sm:$0x1]
          %v346 = vlaneseq
          %v347 = vshrl.u32 %v346, 7
          %v348 = vsub.s32 0, %v347
          %v349 = vrot.slane %v344, %v348
          %350 = vrot.lane.b32.xlu0 %v349, 99
          %v351 = vpop.permute.xlu0 %350
          %353 = vst.msk [vmem:[#allocation5 + $0x5] sm:$0x1] %vm300, %v351
          %v354 = vld [vmem:[#allocation2] sm:$0x1]
          %v355 = vmul.f32 %v354, 0.25
          %v357 = vlaneseq
          %v358 = vshrl.u32 %v357, 7
          %v359 = vsub.s32 0, %v358
          %v360 = vrot.slane %v355, %v359
          %361 = vrot.lane.b32.xlu0 %v360, 83
          %v362 = vpop.permute.xlu0 %361
          %364 = vst.msk [vmem:[#allocation4 + $0x6] sm:$0x1] %vm300, %v362
          %v365 = vld [vmem:[#allocation3] sm:$0x1]
          %v367 = vlaneseq
          %v368 = vshrl.u32 %v367, 7
          %v369 = vsub.s32 0, %v368
          %v370 = vrot.slane %v365, %v369
          %371 = vrot.lane.b32.xlu0 %v370, 83
          %v372 = vpop.permute.xlu0 %371
          %374 = vst.msk [vmem:[#allocation5 + $0x6] sm:$0x1] %vm300, %v372
          %v375 = vld [vmem:[#allocation2] sm:$0x1]
          %v376 = vmul.f32 %v375, 0.25
          %v378 = vlaneseq
          %v379 = vshrl.u32 %v378, 7
          %v380 = vsub.s32 0, %v379
          %v381 = vrot.slane %v376, %v380
          %382 = vrot.lane.b32.xlu0 %v381, 67
          %v383 = vpop.permute.xlu0 %382
          %385 = vst.msk [vmem:[#allocation4 + $0x7] sm:$0x1] %vm300, %v383
          %v386 = vld [vmem:[#allocation3] sm:$0x1]
          %v388 = vlaneseq
          %v389 = vshrl.u32 %v388, 7
          %v390 = vsub.s32 0, %v389
          %v391 = vrot.slane %v386, %v390
          %392 = vrot.lane.b32.xlu0 %v391, 67
          %v393 = vpop.permute.xlu0 %392
          %395 = vst.msk [vmem:[#allocation5 + $0x7] sm:$0x1] %vm300, %v393
          %v396 = vld [vmem:[#allocation2] sm:$0x1]
          %v397 = vmul.f32 %v396, 0.25
          %v399 = vlaneseq
          %v400 = vshrl.u32 %v399, 7
          %v401 = vsub.s32 0, %v400
          %v402 = vrot.slane %v397, %v401
          %403 = vrot.lane.b32.xlu0 %v402, 51
          %v404 = vpop.permute.xlu0 %403
          %406 = vst.msk [vmem:[#allocation4 + $0x8] sm:$0x1] %vm300, %v404
          %v407 = vld [vmem:[#allocation3] sm:$0x1]
          %v409 = vlaneseq
          %v410 = vshrl.u32 %v409, 7
          %v411 = vsub.s32 0, %v410
          %v412 = vrot.slane %v407, %v411
          %413 = vrot.lane.b32.xlu0 %v412, 51
          %v414 = vpop.permute.xlu0 %413
          %416 = vst.msk [vmem:[#allocation5 + $0x8] sm:$0x1] %vm300, %v414
          %v417 = vld [vmem:[#allocation2] sm:$0x1]
          %v418 = vmul.f32 %v417, 0.25
          %v420 = vlaneseq
          %v421 = vshrl.u32 %v420, 7
          %v422 = vsub.s32 0, %v421
          %v423 = vrot.slane %v418, %v422
          %424 = vrot.lane.b32.xlu0 %v423, 35
          %v425 = vpop.permute.xlu0 %424
          %427 = vst.msk [vmem:[#allocation4 + $0x9] sm:$0x1] %vm300, %v425
          %v428 = vld [vmem:[#allocation3] sm:$0x1]
          %v430 = vlaneseq
          %v431 = vshrl.u32 %v430, 7
          %v432 = vsub.s32 0, %v431
          %v433 = vrot.slane %v428, %v432
          %434 = vrot.lane.b32.xlu0 %v433, 35
          %v435 = vpop.permute.xlu0 %434
          %437 = vst.msk [vmem:[#allocation5 + $0x9] sm:$0x1] %vm300, %v435
          %v438 = vld [vmem:[#allocation2] sm:$0x1]
          %v439 = vmul.f32 %v438, 0.25
          %v441 = vlaneseq
          %v442 = vshrl.u32 %v441, 7
          %v443 = vsub.s32 0, %v442
          %v444 = vrot.slane %v439, %v443
          %445 = vrot.lane.b32.xlu0 %v444, 19
          %v446 = vpop.permute.xlu0 %445
          %448 = vst.msk [vmem:[#allocation4 + $0xa] sm:$0x1] %vm300, %v446
          %v449 = vld [vmem:[#allocation3] sm:$0x1]
          %v451 = vlaneseq
          %v452 = vshrl.u32 %v451, 7
          %v453 = vsub.s32 0, %v452
          %v454 = vrot.slane %v449, %v453
          %455 = vrot.lane.b32.xlu0 %v454, 19
          %v456 = vpop.permute.xlu0 %455
          %458 = vst.msk [vmem:[#allocation5 + $0xa] sm:$0x1] %vm300, %v456
          %v459 = vld [vmem:[#allocation2 + $0x1] sm:$0x1]
          %v460 = vmul.f32 %v459, 0.25
          %v462 = vlaneseq
          %v463 = vshrl.u32 %v462, 7
          %v464 = vsub.s32 0, %v463
          %v465 = vrot.slane %v460, %v464
          %466 = vrot.lane.b32.xlu0 %v465, 3
          %v467 = vpop.permute.xlu0 %466
          %469 = vst.msk [vmem:[#allocation4 + $0xb] sm:$0x1] %vm300, %v467
          %v470 = vld [vmem:[#allocation3 + $0x1] sm:$0x1]
          %v472 = vlaneseq
          %v473 = vshrl.u32 %v472, 7
          %v474 = vsub.s32 0, %v473
          %v475 = vrot.slane %v470, %v474
          %476 = vrot.lane.b32.xlu0 %v475, 3
          %v477 = vpop.permute.xlu0 %476
          %479 = vst.msk [vmem:[#allocation5 + $0xb] sm:$0x1] %vm300, %v477
          %v480 = vld [vmem:[#allocation2 + $0x1] sm:$0x1]
          %v481 = vmul.f32 %v480, 0.25
          %v483 = vlaneseq
          %v484 = vshrl.u32 %v483, 7
          %v485 = vsub.s32 0, %v484
          %v486 = vrot.slane %v481, %v485
          %487 = vrot.lane.b32.xlu0 %v486, 115
          %v488 = vpop.permute.xlu0 %487
          %490 = vst.msk [vmem:[#allocation4 + $0xc] sm:$0x1] %vm300, %v488
          %v491 = vld [vmem:[#allocation3 + $0x1] sm:$0x1]
          %v493 = vlaneseq
          %v494 = vshrl.u32 %v493, 7
          %v495 = vsub.s32 0, %v494
          %v496 = vrot.slane %v491, %v495
          %497 = vrot.lane.b32.xlu0 %v496, 115
          %v498 = vpop.permute.xlu0 %497
          %500 = vst.msk [vmem:[#allocation5 + $0xc] sm:$0x1] %vm300, %v498
          %v501 = vld [vmem:[#allocation2 + $0x1] sm:$0x1]
          %v502 = vmul.f32 %v501, 0.25
          %v504 = vlaneseq
          %v505 = vshrl.u32 %v504, 7
          %v506 = vsub.s32 0, %v505
          %v507 = vrot.slane %v502, %v506
          %508 = vrot.lane.b32.xlu0 %v507, 99
          %v509 = vpop.permute.xlu0 %508
          %511 = vst.msk [vmem:[#allocation4 + $0xd] sm:$0x1] %vm300, %v509
          %v512 = vld [vmem:[#allocation3 + $0x1] sm:$0x1]
          %v514 = vlaneseq
          %v515 = vshrl.u32 %v514, 7
          %v516 = vsub.s32 0, %v515
          %v517 = vrot.slane %v512, %v516
          %518 = vrot.lane.b32.xlu0 %v517, 99
          %v519 = vpop.permute.xlu0 %518
          %521 = vst.msk [vmem:[#allocation5 + $0xd] sm:$0x1] %vm300, %v519
          %v522 = vld [vmem:[#allocation2 + $0x1] sm:$0x1]
          %v523 = vmul.f32 %v522, 0.25
          %v525 = vlaneseq
          %v526 = vshrl.u32 %v525, 7
          %v527 = vsub.s32 0, %v526
          %v528 = vrot.slane %v523, %v527
          %529 = vrot.lane.b32.xlu0 %v528, 83
          %v530 = vpop.permute.xlu0 %529
          %532 = vst.msk [vmem:[#allocation4 + $0xe] sm:$0x1] %vm300, %v530
          %v533 = vld [vmem:[#allocation3 + $0x1] sm:$0x1]
          %v535 = vlaneseq
          %v536 = vshrl.u32 %v535, 7
          %v537 = vsub.s32 0, %v536
          %v538 = vrot.slane %v533, %v537
          %539 = vrot.lane.b32.xlu0 %v538, 83
          %v540 = vpop.permute.xlu0 %539
          %542 = vst.msk [vmem:[#allocation5 + $0xe] sm:$0x1] %vm300, %v540
          %v543 = vld [vmem:[#allocation2 + $0x1] sm:$0x1]
          %v544 = vmul.f32 %v543, 0.25
          %v546 = vlaneseq
          %v547 = vshrl.u32 %v546, 7
          %v548 = vsub.s32 0, %v547
          %v549 = vrot.slane %v544, %v548
          %550 = vrot.lane.b32.xlu0 %v549, 67
          %v551 = vpop.permute.xlu0 %550
          %553 = vst.msk [vmem:[#allocation4 + $0xf] sm:$0x1] %vm300, %v551
          %v554 = vld [vmem:[#allocation3 + $0x1] sm:$0x1]
          %v556 = vlaneseq
          %v557 = vshrl.u32 %v556, 7
          %v558 = vsub.s32 0, %v557
          %v559 = vrot.slane %v554, %v558
          %560 = vrot.lane.b32.xlu0 %v559, 67
          %v561 = vpop.permute.xlu0 %560
          %563 = vst.msk [vmem:[#allocation5 + $0xf] sm:$0x1] %vm300, %v561
          %v564 = vld [vmem:[#allocation2 + $0x1] sm:$0x1]
          %v565 = vmul.f32 %v564, 0.25
          %v567 = vlaneseq
          %v568 = vshrl.u32 %v567, 7
          %v569 = vsub.s32 0, %v568
          %v570 = vrot.slane %v565, %v569
          %571 = vrot.lane.b32.xlu0 %v570, 51
          %v572 = vpop.permute.xlu0 %571
          %574 = vst.msk [vmem:[#allocation4 + $0x10] sm:$0x1] %vm300, %v572
          %v575 = vld [vmem:[#allocation3 + $0x1] sm:$0x1]
          %v577 = vlaneseq
          %v578 = vshrl.u32 %v577, 7
          %v579 = vsub.s32 0, %v578
          %v580 = vrot.slane %v575, %v579
          %581 = vrot.lane.b32.xlu0 %v580, 51
          %v582 = vpop.permute.xlu0 %581
          %584 = vst.msk [vmem:[#allocation5 + $0x10] sm:$0x1] %vm300, %v582
          %v585 = vld [vmem:[#allocation2 + $0x1] sm:$0x1]
          %v586 = vmul.f32 %v585, 0.25
          %v588 = vlaneseq
          %v589 = vshrl.u32 %v588, 7
          %v590 = vsub.s32 0, %v589
          %v591 = vrot.slane %v586, %v590
          %592 = vrot.lane.b32.xlu0 %v591, 35
          %v593 = vpop.permute.xlu0 %592
          %595 = vst.msk [vmem:[#allocation4 + $0x11] sm:$0x1] %vm300, %v593
          %v596 = vld [vmem:[#allocation3 + $0x1] sm:$0x1]
          %v598 = vlaneseq
          %v599 = vshrl.u32 %v598, 7
          %v600 = vsub.s32 0, %v599
          %v601 = vrot.slane %v596, %v600
          %602 = vrot.lane.b32.xlu0 %v601, 35
          %v603 = vpop.permute.xlu0 %602
          %605 = vst.msk [vmem:[#allocation5 + $0x11] sm:$0x1] %vm300, %v603
          %v606 = vld [vmem:[#allocation2 + $0x1] sm:$0x1]
          %v607 = vmul.f32 %v606, 0.25
          %v609 = vlaneseq
          %v610 = vshrl.u32 %v609, 7
          %v611 = vsub.s32 0, %v610
          %v612 = vrot.slane %v607, %v611
          %613 = vrot.lane.b32.xlu0 %v612, 19
          %v614 = vpop.permute.xlu0 %613
          %616 = vst.msk [vmem:[#allocation4 + $0x12] sm:$0x1] %vm300, %v614
          %v617 = vld [vmem:[#allocation3 + $0x1] sm:$0x1]
          %v619 = vlaneseq
          %v620 = vshrl.u32 %v619, 7
          %v621 = vsub.s32 0, %v620
          %v622 = vrot.slane %v617, %v621
          %623 = vrot.lane.b32.xlu0 %v622, 19
          %v624 = vpop.permute.xlu0 %623
          %626 = vst.msk [vmem:[#allocation5 + $0x12] sm:$0x1] %vm300, %v624
          %v627 = vld [vmem:[#allocation4] sm:$0xff]
          %v628 = vld [vmem:[#allocation4 + $0x8] sm:$0xff]
          %v629 = vld [vmem:[#allocation4 + $0x10] sm:$0x3f]
          %s630 = sld [smem:[#allocation10]]
          %v631 = vstv %s630
          %v632 = vmul.f32 %v631, %v627
          %v633 = vmul.f32 %v631, %v628
          %v634 = vadd.f32 %v632, 0.0
          %v635 = vadd.f32 %v633, 0.0
          %s636 = sld [smem:[#allocation10 + $0x7]]
          %v637 = vstv %s636
          %v638 = vmul.f32 %v637, %v627
          %v639 = vmul.f32 %v637, %v628
          %v640 = vmul.f32 %v637, %v629
          %vm644 = vcmask 1046528
          %v645 = vrot.slane %v638, 1
          %v646 = vrot.slane %v639, 1
          %v647 = vsel %vm644, %v645, %v646
          %v648 = vrot.slane %v640, 1
          %v649 = vsel %vm644, %v646, %v648
          %v652 = vadd.f32 %v634, %v647
          %v653 = vadd.f32 %v635, %v649
          %s654 = sld [smem:[#allocation10 + $0xe]]
          %v655 = vstv %s654
          %v656 = vmul.f32 %v655, %v627
          %v657 = vmul.f32 %v655, %v628
          %v658 = vmul.f32 %v655, %v629
          %vm662 = vcmask 1045504
          %v663 = vrot.slane %v656, 2
          %v664 = vrot.slane %v657, 2
          %v665 = vsel %vm662, %v663, %v664
          %v666 = vrot.slane %v658, 2
          %v667 = vsel %vm662, %v664, %v666
          %v670 = vadd.f32 %v652, %v665
          %v671 = vadd.f32 %v653, %v667
          %s672 = sld [smem:[#allocation10 + $0x15]]
          %v673 = vstv %s672
          %v674 = vmul.f32 %v673, %v627
          %v675 = vmul.f32 %v673, %v628
          %v676 = vmul.f32 %v673, %v629
          %vm680 = vcmask 1044480
          %v681 = vrot.slane %v674, 3
          %v682 = vrot.slane %v675, 3
          %v683 = vsel %vm680, %v681, %v682
          %v684 = vrot.slane %v676, 3
          %v685 = vsel %vm680, %v682, %v684
          %v688 = vadd.f32 %v670, %v683
          %v689 = vadd.f32 %v671, %v685
          %s690 = sld [smem:[#allocation10 + $0x1c]]
          %v691 = vstv %s690
          %v692 = vmul.f32 %v691, %v627
          %v693 = vmul.f32 %v691, %v628
          %v694 = vmul.f32 %v691, %v629
          %v698 = vrot.slane %v692, 4
          %v699 = vrot.slane %v693, 4
          %v700 = vsel %vm205, %v698, %v699
          %v701 = vrot.slane %v694, 4
          %v702 = vsel %vm205, %v699, %v701
          %v705 = vadd.f32 %v688, %v700
          %v706 = vadd.f32 %v689, %v702
          %s707 = sld [smem:[#allocation10 + $0x23]]
          %v708 = vstv %s707
          %v709 = vmul.f32 %v708, %v627
          %v710 = vmul.f32 %v708, %v628
          %v711 = vmul.f32 %v708, %v629
          %vm715 = vcmask 1042432
          %v716 = vrot.slane %v709, 5
          %v717 = vrot.slane %v710, 5
          %v718 = vsel %vm715, %v716, %v717
          %v719 = vrot.slane %v711, 5
          %v720 = vsel %vm715, %v717, %v719
          %v723 = vadd.f32 %v705, %v718
          %v724 = vadd.f32 %v706, %v720
          %s725 = sld [smem:[#allocation10 + $0x2a]]
          %v726 = vstv %s725
          %v727 = vmul.f32 %v726, %v627
          %v728 = vmul.f32 %v726, %v628
          %v729 = vmul.f32 %v726, %v629
          %vm733 = vcmask 1041408
          %v734 = vrot.slane %v727, 6
          %v735 = vrot.slane %v728, 6
          %v736 = vsel %vm733, %v734, %v735
          %v737 = vrot.slane %v729, 6
          %v738 = vsel %vm733, %v735, %v737
          %v741 = vadd.f32 %v723, %v736
          %v742 = vadd.f32 %v724, %v738
          %s743 = sld [smem:[#allocation10 + $0x1]]
          %v744 = vstv %s743
          %v745 = vmul.f32 %v744, %v627
          %v746 = vmul.f32 %v744, %v628
          %749 = vrot.lane.b32.xlu0 %v745, 127
          %v750 = vpop.permute.xlu0 %749
          %751 = vrot.lane.b32.xlu0 %v746, 127
          %v752 = vpop.permute.xlu0 %751
          %v755 = vadd.f32 %v741, %v750
          %v756 = vadd.f32 %v742, %v752
          %s757 = sld [smem:[#allocation10 + $0x8]]
          %v758 = vstv %s757
          %v759 = vmul.f32 %v758, %v627
          %v760 = vmul.f32 %v758, %v628
          %v761 = vmul.f32 %v758, %v629
          %v765 = vrot.slane %v759, 1
          %v766 = vrot.slane %v760, 1
          %v767 = vsel %vm644, %v765, %v766
          %v768 = vrot.slane %v761, 1
          %v769 = vsel %vm644, %v766, %v768
          %770 = vrot.lane.b32.xlu0 %v767, 127
          %v771 = vpop.permute.xlu0 %770
          %772 = vrot.lane.b32.xlu0 %v769, 127
          %v773 = vpop.permute.xlu0 %772
          %v776 = vadd.f32 %v755, %v771
          %v777 = vadd.f32 %v756, %v773
          %s778 = sld [smem:[#allocation10 + $0xf]]
          %v779 = vstv %s778
          %v780 = vmul.f32 %v779, %v627
          %v781 = vmul.f32 %v779, %v628
          %v782 = vmul.f32 %v779, %v629
          %v786 = vrot.slane %v780, 2
          %v787 = vrot.slane %v781, 2
          %v788 = vsel %vm662, %v786, %v787
          %v789 = vrot.slane %v782, 2
          %v790 = vsel %vm662, %v787, %v789
          %791 = vrot.lane.b32.xlu0 %v788, 127
          %v792 = vpop.permute.xlu0 %791
          %793 = vrot.lane.b32.xlu0 %v790, 127
          %v794 = vpop.permute.xlu0 %793
          %v797 = vadd.f32 %v776, %v792
          %v798 = vadd.f32 %v777, %v794
          %s799 = sld [smem:[#allocation10 + $0x16]]
          %v800 = vstv %s799
          %v801 = vmul.f32 %v800, %v627
          %v802 = vmul.f32 %v800, %v628
          %v803 = vmul.f32 %v800, %v629
          %v807 = vrot.slane %v801, 3
          %v808 = vrot.slane %v802, 3
          %v809 = vsel %vm680, %v807, %v808
          %v810 = vrot.slane %v803, 3
          %v811 = vsel %vm680, %v808, %v810
          %812 = vrot.lane.b32.xlu0 %v809, 127
          %v813 = vpop.permute.xlu0 %812
          %814 = vrot.lane.b32.xlu0 %v811, 127
          %v815 = vpop.permute.xlu0 %814
          %v818 = vadd.f32 %v797, %v813
          %v819 = vadd.f32 %v798, %v815
          %s820 = sld [smem:[#allocation10 + $0x1d]]
          %v821 = vstv %s820
          %v822 = vmul.f32 %v821, %v627
          %v823 = vmul.f32 %v821, %v628
          %v824 = vmul.f32 %v821, %v629
          %v828 = vrot.slane %v822, 4
          %v829 = vrot.slane %v823, 4
          %v830 = vsel %vm205, %v828, %v829
          %v831 = vrot.slane %v824, 4
          %v832 = vsel %vm205, %v829, %v831
          %833 = vrot.lane.b32.xlu0 %v830, 127
          %v834 = vpop.permute.xlu0 %833
          %835 = vrot.lane.b32.xlu0 %v832, 127
          %v836 = vpop.permute.xlu0 %835
          %v839 = vadd.f32 %v818, %v834
          %v840 = vadd.f32 %v819, %v836
          %s841 = sld [smem:[#allocation10 + $0x24]]
          %v842 = vstv %s841
          %v843 = vmul.f32 %v842, %v627
          %v844 = vmul.f32 %v842, %v628
          %v845 = vmul.f32 %v842, %v629
          %v849 = vrot.slane %v843, 5
          %v850 = vrot.slane %v844, 5
          %v851 = vsel %vm715, %v849, %v850
          %v852 = vrot.slane %v845, 5
          %v853 = vsel %vm715, %v850, %v852
          %854 = vrot.lane.b32.xlu0 %v851, 127
          %v855 = vpop.permute.xlu0 %854
          %856 = vrot.lane.b32.xlu0 %v853, 127
          %v857 = vpop.permute.xlu0 %856
          %v860 = vadd.f32 %v839, %v855
          %v861 = vadd.f32 %v840, %v857
          %s862 = sld [smem:[#allocation10 + $0x2b]]
          %v863 = vstv %s862
          %v864 = vmul.f32 %v863, %v627
          %v865 = vmul.f32 %v863, %v628
          %v866 = vmul.f32 %v863, %v629
          %v870 = vrot.slane %v864, 6
          %v871 = vrot.slane %v865, 6
          %v872 = vsel %vm733, %v870, %v871
          %v873 = vrot.slane %v866, 6
          %v874 = vsel %vm733, %v871, %v873
          %875 = vrot.lane.b32.xlu0 %v872, 127
          %v876 = vpop.permute.xlu0 %875
          %877 = vrot.lane.b32.xlu0 %v874, 127
          %v878 = vpop.permute.xlu0 %877
          %v881 = vadd.f32 %v860, %v876
          %v882 = vadd.f32 %v861, %v878
          %s883 = sld [smem:[#allocation10 + $0x2]]
          %v884 = vstv %s883
          %v885 = vmul.f32 %v884, %v627
          %v886 = vmul.f32 %v884, %v628
          %889 = vrot.lane.b32.xlu0 %v885, 126
          %v890 = vpop.permute.xlu0 %889
          %891 = vrot.lane.b32.xlu0 %v886, 126
          %v892 = vpop.permute.xlu0 %891
          %v895 = vadd.f32 %v881, %v890
          %v896 = vadd.f32 %v882, %v892
          %s897 = sld [smem:[#allocation10 + $0x9]]
          %v898 = vstv %s897
          %v899 = vmul.f32 %v898, %v627
          %v900 = vmul.f32 %v898, %v628
          %v901 = vmul.f32 %v898, %v629
          %v905 = vrot.slane %v899, 1
          %v906 = vrot.slane %v900, 1
          %v907 = vsel %vm644, %v905, %v906
          %v908 = vrot.slane %v901, 1
          %v909 = vsel %vm644, %v906, %v908
          %910 = vrot.lane.b32.xlu0 %v907, 126
          %v911 = vpop.permute.xlu0 %910
          %912 = vrot.lane.b32.xlu0 %v909, 126
          %v913 = vpop.permute.xlu0 %912
          %v916 = vadd.f32 %v895, %v911
          %v917 = vadd.f32 %v896, %v913
          %s918 = sld [smem:[#allocation10 + $0x10]]
          %v919 = vstv %s918
          %v920 = vmul.f32 %v919, %v627
          %v921 = vmul.f32 %v919, %v628
          %v922 = vmul.f32 %v919, %v629
          %v926 = vrot.slane %v920, 2
          %v927 = vrot.slane %v921, 2
          %v928 = vsel %vm662, %v926, %v927
          %v929 = vrot.slane %v922, 2
          %v930 = vsel %vm662, %v927, %v929
          %931 = vrot.lane.b32.xlu0 %v928, 126
          %v932 = vpop.permute.xlu0 %931
          %933 = vrot.lane.b32.xlu0 %v930, 126
          %v934 = vpop.permute.xlu0 %933
          %v937 = vadd.f32 %v916, %v932
          %v938 = vadd.f32 %v917, %v934
          %s939 = sld [smem:[#allocation10 + $0x17]]
          %v940 = vstv %s939
          %v941 = vmul.f32 %v940, %v627
          %v942 = vmul.f32 %v940, %v628
          %v943 = vmul.f32 %v940, %v629
          %v947 = vrot.slane %v941, 3
          %v948 = vrot.slane %v942, 3
          %v949 = vsel %vm680, %v947, %v948
          %v950 = vrot.slane %v943, 3
          %v951 = vsel %vm680, %v948, %v950
          %952 = vrot.lane.b32.xlu0 %v949, 126
          %v953 = vpop.permute.xlu0 %952
          %954 = vrot.lane.b32.xlu0 %v951, 126
          %v955 = vpop.permute.xlu0 %954
          %v958 = vadd.f32 %v937, %v953
          %v959 = vadd.f32 %v938, %v955
          %s960 = sld [smem:[#allocation10 + $0x1e]]
          %v961 = vstv %s960
          %v962 = vmul.f32 %v961, %v627
          %v963 = vmul.f32 %v961, %v628
          %v964 = vmul.f32 %v961, %v629
          %v968 = vrot.slane %v962, 4
          %v969 = vrot.slane %v963, 4
          %v970 = vsel %vm205, %v968, %v969
          %v971 = vrot.slane %v964, 4
          %v972 = vsel %vm205, %v969, %v971
          %973 = vrot.lane.b32.xlu0 %v970, 126
          %v974 = vpop.permute.xlu0 %973
          %975 = vrot.lane.b32.xlu0 %v972, 126
          %v976 = vpop.permute.xlu0 %975
          %v979 = vadd.f32 %v958, %v974
          %v980 = vadd.f32 %v959, %v976
          %s981 = sld [smem:[#allocation10 + $0x25]]
          %v982 = vstv %s981
          %v983 = vmul.f32 %v982, %v627
          %v984 = vmul.f32 %v982, %v628
          %v985 = vmul.f32 %v982, %v629
          %v989 = vrot.slane %v983, 5
          %v990 = vrot.slane %v984, 5
          %v991 = vsel %vm715, %v989, %v990
          %v992 = vrot.slane %v985, 5
          %v993 = vsel %vm715, %v990, %v992
          %994 = vrot.lane.b32.xlu0 %v991, 126
          %v995 = vpop.permute.xlu0 %994
          %996 = vrot.lane.b32.xlu0 %v993, 126
          %v997 = vpop.permute.xlu0 %996
          %v1000 = vadd.f32 %v979, %v995
          %v1001 = vadd.f32 %v980, %v997
          %s1002 = sld [smem:[#allocation10 + $0x2c]]
          %v1003 = vstv %s1002
          %v1004 = vmul.f32 %v1003, %v627
          %v1005 = vmul.f32 %v1003, %v628
          %v1006 = vmul.f32 %v1003, %v629
          %v1010 = vrot.slane %v1004, 6
          %v1011 = vrot.slane %v1005, 6
          %v1012 = vsel %vm733, %v1010, %v1011
          %v1013 = vrot.slane %v1006, 6
          %v1014 = vsel %vm733, %v1011, %v1013
          %1015 = vrot.lane.b32.xlu0 %v1012, 126
          %v1016 = vpop.permute.xlu0 %1015
          %1017 = vrot.lane.b32.xlu0 %v1014, 126
          %v1018 = vpop.permute.xlu0 %1017
          %v1021 = vadd.f32 %v1000, %v1016
          %v1022 = vadd.f32 %v1001, %v1018
          %s1023 = sld [smem:[#allocation10 + $0x3]]
          %v1024 = vstv %s1023
          %v1025 = vmul.f32 %v1024, %v627
          %v1026 = vmul.f32 %v1024, %v628
          %1029 = vrot.lane.b32.xlu0 %v1025, 125
          %v1030 = vpop.permute.xlu0 %1029
          %1031 = vrot.lane.b32.xlu0 %v1026, 125
          %v1032 = vpop.permute.xlu0 %1031
          %v1035 = vadd.f32 %v1021, %v1030
          %v1036 = vadd.f32 %v1022, %v1032
          %s1037 = sld [smem:[#allocation10 + $0xa]]
          %v1038 = vstv %s1037
          %v1039 = vmul.f32 %v1038, %v627
          %v1040 = vmul.f32 %v1038, %v628
          %v1041 = vmul.f32 %v1038, %v629
          %v1045 = vrot.slane %v1039, 1
          %v1046 = vrot.slane %v1040, 1
          %v1047 = vsel %vm644, %v1045, %v1046
          %v1048 = vrot.slane %v1041, 1
          %v1049 = vsel %vm644, %v1046, %v1048
          %1050 = vrot.lane.b32.xlu0 %v1047, 125
          %v1051 = vpop.permute.xlu0 %1050
          %1052 = vrot.lane.b32.xlu0 %v1049, 125
          %v1053 = vpop.permute.xlu0 %1052
          %v1056 = vadd.f32 %v1035, %v1051
          %v1057 = vadd.f32 %v1036, %v1053
          %s1058 = sld [smem:[#allocation10 + $0x11]]
          %v1059 = vstv %s1058
          %v1060 = vmul.f32 %v1059, %v627
          %v1061 = vmul.f32 %v1059, %v628
          %v1062 = vmul.f32 %v1059, %v629
          %v1066 = vrot.slane %v1060, 2
          %v1067 = vrot.slane %v1061, 2
          %v1068 = vsel %vm662, %v1066, %v1067
          %v1069 = vrot.slane %v1062, 2
          %v1070 = vsel %vm662, %v1067, %v1069
          %1071 = vrot.lane.b32.xlu0 %v1068, 125
          %v1072 = vpop.permute.xlu0 %1071
          %1073 = vrot.lane.b32.xlu0 %v1070, 125
          %v1074 = vpop.permute.xlu0 %1073
          %v1077 = vadd.f32 %v1056, %v1072
          %v1078 = vadd.f32 %v1057, %v1074
          %s1079 = sld [smem:[#allocation10 + $0x18]]
          %v1080 = vstv %s1079
          %v1081 = vmul.f32 %v1080, %v627
          %v1082 = vmul.f32 %v1080, %v628
          %v1083 = vmul.f32 %v1080, %v629
          %v1087 = vrot.slane %v1081, 3
          %v1088 = vrot.slane %v1082, 3
          %v1089 = vsel %vm680, %v1087, %v1088
          %v1090 = vrot.slane %v1083, 3
          %v1091 = vsel %vm680, %v1088, %v1090
          %1092 = vrot.lane.b32.xlu0 %v1089, 125
          %v1093 = vpop.permute.xlu0 %1092
          %1094 = vrot.lane.b32.xlu0 %v1091, 125
          %v1095 = vpop.permute.xlu0 %1094
          %v1098 = vadd.f32 %v1077, %v1093
          %v1099 = vadd.f32 %v1078, %v1095
          %s1100 = sld [smem:[#allocation10 + $0x1f]]
          %v1101 = vstv %s1100
          %v1102 = vmul.f32 %v1101, %v627
          %v1103 = vmul.f32 %v1101, %v628
          %v1104 = vmul.f32 %v1101, %v629
          %v1108 = vrot.slane %v1102, 4
          %v1109 = vrot.slane %v1103, 4
          %v1110 = vsel %vm205, %v1108, %v1109
          %v1111 = vrot.slane %v1104, 4
          %v1112 = vsel %vm205, %v1109, %v1111
          %1113 = vrot.lane.b32.xlu0 %v1110, 125
          %v1114 = vpop.permute.xlu0 %1113
          %1115 = vrot.lane.b32.xlu0 %v1112, 125
          %v1116 = vpop.permute.xlu0 %1115
          %v1119 = vadd.f32 %v1098, %v1114
          %v1120 = vadd.f32 %v1099, %v1116
          %s1121 = sld [smem:[#allocation10 + $0x26]]
          %v1122 = vstv %s1121
          %v1123 = vmul.f32 %v1122, %v627
          %v1124 = vmul.f32 %v1122, %v628
          %v1125 = vmul.f32 %v1122, %v629
          %v1129 = vrot.slane %v1123, 5
          %v1130 = vrot.slane %v1124, 5
          %v1131 = vsel %vm715, %v1129, %v1130
          %v1132 = vrot.slane %v1125, 5
          %v1133 = vsel %vm715, %v1130, %v1132
          %1134 = vrot.lane.b32.xlu0 %v1131, 125
          %v1135 = vpop.permute.xlu0 %1134
          %1136 = vrot.lane.b32.xlu0 %v1133, 125
          %v1137 = vpop.permute.xlu0 %1136
          %v1140 = vadd.f32 %v1119, %v1135
          %v1141 = vadd.f32 %v1120, %v1137
          %s1142 = sld [smem:[#allocation10 + $0x2d]]
          %v1143 = vstv %s1142
          %v1144 = vmul.f32 %v1143, %v627
          %v1145 = vmul.f32 %v1143, %v628
          %v1146 = vmul.f32 %v1143, %v629
          %v1150 = vrot.slane %v1144, 6
          %v1151 = vrot.slane %v1145, 6
          %v1152 = vsel %vm733, %v1150, %v1151
          %v1153 = vrot.slane %v1146, 6
          %v1154 = vsel %vm733, %v1151, %v1153
          %1155 = vrot.lane.b32.xlu0 %v1152, 125
          %v1156 = vpop.permute.xlu0 %1155
          %1157 = vrot.lane.b32.xlu0 %v1154, 125
          %v1158 = vpop.permute.xlu0 %1157
          %v1161 = vadd.f32 %v1140, %v1156
          %v1162 = vadd.f32 %v1141, %v1158
          %s1163 = sld [smem:[#allocation10 + $0x4]]
          %v1164 = vstv %s1163
          %v1165 = vmul.f32 %v1164, %v627
          %v1166 = vmul.f32 %v1164, %v628
          %1169 = vrot.lane.b32.xlu0 %v1165, 124
          %v1170 = vpop.permute.xlu0 %1169
          %1171 = vrot.lane.b32.xlu0 %v1166, 124
          %v1172 = vpop.permute.xlu0 %1171
          %v1175 = vadd.f32 %v1161, %v1170
          %v1176 = vadd.f32 %v1162, %v1172
          %s1177 = sld [smem:[#allocation10 + $0xb]]
          %v1178 = vstv %s1177
          %v1179 = vmul.f32 %v1178, %v627
          %v1180 = vmul.f32 %v1178, %v628
          %v1181 = vmul.f32 %v1178, %v629
          %v1185 = vrot.slane %v1179, 1
          %v1186 = vrot.slane %v1180, 1
          %v1187 = vsel %vm644, %v1185, %v1186
          %v1188 = vrot.slane %v1181, 1
          %v1189 = vsel %vm644, %v1186, %v1188
          %1190 = vrot.lane.b32.xlu0 %v1187, 124
          %v1191 = vpop.permute.xlu0 %1190
          %1192 = vrot.lane.b32.xlu0 %v1189, 124
          %v1193 = vpop.permute.xlu0 %1192
          %v1196 = vadd.f32 %v1175, %v1191
          %v1197 = vadd.f32 %v1176, %v1193
          %s1198 = sld [smem:[#allocation10 + $0x12]]
          %v1199 = vstv %s1198
          %v1200 = vmul.f32 %v1199, %v627
          %v1201 = vmul.f32 %v1199, %v628
          %v1202 = vmul.f32 %v1199, %v629
          %v1206 = vrot.slane %v1200, 2
          %v1207 = vrot.slane %v1201, 2
          %v1208 = vsel %vm662, %v1206, %v1207
          %v1209 = vrot.slane %v1202, 2
          %v1210 = vsel %vm662, %v1207, %v1209
          %1211 = vrot.lane.b32.xlu0 %v1208, 124
          %v1212 = vpop.permute.xlu0 %1211
          %1213 = vrot.lane.b32.xlu0 %v1210, 124
          %v1214 = vpop.permute.xlu0 %1213
          %v1217 = vadd.f32 %v1196, %v1212
          %v1218 = vadd.f32 %v1197, %v1214
          %s1219 = sld [smem:[#allocation10 + $0x19]]
          %v1220 = vstv %s1219
          %v1221 = vmul.f32 %v1220, %v627
          %v1222 = vmul.f32 %v1220, %v628
          %v1223 = vmul.f32 %v1220, %v629
          %v1227 = vrot.slane %v1221, 3
          %v1228 = vrot.slane %v1222, 3
          %v1229 = vsel %vm680, %v1227, %v1228
          %v1230 = vrot.slane %v1223, 3
          %v1231 = vsel %vm680, %v1228, %v1230
          %1232 = vrot.lane.b32.xlu0 %v1229, 124
          %v1233 = vpop.permute.xlu0 %1232
          %1234 = vrot.lane.b32.xlu0 %v1231, 124
          %v1235 = vpop.permute.xlu0 %1234
          %v1238 = vadd.f32 %v1217, %v1233
          %v1239 = vadd.f32 %v1218, %v1235
          %s1240 = sld [smem:[#allocation10 + $0x20]]
          %v1241 = vstv %s1240
          %v1242 = vmul.f32 %v1241, %v627
          %v1243 = vmul.f32 %v1241, %v628
          %v1244 = vmul.f32 %v1241, %v629
          %v1248 = vrot.slane %v1242, 4
          %v1249 = vrot.slane %v1243, 4
          %v1250 = vsel %vm205, %v1248, %v1249
          %v1251 = vrot.slane %v1244, 4
          %v1252 = vsel %vm205, %v1249, %v1251
          %1253 = vrot.lane.b32.xlu0 %v1250, 124
          %v1254 = vpop.permute.xlu0 %1253
          %1255 = vrot.lane.b32.xlu0 %v1252, 124
          %v1256 = vpop.permute.xlu0 %1255
          %v1259 = vadd.f32 %v1238, %v1254
          %v1260 = vadd.f32 %v1239, %v1256
          %s1261 = sld [smem:[#allocation10 + $0x27]]
          %v1262 = vstv %s1261
          %v1263 = vmul.f32 %v1262, %v627
          %v1264 = vmul.f32 %v1262, %v628
          %v1265 = vmul.f32 %v1262, %v629
          %v1269 = vrot.slane %v1263, 5
          %v1270 = vrot.slane %v1264, 5
          %v1271 = vsel %vm715, %v1269, %v1270
          %v1272 = vrot.slane %v1265, 5
          %v1273 = vsel %vm715, %v1270, %v1272
          %1274 = vrot.lane.b32.xlu0 %v1271, 124
          %v1275 = vpop.permute.xlu0 %1274
          %1276 = vrot.lane.b32.xlu0 %v1273, 124
          %v1277 = vpop.permute.xlu0 %1276
          %v1280 = vadd.f32 %v1259, %v1275
          %v1281 = vadd.f32 %v1260, %v1277
          %s1282 = sld [smem:[#allocation10 + $0x2e]]
          %v1283 = vstv %s1282
          %v1284 = vmul.f32 %v1283, %v627
          %v1285 = vmul.f32 %v1283, %v628
          %v1286 = vmul.f32 %v1283, %v629
          %v1290 = vrot.slane %v1284, 6
          %v1291 = vrot.slane %v1285, 6
          %v1292 = vsel %vm733, %v1290, %v1291
          %v1293 = vrot.slane %v1286, 6
          %v1294 = vsel %vm733, %v1291, %v1293
          %1295 = vrot.lane.b32.xlu0 %v1292, 124
          %v1296 = vpop.permute.xlu0 %1295
          %1297 = vrot.lane.b32.xlu0 %v1294, 124
          %v1298 = vpop.permute.xlu0 %1297
          %v1301 = vadd.f32 %v1280, %v1296
          %v1302 = vadd.f32 %v1281, %v1298
          %s1303 = sld [smem:[#allocation10 + $0x5]]
          %v1304 = vstv %s1303
          %v1305 = vmul.f32 %v1304, %v627
          %v1306 = vmul.f32 %v1304, %v628
          %1309 = vrot.lane.b32.xlu0 %v1305, 123
          %v1310 = vpop.permute.xlu0 %1309
          %1311 = vrot.lane.b32.xlu0 %v1306, 123
          %v1312 = vpop.permute.xlu0 %1311
          %v1315 = vadd.f32 %v1301, %v1310
          %v1316 = vadd.f32 %v1302, %v1312
          %s1317 = sld [smem:[#allocation10 + $0xc]]
          %v1318 = vstv %s1317
          %v1319 = vmul.f32 %v1318, %v627
          %v1320 = vmul.f32 %v1318, %v628
          %v1321 = vmul.f32 %v1318, %v629
          %v1325 = vrot.slane %v1319, 1
          %v1326 = vrot.slane %v1320, 1
          %v1327 = vsel %vm644, %v1325, %v1326
          %v1328 = vrot.slane %v1321, 1
          %v1329 = vsel %vm644, %v1326, %v1328
          %1330 = vrot.lane.b32.xlu0 %v1327, 123
          %v1331 = vpop.permute.xlu0 %1330
          %1332 = vrot.lane.b32.xlu0 %v1329, 123
          %v1333 = vpop.permute.xlu0 %1332
          %v1336 = vadd.f32 %v1315, %v1331
          %v1337 = vadd.f32 %v1316, %v1333
          %s1338 = sld [smem:[#allocation10 + $0x13]]
          %v1339 = vstv %s1338
          %v1340 = vmul.f32 %v1339, %v627
          %v1341 = vmul.f32 %v1339, %v628
          %v1342 = vmul.f32 %v1339, %v629
          %v1346 = vrot.slane %v1340, 2
          %v1347 = vrot.slane %v1341, 2
          %v1348 = vsel %vm662, %v1346, %v1347
          %v1349 = vrot.slane %v1342, 2
          %v1350 = vsel %vm662, %v1347, %v1349
          %1351 = vrot.lane.b32.xlu0 %v1348, 123
          %v1352 = vpop.permute.xlu0 %1351
          %1353 = vrot.lane.b32.xlu0 %v1350, 123
          %v1354 = vpop.permute.xlu0 %1353
          %v1357 = vadd.f32 %v1336, %v1352
          %v1358 = vadd.f32 %v1337, %v1354
          %s1359 = sld [smem:[#allocation10 + $0x1a]]
          %v1360 = vstv %s1359
          %v1361 = vmul.f32 %v1360, %v627
          %v1362 = vmul.f32 %v1360, %v628
          %v1363 = vmul.f32 %v1360, %v629
          %v1367 = vrot.slane %v1361, 3
          %v1368 = vrot.slane %v1362, 3
          %v1369 = vsel %vm680, %v1367, %v1368
          %v1370 = vrot.slane %v1363, 3
          %v1371 = vsel %vm680, %v1368, %v1370
          %1372 = vrot.lane.b32.xlu0 %v1369, 123
          %v1373 = vpop.permute.xlu0 %1372
          %1374 = vrot.lane.b32.xlu0 %v1371, 123
          %v1375 = vpop.permute.xlu0 %1374
          %v1378 = vadd.f32 %v1357, %v1373
          %v1379 = vadd.f32 %v1358, %v1375
          %s1380 = sld [smem:[#allocation10 + $0x21]]
          %v1381 = vstv %s1380
          %v1382 = vmul.f32 %v1381, %v627
          %v1383 = vmul.f32 %v1381, %v628
          %v1384 = vmul.f32 %v1381, %v629
          %v1388 = vrot.slane %v1382, 4
          %v1389 = vrot.slane %v1383, 4
          %v1390 = vsel %vm205, %v1388, %v1389
          %v1391 = vrot.slane %v1384, 4
          %v1392 = vsel %vm205, %v1389, %v1391
          %1393 = vrot.lane.b32.xlu0 %v1390, 123
          %v1394 = vpop.permute.xlu0 %1393
          %1395 = vrot.lane.b32.xlu0 %v1392, 123
          %v1396 = vpop.permute.xlu0 %1395
          %v1399 = vadd.f32 %v1378, %v1394
          %v1400 = vadd.f32 %v1379, %v1396
          %s1401 = sld [smem:[#allocation10 + $0x28]]
          %v1402 = vstv %s1401
          %v1403 = vmul.f32 %v1402, %v627
          %v1404 = vmul.f32 %v1402, %v628
          %v1405 = vmul.f32 %v1402, %v629
          %v1409 = vrot.slane %v1403, 5
          %v1410 = vrot.slane %v1404, 5
          %v1411 = vsel %vm715, %v1409, %v1410
          %v1412 = vrot.slane %v1405, 5
          %v1413 = vsel %vm715, %v1410, %v1412
          %1414 = vrot.lane.b32.xlu0 %v1411, 123
          %v1415 = vpop.permute.xlu0 %1414
          %1416 = vrot.lane.b32.xlu0 %v1413, 123
          %v1417 = vpop.permute.xlu0 %1416
          %v1420 = vadd.f32 %v1399, %v1415
          %v1421 = vadd.f32 %v1400, %v1417
          %s1422 = sld [smem:[#allocation10 + $0x2f]]
          %v1423 = vstv %s1422
          %v1424 = vmul.f32 %v1423, %v627
          %v1425 = vmul.f32 %v1423, %v628
          %v1426 = vmul.f32 %v1423, %v629
          %v1430 = vrot.slane %v1424, 6
          %v1431 = vrot.slane %v1425, 6
          %v1432 = vsel %vm733, %v1430, %v1431
          %v1433 = vrot.slane %v1426, 6
          %v1434 = vsel %vm733, %v1431, %v1433
          %1435 = vrot.lane.b32.xlu0 %v1432, 123
          %v1436 = vpop.permute.xlu0 %1435
          %1437 = vrot.lane.b32.xlu0 %v1434, 123
          %v1438 = vpop.permute.xlu0 %1437
          %v1441 = vadd.f32 %v1420, %v1436
          %v1442 = vadd.f32 %v1421, %v1438
          %s1443 = sld [smem:[#allocation10 + $0x6]]
          %v1444 = vstv %s1443
          %v1445 = vmul.f32 %v1444, %v627
          %v1446 = vmul.f32 %v1444, %v628
          %1449 = vrot.lane.b32.xlu0 %v1445, 122
          %v1450 = vpop.permute.xlu0 %1449
          %1451 = vrot.lane.b32.xlu0 %v1446, 122
          %v1452 = vpop.permute.xlu0 %1451
          %v1455 = vadd.f32 %v1441, %v1450
          %v1456 = vadd.f32 %v1442, %v1452
          %s1457 = sld [smem:[#allocation10 + $0xd]]
          %v1458 = vstv %s1457
          %v1459 = vmul.f32 %v1458, %v627
          %v1460 = vmul.f32 %v1458, %v628
          %v1461 = vmul.f32 %v1458, %v629
          %v1465 = vrot.slane %v1459, 1
          %v1466 = vrot.slane %v1460, 1
          %v1467 = vsel %vm644, %v1465, %v1466
          %v1468 = vrot.slane %v1461, 1
          %v1469 = vsel %vm644, %v1466, %v1468
          %1470 = vrot.lane.b32.xlu0 %v1467, 122
          %v1471 = vpop.permute.xlu0 %1470
          %1472 = vrot.lane.b32.xlu0 %v1469, 122
          %v1473 = vpop.permute.xlu0 %1472
          %v1476 = vadd.f32 %v1455, %v1471
          %v1477 = vadd.f32 %v1456, %v1473
          %s1478 = sld [smem:[#allocation10 + $0x14]]
          %v1479 = vstv %s1478
          %v1480 = vmul.f32 %v1479, %v627
          %v1481 = vmul.f32 %v1479, %v628
          %v1482 = vmul.f32 %v1479, %v629
          %v1486 = vrot.slane %v1480, 2
          %v1487 = vrot.slane %v1481, 2
          %v1488 = vsel %vm662, %v1486, %v1487
          %v1489 = vrot.slane %v1482, 2
          %v1490 = vsel %vm662, %v1487, %v1489
          %1491 = vrot.lane.b32.xlu0 %v1488, 122
          %v1492 = vpop.permute.xlu0 %1491
          %1493 = vrot.lane.b32.xlu0 %v1490, 122
          %v1494 = vpop.permute.xlu0 %1493
          %v1497 = vadd.f32 %v1476, %v1492
          %v1498 = vadd.f32 %v1477, %v1494
          %s1499 = sld [smem:[#allocation10 + $0x1b]]
          %v1500 = vstv %s1499
          %v1501 = vmul.f32 %v1500, %v627
          %v1502 = vmul.f32 %v1500, %v628
          %v1503 = vmul.f32 %v1500, %v629
          %v1507 = vrot.slane %v1501, 3
          %v1508 = vrot.slane %v1502, 3
          %v1509 = vsel %vm680, %v1507, %v1508
          %v1510 = vrot.slane %v1503, 3
          %v1511 = vsel %vm680, %v1508, %v1510
          %1512 = vrot.lane.b32.xlu0 %v1509, 122
          %v1513 = vpop.permute.xlu0 %1512
          %1514 = vrot.lane.b32.xlu0 %v1511, 122
          %v1515 = vpop.permute.xlu0 %1514
          %v1518 = vadd.f32 %v1497, %v1513
          %v1519 = vadd.f32 %v1498, %v1515
          %s1520 = sld [smem:[#allocation10 + $0x22]]
          %v1521 = vstv %s1520
          %v1522 = vmul.f32 %v1521, %v627
          %v1523 = vmul.f32 %v1521, %v628
          %v1524 = vmul.f32 %v1521, %v629
          %v1528 = vrot.slane %v1522, 4
          %v1529 = vrot.slane %v1523, 4
          %v1530 = vsel %vm205, %v1528, %v1529
          %v1531 = vrot.slane %v1524, 4
          %v1532 = vsel %vm205, %v1529, %v1531
          %1533 = vrot.lane.b32.xlu0 %v1530, 122
          %v1534 = vpop.permute.xlu0 %1533
          %1535 = vrot.lane.b32.xlu0 %v1532, 122
          %v1536 = vpop.permute.xlu0 %1535
          %v1539 = vadd.f32 %v1518, %v1534
          %v1540 = vadd.f32 %v1519, %v1536
          %s1541 = sld [smem:[#allocation10 + $0x29]]
          %v1542 = vstv %s1541
          %v1543 = vmul.f32 %v1542, %v627
          %v1544 = vmul.f32 %v1542, %v628
          %v1545 = vmul.f32 %v1542, %v629
          %v1549 = vrot.slane %v1543, 5
          %v1550 = vrot.slane %v1544, 5
          %v1551 = vsel %vm715, %v1549, %v1550
          %v1552 = vrot.slane %v1545, 5
          %v1553 = vsel %vm715, %v1550, %v1552
          %1554 = vrot.lane.b32.xlu0 %v1551, 122
          %v1555 = vpop.permute.xlu0 %1554
          %1556 = vrot.lane.b32.xlu0 %v1553, 122
          %v1557 = vpop.permute.xlu0 %1556
          %v1560 = vadd.f32 %v1539, %v1555
          %v1561 = vadd.f32 %v1540, %v1557
          %s1562 = sld [smem:[#allocation10 + $0x30]]
          %v1563 = vstv %s1562
          %v1564 = vmul.f32 %v1563, %v627
          %v1565 = vmul.f32 %v1563, %v628
          %v1566 = vmul.f32 %v1563, %v629
          %v1570 = vrot.slane %v1564, 6
          %v1571 = vrot.slane %v1565, 6
          %v1572 = vsel %vm733, %v1570, %v1571
          %v1573 = vrot.slane %v1566, 6
          %v1574 = vsel %vm733, %v1571, %v1573
          %1575 = vrot.lane.b32.xlu0 %v1572, 122
          %v1576 = vpop.permute.xlu0 %1575
          %1577 = vrot.lane.b32.xlu0 %v1574, 122
          %v1578 = vpop.permute.xlu0 %1577
          %v1581 = vadd.f32 %v1560, %v1576
          %v1582 = vadd.f32 %v1561, %v1578
          %v1583 = vld [vmem:[#allocation5] sm:$0xff]
          %v1584 = vld [vmem:[#allocation5 + $0x8] sm:$0xff]
          %v1585 = vld [vmem:[#allocation5 + $0x10] sm:$0x3f]
          %s1586 = sld [smem:[#allocation10 + $0x31]]
          %v1587 = vstv %s1586
          %v1588 = vmul.f32 %v1587, %v1583
          %v1589 = vmul.f32 %v1587, %v1584
          %v1590 = vadd.f32 %v1581, %v1588
          %v1591 = vadd.f32 %v1582, %v1589
          %s1592 = sld [smem:[#allocation10 + $0x38]]
          %v1593 = vstv %s1592
          %v1594 = vmul.f32 %v1593, %v1583
          %v1595 = vmul.f32 %v1593, %v1584
          %v1596 = vmul.f32 %v1593, %v1585
          %v1600 = vrot.slane %v1594, 1
          %v1601 = vrot.slane %v1595, 1
          %v1602 = vsel %vm644, %v1600, %v1601
          %v1603 = vrot.slane %v1596, 1
          %v1604 = vsel %vm644, %v1601, %v1603
          %v1607 = vadd.f32 %v1590, %v1602
          %v1608 = vadd.f32 %v1591, %v1604
          %s1609 = sld [smem:[#allocation10 + $0x3f]]
          %v1610 = vstv %s1609
          %v1611 = vmul.f32 %v1610, %v1583
          %v1612 = vmul.f32 %v1610, %v1584
          %v1613 = vmul.f32 %v1610, %v1585
          %v1617 = vrot.slane %v1611, 2
          %v1618 = vrot.slane %v1612, 2
          %v1619 = vsel %vm662, %v1617, %v1618
          %v1620 = vrot.slane %v1613, 2
          %v1621 = vsel %vm662, %v1618, %v1620
          %v1624 = vadd.f32 %v1607, %v1619
          %v1625 = vadd.f32 %v1608, %v1621
          %s1626 = sld [smem:[#allocation10 + $0x46]]
          %v1627 = vstv %s1626
          %v1628 = vmul.f32 %v1627, %v1583
          %v1629 = vmul.f32 %v1627, %v1584
          %v1630 = vmul.f32 %v1627, %v1585
          %v1634 = vrot.slane %v1628, 3
          %v1635 = vrot.slane %v1629, 3
          %v1636 = vsel %vm680, %v1634, %v1635
          %v1637 = vrot.slane %v1630, 3
          %v1638 = vsel %vm680, %v1635, %v1637
          %v1641 = vadd.f32 %v1624, %v1636
          %v1642 = vadd.f32 %v1625, %v1638
          %s1643 = sld [smem:[#allocation10 + $0x4d]]
          %v1644 = vstv %s1643
          %v1645 = vmul.f32 %v1644, %v1583
          %v1646 = vmul.f32 %v1644, %v1584
          %v1647 = vmul.f32 %v1644, %v1585
          %v1651 = vrot.slane %v1645, 4
          %v1652 = vrot.slane %v1646, 4
          %v1653 = vsel %vm205, %v1651, %v1652
          %v1654 = vrot.slane %v1647, 4
          %v1655 = vsel %vm205, %v1652, %v1654
          %v1658 = vadd.f32 %v1641, %v1653
          %v1659 = vadd.f32 %v1642, %v1655
          %s1660 = sld [smem:[#allocation10 + $0x54]]
          %v1661 = vstv %s1660
          %v1662 = vmul.f32 %v1661, %v1583
          %v1663 = vmul.f32 %v1661, %v1584
          %v1664 = vmul.f32 %v1661, %v1585
          %v1668 = vrot.slane %v1662, 5
          %v1669 = vrot.slane %v1663, 5
          %v1670 = vsel %vm715, %v1668, %v1669
          %v1671 = vrot.slane %v1664, 5
          %v1672 = vsel %vm715, %v1669, %v1671
          %v1675 = vadd.f32 %v1658, %v1670
          %v1676 = vadd.f32 %v1659, %v1672
          %s1677 = sld [smem:[#allocation10 + $0x5b]]
          %v1678 = vstv %s1677
          %v1679 = vmul.f32 %v1678, %v1583
          %v1680 = vmul.f32 %v1678, %v1584
          %v1681 = vmul.f32 %v1678, %v1585
          %v1685 = vrot.slane %v1679, 6
          %v1686 = vrot.slane %v1680, 6
          %v1687 = vsel %vm733, %v1685, %v1686
          %v1688 = vrot.slane %v1681, 6
          %v1689 = vsel %vm733, %v1686, %v1688
          %v1692 = vadd.f32 %v1675, %v1687
          %v1693 = vadd.f32 %v1676, %v1689
          %s1694 = sld [smem:[#allocation10 + $0x32]]
          %v1695 = vstv %s1694
          %v1696 = vmul.f32 %v1695, %v1583
          %v1697 = vmul.f32 %v1695, %v1584
          %1700 = vrot.lane.b32.xlu0 %v1696, 127
          %v1701 = vpop.permute.xlu0 %1700
          %1702 = vrot.lane.b32.xlu0 %v1697, 127
          %v1703 = vpop.permute.xlu0 %1702
          %v1706 = vadd.f32 %v1692, %v1701
          %v1707 = vadd.f32 %v1693, %v1703
          %s1708 = sld [smem:[#allocation10 + $0x39]]
          %v1709 = vstv %s1708
          %v1710 = vmul.f32 %v1709, %v1583
          %v1711 = vmul.f32 %v1709, %v1584
          %v1712 = vmul.f32 %v1709, %v1585
          %v1716 = vrot.slane %v1710, 1
          %v1717 = vrot.slane %v1711, 1
          %v1718 = vsel %vm644, %v1716, %v1717
          %v1719 = vrot.slane %v1712, 1
          %v1720 = vsel %vm644, %v1717, %v1719
          %1721 = vrot.lane.b32.xlu0 %v1718, 127
          %v1722 = vpop.permute.xlu0 %1721
          %1723 = vrot.lane.b32.xlu0 %v1720, 127
          %v1724 = vpop.permute.xlu0 %1723
          %v1727 = vadd.f32 %v1706, %v1722
          %v1728 = vadd.f32 %v1707, %v1724
          %s1729 = sld [smem:[#allocation10 + $0x40]]
          %v1730 = vstv %s1729
          %v1731 = vmul.f32 %v1730, %v1583
          %v1732 = vmul.f32 %v1730, %v1584
          %v1733 = vmul.f32 %v1730, %v1585
          %v1737 = vrot.slane %v1731, 2
          %v1738 = vrot.slane %v1732, 2
          %v1739 = vsel %vm662, %v1737, %v1738
          %v1740 = vrot.slane %v1733, 2
          %v1741 = vsel %vm662, %v1738, %v1740
          %1742 = vrot.lane.b32.xlu0 %v1739, 127
          %v1743 = vpop.permute.xlu0 %1742
          %1744 = vrot.lane.b32.xlu0 %v1741, 127
          %v1745 = vpop.permute.xlu0 %1744
          %v1748 = vadd.f32 %v1727, %v1743
          %v1749 = vadd.f32 %v1728, %v1745
          %s1750 = sld [smem:[#allocation10 + $0x47]]
          %v1751 = vstv %s1750
          %v1752 = vmul.f32 %v1751, %v1583
          %v1753 = vmul.f32 %v1751, %v1584
          %v1754 = vmul.f32 %v1751, %v1585
          %v1758 = vrot.slane %v1752, 3
          %v1759 = vrot.slane %v1753, 3
          %v1760 = vsel %vm680, %v1758, %v1759
          %v1761 = vrot.slane %v1754, 3
          %v1762 = vsel %vm680, %v1759, %v1761
          %1763 = vrot.lane.b32.xlu0 %v1760, 127
          %v1764 = vpop.permute.xlu0 %1763
          %1765 = vrot.lane.b32.xlu0 %v1762, 127
          %v1766 = vpop.permute.xlu0 %1765
          %v1769 = vadd.f32 %v1748, %v1764
          %v1770 = vadd.f32 %v1749, %v1766
          %s1771 = sld [smem:[#allocation10 + $0x4e]]
          %v1772 = vstv %s1771
          %v1773 = vmul.f32 %v1772, %v1583
          %v1774 = vmul.f32 %v1772, %v1584
          %v1775 = vmul.f32 %v1772, %v1585
          %v1779 = vrot.slane %v1773, 4
          %v1780 = vrot.slane %v1774, 4
          %v1781 = vsel %vm205, %v1779, %v1780
          %v1782 = vrot.slane %v1775, 4
          %v1783 = vsel %vm205, %v1780, %v1782
          %1784 = vrot.lane.b32.xlu0 %v1781, 127
          %v1785 = vpop.permute.xlu0 %1784
          %1786 = vrot.lane.b32.xlu0 %v1783, 127
          %v1787 = vpop.permute.xlu0 %1786
          %v1790 = vadd.f32 %v1769, %v1785
          %v1791 = vadd.f32 %v1770, %v1787
          %s1792 = sld [smem:[#allocation10 + $0x55]]
          %v1793 = vstv %s1792
          %v1794 = vmul.f32 %v1793, %v1583
          %v1795 = vmul.f32 %v1793, %v1584
          %v1796 = vmul.f32 %v1793, %v1585
          %v1800 = vrot.slane %v1794, 5
          %v1801 = vrot.slane %v1795, 5
          %v1802 = vsel %vm715, %v1800, %v1801
          %v1803 = vrot.slane %v1796, 5
          %v1804 = vsel %vm715, %v1801, %v1803
          %1805 = vrot.lane.b32.xlu0 %v1802, 127
          %v1806 = vpop.permute.xlu0 %1805
          %1807 = vrot.lane.b32.xlu0 %v1804, 127
          %v1808 = vpop.permute.xlu0 %1807
          %v1811 = vadd.f32 %v1790, %v1806
          %v1812 = vadd.f32 %v1791, %v1808
          %s1813 = sld [smem:[#allocation10 + $0x5c]]
          %v1814 = vstv %s1813
          %v1815 = vmul.f32 %v1814, %v1583
          %v1816 = vmul.f32 %v1814, %v1584
          %v1817 = vmul.f32 %v1814, %v1585
          %v1821 = vrot.slane %v1815, 6
          %v1822 = vrot.slane %v1816, 6
          %v1823 = vsel %vm733, %v1821, %v1822
          %v1824 = vrot.slane %v1817, 6
          %v1825 = vsel %vm733, %v1822, %v1824
          %1826 = vrot.lane.b32.xlu0 %v1823, 127
          %v1827 = vpop.permute.xlu0 %1826
          %1828 = vrot.lane.b32.xlu0 %v1825, 127
          %v1829 = vpop.permute.xlu0 %1828
          %v1832 = vadd.f32 %v1811, %v1827
          %v1833 = vadd.f32 %v1812, %v1829
          %s1834 = sld [smem:[#allocation10 + $0x33]]
          %v1835 = vstv %s1834
          %v1836 = vmul.f32 %v1835, %v1583
          %v1837 = vmul.f32 %v1835, %v1584
          %1840 = vrot.lane.b32.xlu0 %v1836, 126
          %v1841 = vpop.permute.xlu0 %1840
          %1842 = vrot.lane.b32.xlu0 %v1837, 126
          %v1843 = vpop.permute.xlu0 %1842
          %v1846 = vadd.f32 %v1832, %v1841
          %v1847 = vadd.f32 %v1833, %v1843
          %s1848 = sld [smem:[#allocation10 + $0x3a]]
          %v1849 = vstv %s1848
          %v1850 = vmul.f32 %v1849, %v1583
          %v1851 = vmul.f32 %v1849, %v1584
          %v1852 = vmul.f32 %v1849, %v1585
          %v1856 = vrot.slane %v1850, 1
          %v1857 = vrot.slane %v1851, 1
          %v1858 = vsel %vm644, %v1856, %v1857
          %v1859 = vrot.slane %v1852, 1
          %v1860 = vsel %vm644, %v1857, %v1859
          %1861 = vrot.lane.b32.xlu0 %v1858, 126
          %v1862 = vpop.permute.xlu0 %1861
          %1863 = vrot.lane.b32.xlu0 %v1860, 126
          %v1864 = vpop.permute.xlu0 %1863
          %v1867 = vadd.f32 %v1846, %v1862
          %v1868 = vadd.f32 %v1847, %v1864
          %s1869 = sld [smem:[#allocation10 + $0x41]]
          %v1870 = vstv %s1869
          %v1871 = vmul.f32 %v1870, %v1583
          %v1872 = vmul.f32 %v1870, %v1584
          %v1873 = vmul.f32 %v1870, %v1585
          %v1877 = vrot.slane %v1871, 2
          %v1878 = vrot.slane %v1872, 2
          %v1879 = vsel %vm662, %v1877, %v1878
          %v1880 = vrot.slane %v1873, 2
          %v1881 = vsel %vm662, %v1878, %v1880
          %1882 = vrot.lane.b32.xlu0 %v1879, 126
          %v1883 = vpop.permute.xlu0 %1882
          %1884 = vrot.lane.b32.xlu0 %v1881, 126
          %v1885 = vpop.permute.xlu0 %1884
          %v1888 = vadd.f32 %v1867, %v1883
          %v1889 = vadd.f32 %v1868, %v1885
          %s1890 = sld [smem:[#allocation10 + $0x48]]
          %v1891 = vstv %s1890
          %v1892 = vmul.f32 %v1891, %v1583
          %v1893 = vmul.f32 %v1891, %v1584
          %v1894 = vmul.f32 %v1891, %v1585
          %v1898 = vrot.slane %v1892, 3
          %v1899 = vrot.slane %v1893, 3
          %v1900 = vsel %vm680, %v1898, %v1899
          %v1901 = vrot.slane %v1894, 3
          %v1902 = vsel %vm680, %v1899, %v1901
          %1903 = vrot.lane.b32.xlu0 %v1900, 126
          %v1904 = vpop.permute.xlu0 %1903
          %1905 = vrot.lane.b32.xlu0 %v1902, 126
          %v1906 = vpop.permute.xlu0 %1905
          %v1909 = vadd.f32 %v1888, %v1904
          %v1910 = vadd.f32 %v1889, %v1906
          %s1911 = sld [smem:[#allocation10 + $0x4f]]
          %v1912 = vstv %s1911
          %v1913 = vmul.f32 %v1912, %v1583
          %v1914 = vmul.f32 %v1912, %v1584
          %v1915 = vmul.f32 %v1912, %v1585
          %v1919 = vrot.slane %v1913, 4
          %v1920 = vrot.slane %v1914, 4
          %v1921 = vsel %vm205, %v1919, %v1920
          %v1922 = vrot.slane %v1915, 4
          %v1923 = vsel %vm205, %v1920, %v1922
          %1924 = vrot.lane.b32.xlu0 %v1921, 126
          %v1925 = vpop.permute.xlu0 %1924
          %1926 = vrot.lane.b32.xlu0 %v1923, 126
          %v1927 = vpop.permute.xlu0 %1926
          %v1930 = vadd.f32 %v1909, %v1925
          %v1931 = vadd.f32 %v1910, %v1927
          %s1932 = sld [smem:[#allocation10 + $0x56]]
          %v1933 = vstv %s1932
          %v1934 = vmul.f32 %v1933, %v1583
          %v1935 = vmul.f32 %v1933, %v1584
          %v1936 = vmul.f32 %v1933, %v1585
          %v1940 = vrot.slane %v1934, 5
          %v1941 = vrot.slane %v1935, 5
          %v1942 = vsel %vm715, %v1940, %v1941
          %v1943 = vrot.slane %v1936, 5
          %v1944 = vsel %vm715, %v1941, %v1943
          %1945 = vrot.lane.b32.xlu0 %v1942, 126
          %v1946 = vpop.permute.xlu0 %1945
          %1947 = vrot.lane.b32.xlu0 %v1944, 126
          %v1948 = vpop.permute.xlu0 %1947
          %v1951 = vadd.f32 %v1930, %v1946
          %v1952 = vadd.f32 %v1931, %v1948
          %s1953 = sld [smem:[#allocation10 + $0x5d]]
          %v1954 = vstv %s1953
          %v1955 = vmul.f32 %v1954, %v1583
          %v1956 = vmul.f32 %v1954, %v1584
          %v1957 = vmul.f32 %v1954, %v1585
          %v1961 = vrot.slane %v1955, 6
          %v1962 = vrot.slane %v1956, 6
          %v1963 = vsel %vm733, %v1961, %v1962
          %v1964 = vrot.slane %v1957, 6
          %v1965 = vsel %vm733, %v1962, %v1964
          %1966 = vrot.lane.b32.xlu0 %v1963, 126
          %v1967 = vpop.permute.xlu0 %1966
          %1968 = vrot.lane.b32.xlu0 %v1965, 126
          %v1969 = vpop.permute.xlu0 %1968
          %v1972 = vadd.f32 %v1951, %v1967
          %v1973 = vadd.f32 %v1952, %v1969
          %s1974 = sld [smem:[#allocation10 + $0x34]]
          %v1975 = vstv %s1974
          %v1976 = vmul.f32 %v1975, %v1583
          %v1977 = vmul.f32 %v1975, %v1584
          %1980 = vrot.lane.b32.xlu0 %v1976, 125
          %v1981 = vpop.permute.xlu0 %1980
          %1982 = vrot.lane.b32.xlu0 %v1977, 125
          %v1983 = vpop.permute.xlu0 %1982
          %v1986 = vadd.f32 %v1972, %v1981
          %v1987 = vadd.f32 %v1973, %v1983
          %s1988 = sld [smem:[#allocation10 + $0x3b]]
          %v1989 = vstv %s1988
          %v1990 = vmul.f32 %v1989, %v1583
          %v1991 = vmul.f32 %v1989, %v1584
          %v1992 = vmul.f32 %v1989, %v1585
          %v1996 = vrot.slane %v1990, 1
          %v1997 = vrot.slane %v1991, 1
          %v1998 = vsel %vm644, %v1996, %v1997
          %v1999 = vrot.slane %v1992, 1
          %v2000 = vsel %vm644, %v1997, %v1999
          %2001 = vrot.lane.b32.xlu0 %v1998, 125
          %v2002 = vpop.permute.xlu0 %2001
          %2003 = vrot.lane.b32.xlu0 %v2000, 125
          %v2004 = vpop.permute.xlu0 %2003
          %v2007 = vadd.f32 %v1986, %v2002
          %v2008 = vadd.f32 %v1987, %v2004
          %s2009 = sld [smem:[#allocation10 + $0x42]]
          %v2010 = vstv %s2009
          %v2011 = vmul.f32 %v2010, %v1583
          %v2012 = vmul.f32 %v2010, %v1584
          %v2013 = vmul.f32 %v2010, %v1585
          %v2017 = vrot.slane %v2011, 2
          %v2018 = vrot.slane %v2012, 2
          %v2019 = vsel %vm662, %v2017, %v2018
          %v2020 = vrot.slane %v2013, 2
          %v2021 = vsel %vm662, %v2018, %v2020
          %2022 = vrot.lane.b32.xlu0 %v2019, 125
          %v2023 = vpop.permute.xlu0 %2022
          %2024 = vrot.lane.b32.xlu0 %v2021, 125
          %v2025 = vpop.permute.xlu0 %2024
          %v2028 = vadd.f32 %v2007, %v2023
          %v2029 = vadd.f32 %v2008, %v2025
          %s2030 = sld [smem:[#allocation10 + $0x49]]
          %v2031 = vstv %s2030
          %v2032 = vmul.f32 %v2031, %v1583
          %v2033 = vmul.f32 %v2031, %v1584
          %v2034 = vmul.f32 %v2031, %v1585
          %v2038 = vrot.slane %v2032, 3
          %v2039 = vrot.slane %v2033, 3
          %v2040 = vsel %vm680, %v2038, %v2039
          %v2041 = vrot.slane %v2034, 3
          %v2042 = vsel %vm680, %v2039, %v2041
          %2043 = vrot.lane.b32.xlu0 %v2040, 125
          %v2044 = vpop.permute.xlu0 %2043
          %2045 = vrot.lane.b32.xlu0 %v2042, 125
          %v2046 = vpop.permute.xlu0 %2045
          %v2049 = vadd.f32 %v2028, %v2044
          %v2050 = vadd.f32 %v2029, %v2046
          %s2051 = sld [smem:[#allocation10 + $0x50]]
          %v2052 = vstv %s2051
          %v2053 = vmul.f32 %v2052, %v1583
          %v2054 = vmul.f32 %v2052, %v1584
          %v2055 = vmul.f32 %v2052, %v1585
          %v2059 = vrot.slane %v2053, 4
          %v2060 = vrot.slane %v2054, 4
          %v2061 = vsel %vm205, %v2059, %v2060
          %v2062 = vrot.slane %v2055, 4
          %v2063 = vsel %vm205, %v2060, %v2062
          %2064 = vrot.lane.b32.xlu0 %v2061, 125
          %v2065 = vpop.permute.xlu0 %2064
          %2066 = vrot.lane.b32.xlu0 %v2063, 125
          %v2067 = vpop.permute.xlu0 %2066
          %v2070 = vadd.f32 %v2049, %v2065
          %v2071 = vadd.f32 %v2050, %v2067
          %s2072 = sld [smem:[#allocation10 + $0x57]]
          %v2073 = vstv %s2072
          %v2074 = vmul.f32 %v2073, %v1583
          %v2075 = vmul.f32 %v2073, %v1584
          %v2076 = vmul.f32 %v2073, %v1585
          %v2080 = vrot.slane %v2074, 5
          %v2081 = vrot.slane %v2075, 5
          %v2082 = vsel %vm715, %v2080, %v2081
          %v2083 = vrot.slane %v2076, 5
          %v2084 = vsel %vm715, %v2081, %v2083
          %2085 = vrot.lane.b32.xlu0 %v2082, 125
          %v2086 = vpop.permute.xlu0 %2085
          %2087 = vrot.lane.b32.xlu0 %v2084, 125
          %v2088 = vpop.permute.xlu0 %2087
          %v2091 = vadd.f32 %v2070, %v2086
          %v2092 = vadd.f32 %v2071, %v2088
          %s2093 = sld [smem:[#allocation10 + $0x5e]]
          %v2094 = vstv %s2093
          %v2095 = vmul.f32 %v2094, %v1583
          %v2096 = vmul.f32 %v2094, %v1584
          %v2097 = vmul.f32 %v2094, %v1585
          %v2101 = vrot.slane %v2095, 6
          %v2102 = vrot.slane %v2096, 6
          %v2103 = vsel %vm733, %v2101, %v2102
          %v2104 = vrot.slane %v2097, 6
          %v2105 = vsel %vm733, %v2102, %v2104
          %2106 = vrot.lane.b32.xlu0 %v2103, 125
          %v2107 = vpop.permute.xlu0 %2106
          %2108 = vrot.lane.b32.xlu0 %v2105, 125
          %v2109 = vpop.permute.xlu0 %2108
          %v2112 = vadd.f32 %v2091, %v2107
          %v2113 = vadd.f32 %v2092, %v2109
          %s2114 = sld [smem:[#allocation10 + $0x35]]
          %v2115 = vstv %s2114
          %v2116 = vmul.f32 %v2115, %v1583
          %v2117 = vmul.f32 %v2115, %v1584
          %2120 = vrot.lane.b32.xlu0 %v2116, 124
          %v2121 = vpop.permute.xlu0 %2120
          %2122 = vrot.lane.b32.xlu0 %v2117, 124
          %v2123 = vpop.permute.xlu0 %2122
          %v2126 = vadd.f32 %v2112, %v2121
          %v2127 = vadd.f32 %v2113, %v2123
          %s2128 = sld [smem:[#allocation10 + $0x3c]]
          %v2129 = vstv %s2128
          %v2130 = vmul.f32 %v2129, %v1583
          %v2131 = vmul.f32 %v2129, %v1584
          %v2132 = vmul.f32 %v2129, %v1585
          %v2136 = vrot.slane %v2130, 1
          %v2137 = vrot.slane %v2131, 1
          %v2138 = vsel %vm644, %v2136, %v2137
          %v2139 = vrot.slane %v2132, 1
          %v2140 = vsel %vm644, %v2137, %v2139
          %2141 = vrot.lane.b32.xlu0 %v2138, 124
          %v2142 = vpop.permute.xlu0 %2141
          %2143 = vrot.lane.b32.xlu0 %v2140, 124
          %v2144 = vpop.permute.xlu0 %2143
          %v2147 = vadd.f32 %v2126, %v2142
          %v2148 = vadd.f32 %v2127, %v2144
          %s2149 = sld [smem:[#allocation10 + $0x43]]
          %v2150 = vstv %s2149
          %v2151 = vmul.f32 %v2150, %v1583
          %v2152 = vmul.f32 %v2150, %v1584
          %v2153 = vmul.f32 %v2150, %v1585
          %v2157 = vrot.slane %v2151, 2
          %v2158 = vrot.slane %v2152, 2
          %v2159 = vsel %vm662, %v2157, %v2158
          %v2160 = vrot.slane %v2153, 2
          %v2161 = vsel %vm662, %v2158, %v2160
          %2162 = vrot.lane.b32.xlu0 %v2159, 124
          %v2163 = vpop.permute.xlu0 %2162
          %2164 = vrot.lane.b32.xlu0 %v2161, 124
          %v2165 = vpop.permute.xlu0 %2164
          %v2168 = vadd.f32 %v2147, %v2163
          %v2169 = vadd.f32 %v2148, %v2165
          %s2170 = sld [smem:[#allocation10 + $0x4a]]
          %v2171 = vstv %s2170
          %v2172 = vmul.f32 %v2171, %v1583
          %v2173 = vmul.f32 %v2171, %v1584
          %v2174 = vmul.f32 %v2171, %v1585
          %v2178 = vrot.slane %v2172, 3
          %v2179 = vrot.slane %v2173, 3
          %v2180 = vsel %vm680, %v2178, %v2179
          %v2181 = vrot.slane %v2174, 3
          %v2182 = vsel %vm680, %v2179, %v2181
          %2183 = vrot.lane.b32.xlu0 %v2180, 124
          %v2184 = vpop.permute.xlu0 %2183
          %2185 = vrot.lane.b32.xlu0 %v2182, 124
          %v2186 = vpop.permute.xlu0 %2185
          %v2189 = vadd.f32 %v2168, %v2184
          %v2190 = vadd.f32 %v2169, %v2186
          %s2191 = sld [smem:[#allocation10 + $0x51]]
          %v2192 = vstv %s2191
          %v2193 = vmul.f32 %v2192, %v1583
          %v2194 = vmul.f32 %v2192, %v1584
          %v2195 = vmul.f32 %v2192, %v1585
          %v2199 = vrot.slane %v2193, 4
          %v2200 = vrot.slane %v2194, 4
          %v2201 = vsel %vm205, %v2199, %v2200
          %v2202 = vrot.slane %v2195, 4
          %v2203 = vsel %vm205, %v2200, %v2202
          %2204 = vrot.lane.b32.xlu0 %v2201, 124
          %v2205 = vpop.permute.xlu0 %2204
          %2206 = vrot.lane.b32.xlu0 %v2203, 124
          %v2207 = vpop.permute.xlu0 %2206
          %v2210 = vadd.f32 %v2189, %v2205
          %v2211 = vadd.f32 %v2190, %v2207
          %s2212 = sld [smem:[#allocation10 + $0x58]]
          %v2213 = vstv %s2212
          %v2214 = vmul.f32 %v2213, %v1583
          %v2215 = vmul.f32 %v2213, %v1584
          %v2216 = vmul.f32 %v2213, %v1585
          %v2220 = vrot.slane %v2214, 5
          %v2221 = vrot.slane %v2215, 5
          %v2222 = vsel %vm715, %v2220, %v2221
          %v2223 = vrot.slane %v2216, 5
          %v2224 = vsel %vm715, %v2221, %v2223
          %2225 = vrot.lane.b32.xlu0 %v2222, 124
          %v2226 = vpop.permute.xlu0 %2225
          %2227 = vrot.lane.b32.xlu0 %v2224, 124
          %v2228 = vpop.permute.xlu0 %2227
          %v2231 = vadd.f32 %v2210, %v2226
          %v2232 = vadd.f32 %v2211, %v2228
          %s2233 = sld [smem:[#allocation10 + $0x5f]]
          %v2234 = vstv %s2233
          %v2235 = vmul.f32 %v2234, %v1583
          %v2236 = vmul.f32 %v2234, %v1584
          %v2237 = vmul.f32 %v2234, %v1585
          %v2241 = vrot.slane %v2235, 6
          %v2242 = vrot.slane %v2236, 6
          %v2243 = vsel %vm733, %v2241, %v2242
          %v2244 = vrot.slane %v2237, 6
          %v2245 = vsel %vm733, %v2242, %v2244
          %2246 = vrot.lane.b32.xlu0 %v2243, 124
          %v2247 = vpop.permute.xlu0 %2246
          %2248 = vrot.lane.b32.xlu0 %v2245, 124
          %v2249 = vpop.permute.xlu0 %2248
          %v2252 = vadd.f32 %v2231, %v2247
          %v2253 = vadd.f32 %v2232, %v2249
          %s2254 = sld [smem:[#allocation10 + $0x36]]
          %v2255 = vstv %s2254
          %v2256 = vmul.f32 %v2255, %v1583
          %v2257 = vmul.f32 %v2255, %v1584
          %2260 = vrot.lane.b32.xlu0 %v2256, 123
          %v2261 = vpop.permute.xlu0 %2260
          %2262 = vrot.lane.b32.xlu0 %v2257, 123
          %v2263 = vpop.permute.xlu0 %2262
          %v2266 = vadd.f32 %v2252, %v2261
          %v2267 = vadd.f32 %v2253, %v2263
          %s2268 = sld [smem:[#allocation10 + $0x3d]]
          %v2269 = vstv %s2268
          %v2270 = vmul.f32 %v2269, %v1583
          %v2271 = vmul.f32 %v2269, %v1584
          %v2272 = vmul.f32 %v2269, %v1585
          %v2276 = vrot.slane %v2270, 1
          %v2277 = vrot.slane %v2271, 1
          %v2278 = vsel %vm644, %v2276, %v2277
          %v2279 = vrot.slane %v2272, 1
          %v2280 = vsel %vm644, %v2277, %v2279
          %2281 = vrot.lane.b32.xlu0 %v2278, 123
          %v2282 = vpop.permute.xlu0 %2281
          %2283 = vrot.lane.b32.xlu0 %v2280, 123
          %v2284 = vpop.permute.xlu0 %2283
          %v2287 = vadd.f32 %v2266, %v2282
          %v2288 = vadd.f32 %v2267, %v2284
          %s2289 = sld [smem:[#allocation10 + $0x44]]
          %v2290 = vstv %s2289
          %v2291 = vmul.f32 %v2290, %v1583
          %v2292 = vmul.f32 %v2290, %v1584
          %v2293 = vmul.f32 %v2290, %v1585
          %v2297 = vrot.slane %v2291, 2
          %v2298 = vrot.slane %v2292, 2
          %v2299 = vsel %vm662, %v2297, %v2298
          %v2300 = vrot.slane %v2293, 2
          %v2301 = vsel %vm662, %v2298, %v2300
          %2302 = vrot.lane.b32.xlu0 %v2299, 123
          %v2303 = vpop.permute.xlu0 %2302
          %2304 = vrot.lane.b32.xlu0 %v2301, 123
          %v2305 = vpop.permute.xlu0 %2304
          %v2308 = vadd.f32 %v2287, %v2303
          %v2309 = vadd.f32 %v2288, %v2305
          %s2310 = sld [smem:[#allocation10 + $0x4b]]
          %v2311 = vstv %s2310
          %v2312 = vmul.f32 %v2311, %v1583
          %v2313 = vmul.f32 %v2311, %v1584
          %v2314 = vmul.f32 %v2311, %v1585
          %v2318 = vrot.slane %v2312, 3
          %v2319 = vrot.slane %v2313, 3
          %v2320 = vsel %vm680, %v2318, %v2319
          %v2321 = vrot.slane %v2314, 3
          %v2322 = vsel %vm680, %v2319, %v2321
          %2323 = vrot.lane.b32.xlu0 %v2320, 123
          %v2324 = vpop.permute.xlu0 %2323
          %2325 = vrot.lane.b32.xlu0 %v2322, 123
          %v2326 = vpop.permute.xlu0 %2325
          %v2329 = vadd.f32 %v2308, %v2324
          %v2330 = vadd.f32 %v2309, %v2326
          %s2331 = sld [smem:[#allocation10 + $0x52]]
          %v2332 = vstv %s2331
          %v2333 = vmul.f32 %v2332, %v1583
          %v2334 = vmul.f32 %v2332, %v1584
          %v2335 = vmul.f32 %v2332, %v1585
          %v2339 = vrot.slane %v2333, 4
          %v2340 = vrot.slane %v2334, 4
          %v2341 = vsel %vm205, %v2339, %v2340
          %v2342 = vrot.slane %v2335, 4
          %v2343 = vsel %vm205, %v2340, %v2342
          %2344 = vrot.lane.b32.xlu0 %v2341, 123
          %v2345 = vpop.permute.xlu0 %2344
          %2346 = vrot.lane.b32.xlu0 %v2343, 123
          %v2347 = vpop.permute.xlu0 %2346
          %v2350 = vadd.f32 %v2329, %v2345
          %v2351 = vadd.f32 %v2330, %v2347
          %s2352 = sld [smem:[#allocation10 + $0x59]]
          %v2353 = vstv %s2352
          %v2354 = vmul.f32 %v2353, %v1583
          %v2355 = vmul.f32 %v2353, %v1584
          %v2356 = vmul.f32 %v2353, %v1585
          %v2360 = vrot.slane %v2354, 5
          %v2361 = vrot.slane %v2355, 5
          %v2362 = vsel %vm715, %v2360, %v2361
          %v2363 = vrot.slane %v2356, 5
          %v2364 = vsel %vm715, %v2361, %v2363
          %2365 = vrot.lane.b32.xlu0 %v2362, 123
          %v2366 = vpop.permute.xlu0 %2365
          %2367 = vrot.lane.b32.xlu0 %v2364, 123
          %v2368 = vpop.permute.xlu0 %2367
          %v2371 = vadd.f32 %v2350, %v2366
          %v2372 = vadd.f32 %v2351, %v2368
          %s2373 = sld [smem:[#allocation10 + $0x60]]
          %v2374 = vstv %s2373
          %v2375 = vmul.f32 %v2374, %v1583
          %v2376 = vmul.f32 %v2374, %v1584
          %v2377 = vmul.f32 %v2374, %v1585
          %v2381 = vrot.slane %v2375, 6
          %v2382 = vrot.slane %v2376, 6
          %v2383 = vsel %vm733, %v2381, %v2382
          %v2384 = vrot.slane %v2377, 6
          %v2385 = vsel %vm733, %v2382, %v2384
          %2386 = vrot.lane.b32.xlu0 %v2383, 123
          %v2387 = vpop.permute.xlu0 %2386
          %2388 = vrot.lane.b32.xlu0 %v2385, 123
          %v2389 = vpop.permute.xlu0 %2388
          %v2392 = vadd.f32 %v2371, %v2387
          %v2393 = vadd.f32 %v2372, %v2389
          %s2394 = sld [smem:[#allocation10 + $0x37]]
          %v2395 = vstv %s2394
          %v2396 = vmul.f32 %v2395, %v1583
          %v2397 = vmul.f32 %v2395, %v1584
          %2400 = vrot.lane.b32.xlu0 %v2396, 122
          %v2401 = vpop.permute.xlu0 %2400
          %2402 = vrot.lane.b32.xlu0 %v2397, 122
          %v2403 = vpop.permute.xlu0 %2402
          %v2406 = vadd.f32 %v2392, %v2401
          %v2407 = vadd.f32 %v2393, %v2403
          %s2408 = sld [smem:[#allocation10 + $0x3e]]
          %v2409 = vstv %s2408
          %v2410 = vmul.f32 %v2409, %v1583
          %v2411 = vmul.f32 %v2409, %v1584
          %v2412 = vmul.f32 %v2409, %v1585
          %v2416 = vrot.slane %v2410, 1
          %v2417 = vrot.slane %v2411, 1
          %v2418 = vsel %vm644, %v2416, %v2417
          %v2419 = vrot.slane %v2412, 1
          %v2420 = vsel %vm644, %v2417, %v2419
          %2421 = vrot.lane.b32.xlu0 %v2418, 122
          %v2422 = vpop.permute.xlu0 %2421
          %2423 = vrot.lane.b32.xlu0 %v2420, 122
          %v2424 = vpop.permute.xlu0 %2423
          %v2427 = vadd.f32 %v2406, %v2422
          %v2428 = vadd.f32 %v2407, %v2424
          %s2429 = sld [smem:[#allocation10 + $0x45]]
          %v2430 = vstv %s2429
          %v2431 = vmul.f32 %v2430, %v1583
          %v2432 = vmul.f32 %v2430, %v1584
          %v2433 = vmul.f32 %v2430, %v1585
          %v2437 = vrot.slane %v2431, 2
          %v2438 = vrot.slane %v2432, 2
          %v2439 = vsel %vm662, %v2437, %v2438
          %v2440 = vrot.slane %v2433, 2
          %v2441 = vsel %vm662, %v2438, %v2440
          %2442 = vrot.lane.b32.xlu0 %v2439, 122
          %v2443 = vpop.permute.xlu0 %2442
          %2444 = vrot.lane.b32.xlu0 %v2441, 122
          %v2445 = vpop.permute.xlu0 %2444
          %v2448 = vadd.f32 %v2427, %v2443
          %v2449 = vadd.f32 %v2428, %v2445
          %s2450 = sld [smem:[#allocation10 + $0x4c]]
          %v2451 = vstv %s2450
          %v2452 = vmul.f32 %v2451, %v1583
          %v2453 = vmul.f32 %v2451, %v1584
          %v2454 = vmul.f32 %v2451, %v1585
          %v2458 = vrot.slane %v2452, 3
          %v2459 = vrot.slane %v2453, 3
          %v2460 = vsel %vm680, %v2458, %v2459
          %v2461 = vrot.slane %v2454, 3
          %v2462 = vsel %vm680, %v2459, %v2461
          %2463 = vrot.lane.b32.xlu0 %v2460, 122
          %v2464 = vpop.permute.xlu0 %2463
          %2465 = vrot.lane.b32.xlu0 %v2462, 122
          %v2466 = vpop.permute.xlu0 %2465
          %v2469 = vadd.f32 %v2448, %v2464
          %v2470 = vadd.f32 %v2449, %v2466
          %s2471 = sld [smem:[#allocation10 + $0x53]]
          %v2472 = vstv %s2471
          %v2473 = vmul.f32 %v2472, %v1583
          %v2474 = vmul.f32 %v2472, %v1584
          %v2475 = vmul.f32 %v2472, %v1585
          %v2479 = vrot.slane %v2473, 4
          %v2480 = vrot.slane %v2474, 4
          %v2481 = vsel %vm205, %v2479, %v2480
          %v2482 = vrot.slane %v2475, 4
          %v2483 = vsel %vm205, %v2480, %v2482
          %2484 = vrot.lane.b32.xlu0 %v2481, 122
          %v2485 = vpop.permute.xlu0 %2484
          %2486 = vrot.lane.b32.xlu0 %v2483, 122
          %v2487 = vpop.permute.xlu0 %2486
          %v2490 = vadd.f32 %v2469, %v2485
          %v2491 = vadd.f32 %v2470, %v2487
          %s2492 = sld [smem:[#allocation10 + $0x5a]]
          %v2493 = vstv %s2492
          %v2494 = vmul.f32 %v2493, %v1583
          %v2495 = vmul.f32 %v2493, %v1584
          %v2496 = vmul.f32 %v2493, %v1585
          %v2500 = vrot.slane %v2494, 5
          %v2501 = vrot.slane %v2495, 5
          %v2502 = vsel %vm715, %v2500, %v2501
          %v2503 = vrot.slane %v2496, 5
          %v2504 = vsel %vm715, %v2501, %v2503
          %2505 = vrot.lane.b32.xlu0 %v2502, 122
          %v2506 = vpop.permute.xlu0 %2505
          %2507 = vrot.lane.b32.xlu0 %v2504, 122
          %v2508 = vpop.permute.xlu0 %2507
          %v2511 = vadd.f32 %v2490, %v2506
          %v2512 = vadd.f32 %v2491, %v2508
          %s2513 = sld [smem:[#allocation10 + $0x61]]
          %v2514 = vstv %s2513
          %v2515 = vmul.f32 %v2514, %v1583
          %v2516 = vmul.f32 %v2514, %v1584
          %v2517 = vmul.f32 %v2514, %v1585
          %v2521 = vrot.slane %v2515, 6
          %v2522 = vrot.slane %v2516, 6
          %v2523 = vsel %vm733, %v2521, %v2522
          %v2524 = vrot.slane %v2517, 6
          %v2525 = vsel %vm733, %v2522, %v2524
          %2526 = vrot.lane.b32.xlu0 %v2523, 122
          %v2527 = vpop.permute.xlu0 %2526
          %2528 = vrot.lane.b32.xlu0 %v2525, 122
          %v2529 = vpop.permute.xlu0 %2528
          %v2532 = vadd.f32 %v2511, %v2527
          %v2533 = vadd.f32 %v2512, %v2529
          %v2534 = vxor.u32 %v2532, 2147483648
          %v2535 = vxor.u32 %v2533, 2147483648
          %v2536 = vmul.f32 %v2534, 1.442695
          %v2537 = vpow.pop %v2536
          %v2538 = vmul.f32 %v2535, 1.442695
          %v2539 = vpow.pop %v2538
          %v2540 = vadd.f32 %v2537, 1.0
          %v2541 = vadd.f32 %v2539, 1.0
          %v2542 = vrcp.pop %v2540
          %v2543 = vmul.f32 1.0, %v2542
          %v2544 = vrcp.pop %v2541
          %v2545 = vmul.f32 1.0, %v2544
          %vm2546 = vcmask 130048
          %2547 = vst.msk [vmem:[%s189] sm:$0xff] %vm2546, %v2543
          %2548 = vst.msk [vmem:[%s189 + $0x8] sm:$0xff] %vm2546, %v2545
        $region44: #{tpu_custom_call.1} parent=27 // pred_fallthru
          _
        %s2549 = sand.u32 %s89, 1
        %s2550 = scalar_lea.sflag [#allocation8], %s2549
        %s2551 = sand.u32 %s89, 1
        %s2552 = smul.addr %s2551, 16
        %s2553 = scalar_lea.vmem [#allocation11], %s2552
        // Predicated region
        $region45: #{tpu_custom_call.1} parent=27 // pred_check
          %p2554 = pneg %p99
        $region46: #{tpu_custom_call.1} parent=27 // pred_check_branch
          %2556 = sbr.rel (%p2554) target = $region48
        $region47: #{tpu_custom_call.1} parent=27 // pred_region
          %s2558 = ssub.s32 256, 256
          %2559 = vsyncadd %s2550, %s2558
          %s2560 = smul.addr %s24, 2
          %s2561 = smul.addr %s2560, 128
          %s2562 = scalar_lea.hbm %s2, %s2561
          %s2563 = sshll.u32 %s2553, 4
          %s2564 = int_to_ptr.vmem [resolvable:$true] %s2563
          %2569 = dma.vmem_to_hbm [thread:$0]  %s2564, 256, %s2562, %s2550, 128, 128, 8
        $region48: #{tpu_custom_call.1} parent=27 // pred_fallthru
          _
      $region28: #{tpu_custom_call.1} parent=5 // pred_fallthru
        _
      %p2570 = scmp.le.s32.totalorder 2, %s15
      // Predicated region
      $region49: #{tpu_custom_call.1} parent=5 // pred_check
        %p2571 = pneg %p2570
      $region50: #{tpu_custom_call.1} parent=5 // pred_check_branch
        %2573 = sbr.rel (%p2571) target = $region52
      $region51: #{tpu_custom_call.1} parent=5 // pred_region
        %s2574 = ssub.s32 %s15, 2
        // Predicated region
        $region53: #{tpu_custom_call.1} parent=51 // pred_check
          %p2575 = pneg %p105
        $region54: #{tpu_custom_call.1} parent=51 // pred_check_branch
          %2577 = sbr.rel (%p2575) target = $region56
        $region55: #{tpu_custom_call.1} parent=51 // pred_region
          %s2578 = sand.u32 %s90, 1
          %s2579 = scalar_lea.sflag [#allocation8], %s2578
          %s2580 = sand.u32 %s90, 1
          %s2581 = smul.addr %s2580, 16
          %s2582 = scalar_lea.vmem [#allocation11], %s2581
          %2583 = dma.done %s2579, 256
        $region56: #{tpu_custom_call.1} parent=51 // pred_fallthru
          _
      $region52: #{tpu_custom_call.1} parent=5 // pred_fallthru
        _
    $region6: #{tpu_custom_call.1} parent=1 // loop_footer
      %s19 = sadd.s32 1, %s15
    $region7: #{tpu_custom_call.1} parent=1 // loop_footer_branch
      %14 = sbr.rel target = $region3
    $region8: #{tpu_custom_call.1} parent=1 // loop_exit
      _
    %2584 = vsyncpa [#allocation7], 1
    %s2585 = scalar_lea.sflag [#allocation7], 1
    %2586 = vsyncpa %s2585, 1
    %2587 = vsyncpa [#allocation8], 1
    %s2588 = scalar_lea.sflag [#allocation8], 1
    %2589 = vsyncpa %s2588, 1
    %2590 = vsyncpa [#allocation9], 1
    %s2591 = scalar_lea.sflag [#allocation9], 1
    %2592 = vsyncpa %s2591, 1

</llo_original>
